<compile_context>
chip_gen: v7x
topology: tpu7x:2x2x1
jax: 0.10.0
libtpu: 0.0.40
codegen_flags: <defaults>
</compile_context>

<pallas_src>
import functools

import jax
import jax.numpy as jnp
from jax import lax
from jax.experimental import pallas as pl
from jax.experimental.pallas import tpu as pltpu

LANE = 128       # lane width: channel dims are padded to multiples of this
SUBLANE = 8      # f32 sublane: matmul row counts are padded to multiples of this
CI_TILE = 128    # input-channel (reduction) tile
CO_TILE = 128    # output-channel tile


def _round_up(x, m):
    return (x + m - 1) // m * m


# ----------------------------- Pallas kernels ------------------------------ #
#
#   x_ref   : (1, PHASES, P_pad, CI_TILE)  flattened padded activation rows
#   w_ref   : (TAPS, CI_TILE, CO_TILE)     BN-scale-folded weights per tap
#   b_ref   : (1, CO_TILE)                 folded BN bias
#   s_ref   : (1, M_OUT, CO_TILE)          shortcut rows (residual kernel only)
#   o_ref   : (1, M_OUT, CO_TILE)
#   acc_ref : (M_OUT, CO_TILE) f32 VMEM scratch, accumulated over Cin tiles.

def _accumulate_taps(x_ref, w_ref, acc_ref, taps, m_out):
    ci = pl.program_id(2)

    @pl.when(ci == 0)
    def _init():
        acc_ref[...] = jnp.zeros_like(acc_ref)

    part = None
    for t, (phase, off) in enumerate(taps):            # static tap loop
        lhs = x_ref[0, phase, pl.ds(off, m_out), :]    # (M_OUT, CI_TILE), static offsets
        d = jnp.dot(lhs, w_ref[t], preferred_element_type=jnp.float32)
        part = d if part is None else part + d
    acc_ref[...] += part


def _conv_bn_kernel(x_ref, w_ref, b_ref, o_ref, acc_ref, *, taps, m_out, relu):
    _accumulate_taps(x_ref, w_ref, acc_ref, taps, m_out)

    @pl.when(pl.program_id(2) == pl.num_programs(2) - 1)
    def _finalize():
        y = acc_ref[...] + b_ref[...]
        if relu:
            y = jnp.maximum(y, 0.0)
        o_ref[0] = y.astype(o_ref.dtype)


def _conv_bn_relu_add_relu_kernel(x_ref, w_ref, b_ref, s_ref, o_ref, acc_ref, *,
                                  taps, m_out):
    # conv2 + BN2 + ReLU, then + shortcut, then final ReLU
    # (matches the spec: ReLU(conv2_seq(.) + shortcut), conv2_seq ends in ReLU).
    _accumulate_taps(x_ref, w_ref, acc_ref, taps, m_out)

    @pl.when(pl.program_id(2) == pl.num_programs(2) - 1)
    def _finalize():
        y = jnp.maximum(acc_ref[...] + b_ref[...], 0.0)
        y = jnp.maximum(y + s_ref[0], 0.0)
        o_ref[0] = y.astype(o_ref.dtype)


def _fused_conv(x_flat, w_taps, bias, taps, m_out, *, relu, shortcut=None):
    """Tiled fused conv + folded-BN (+ReLU) (+residual add + ReLU)."""
    n, n_phases, p_pad, ci_pad = x_flat.shape
    n_taps, _, co_pad = w_taps.shape
    grid = (n, co_pad // CO_TILE, ci_pad // CI_TILE)

    in_specs = [
        pl.BlockSpec((1, n_phases, p_pad, CI_TILE),
                     lambda b, co, ci: (b, 0, 0, ci)),
        pl.BlockSpec((n_taps, CI_TILE, CO_TILE),
                     lambda b, co, ci: (0, ci, co)),        # resident across batch
        pl.BlockSpec((1, CO_TILE), lambda b, co, ci: (0, co)),
    ]
    args = [x_flat, w_taps, bias]
    if shortcut is None:
        kernel = functools.partial(_conv_bn_kernel, taps=taps, m_out=m_out,
                                   relu=relu)
    else:
        in_specs.append(pl.BlockSpec((1, m_out, CO_TILE),
                                     lambda b, co, ci: (b, 0, co)))
        args.append(shortcut)
        kernel = functools.partial(_conv_bn_relu_add_relu_kernel, taps=taps,
                                   m_out=m_out)

    return pl.pallas_call(
        kernel,
        out_shape=jax.ShapeDtypeStruct((n, m_out, co_pad), jnp.float32),
        grid=grid,
        in_specs=in_specs,
        out_specs=pl.BlockSpec((1, m_out, CO_TILE),
                               lambda b, co, ci: (b, 0, co)),
        scratch_shapes=[pltpu.VMEM((m_out, CO_TILE), jnp.float32)],
        compiler_params=pltpu.CompilerParams(
            dimension_semantics=("parallel", "parallel", "arbitrary")),
    )(*args)


# --------------------------- host-side layout glue -------------------------- #

def _pad_channels(x, c_pad):
    return jnp.pad(x, ((0, 0), (0, 0), (0, 0), (0, c_pad - x.shape[-1])))


def _prep_conv3x3(x_img, stride):
    """Lay out an NHWC image for the tap-matmul 3x3 conv (pad=1) kernel.

    Returns (x_flat, taps, m_out, w_row, Ho, Wo); x_flat is (N, phases, P_pad, C)
    and each tap is a (phase, flat-row-offset) pair such that output pixel (h, w)
    lives at flat row h * w_row + w of the kernel output.
    """
    n, h, w, c = x_img.shape
    xp = jnp.pad(x_img, ((0, 0), (1, 1), (1, 1), (0, 0)))
    hp, wp = h + 2, w + 2
    ho = (h + 2 - 3) // stride + 1
    wo = (w + 2 - 3) // stride + 1
    if stride == 1:
        phases = xp[:, None]                                 # (N, 1, Hp, Wp, C)
        w_row = wp
        taps = [(0, ki * wp + kj) for ki in range(3) for kj in range(3)]
    else:                                                    # stride 2
        assert hp % 2 == 0 and wp % 2 == 0
        phases = jnp.stack(
            [xp[:, p::2, q::2, :] for p in (0, 1) for q in (0, 1)], axis=1)
        w_row = wp // 2
        taps = [((ki % 2) * 2 + (kj % 2), (ki // 2) * w_row + (kj // 2))
                for ki in range(3) for kj in range(3)]
    n_ph, hph, wph = phases.shape[1], phases.shape[2], phases.shape[3]
    p_rows = hph * wph
    m_out = _round_up(ho * w_row, SUBLANE)
    max_off = max(off for _, off in taps)
    p_pad = _round_up(max(p_rows, max_off + m_out), SUBLANE)
    x_flat = phases.reshape(n, n_ph, p_rows, c)
    x_flat = jnp.pad(x_flat, ((0, 0), (0, 0), (0, p_pad - p_rows), (0, 0)))
    return x_flat, taps, m_out, w_row, ho, wo


def _unflatten(y_flat, ho, wo, w_row):
    n, _, c = y_flat.shape
    return y_flat[:, :ho * w_row, :].reshape(n, ho, w_row, c)[:, :, :wo, :]


def _to_flat_rows(img, w_row, m_out):
    """(N, Ho, Wo, C) image -> (N, m_out, C) rows in the 'h*w_row + w' layout."""
    n, ho, wo, c = img.shape
    flat = jnp.pad(img, ((0, 0), (0, 0), (0, w_row - wo), (0, 0)))
    flat = flat.reshape(n, ho * w_row, c)
    return jnp.pad(flat, ((0, 0), (0, m_out - ho * w_row), (0, 0)))


# ------------------------------ parameters ---------------------------------- #

def _init_conv(key, kh, kw, cin, cout):
    k1, k2 = jax.random.split(key)
    w = 0.1 * jax.random.normal(k1, (kh, kw, cin, cout), jnp.float32)   # HWIO
    b = 0.05 * jax.random.normal(k2, (cout,), jnp.float32)
    return w, b


def _init_bn(key, c):
    k1, k2, k3, k4 = jax.random.split(key, 4)
    gamma = 1.0 + 0.1 * jax.random.normal(k1, (c,), jnp.float32)
    beta = 0.1 * jax.random.normal(k2, (c,), jnp.float32)
    mean = 0.1 * jax.random.normal(k3, (c,), jnp.float32)
    var = 1.0 + 0.1 * jax.random.uniform(k4, (c,), jnp.float32)
    return gamma, beta, mean, var


def _fold_and_pad(w_hwio, conv_bias, bn, ci_pad, co_pad, eps=1e-5):
    """Fold BN (running stats) into conv weights/bias, zero-pad to lane tiles."""
    gamma, beta, mean, var = bn
    scale = gamma / jnp.sqrt(var + eps)                      # (cout,)
    kh, kw, ci, co = w_hwio.shape
    w_scaled = (w_hwio * scale).reshape(kh * kw, ci, co)
    w_padded = jnp.zeros((kh * kw, ci_pad, co_pad), jnp.float32)
    w_padded = w_padded.at[:, :ci, :co].set(w_scaled)
    bias = beta + (conv_bias - mean) * scale
    bias_padded = jnp.zeros((1, co_pad), jnp.float32).at[0, :co].set(bias)
    return w_padded, bias_padded


# -------------------------------- the block --------------------------------- #

class ResBlocksPallas:
    """Mirrors ResBlocks(in_channels, out_channels, downsample).forward()."""

    def __init__(self, in_channels, out_channels, downsample, key):
        if not downsample and in_channels != out_channels:
            raise ValueError("identity shortcut requires in_channels == out_channels")
        self.cin, self.cout, self.downsample = in_channels, out_channels, downsample
        keys = jax.random.split(key, 6)

        self.w1, self.b1 = _init_conv(keys[0], 3, 3, in_channels, out_channels)
        self.bn1 = _init_bn(keys[1], out_channels)
        self.w2, self.b2 = _init_conv(keys[2], 3, 3, out_channels, out_channels)
        self.bn2 = _init_bn(keys[3], out_channels)
        if downsample:
            self.wsc, self.bsc = _init_conv(keys[4], 1, 1, in_channels, out_channels)
            self.bnsc = _init_bn(keys[5], out_channels)

        self.ci_pad = _round_up(in_channels, LANE)
        self.co_pad = _round_up(out_channels, LANE)
        self.w1_taps, self.bias1 = _fold_and_pad(self.w1, self.b1, self.bn1,
                                                 self.ci_pad, self.co_pad)
        self.w2_taps, self.bias2 = _fold_and_pad(self.w2, self.b2, self.bn2,
                                                 self.co_pad, self.co_pad)
        if downsample:
            self.wsc_taps, self.biassc = _fold_and_pad(self.wsc, self.bsc, self.bnsc,
                                                       self.ci_pad, self.co_pad)

    # ---- Pallas forward (NCHW in, NCHW out, like the PyTorch module) ----
    def __call__(self, x_nchw):
        x = jnp.transpose(x_nchw, (0, 2, 3, 1)).astype(jnp.float32)     # NHWC
        xc = _pad_channels(x, self.ci_pad)
        stride1 = 2 if self.downsample else 1

        # conv1 + BN1 + ReLU (fused)
        x1_flat, taps1, m1, w_row1, ho, wo = _prep_conv3x3(xc, stride1)
        y1_flat = _fused_conv(x1_flat, self.w1_taps, self.bias1, taps1, m1,
                              relu=True)
        y1 = _unflatten(y1_flat, ho, wo, w_row1)             # (N, Ho, Wo, co_pad)

        # shortcut branch
        if self.downsample:
            xs = xc[:, ::2, ::2, :]                          # 1x1 conv, stride 2
            n, hs, ws, _ = xs.shape
            msc = _round_up(hs * ws, SUBLANE)
            xs_flat = jnp.pad(xs.reshape(n, 1, hs * ws, self.ci_pad),
                              ((0, 0), (0, 0), (0, msc - hs * ws), (0, 0)))
            sc_flat = _fused_conv(xs_flat, self.wsc_taps, self.biassc,
                                  [(0, 0)], msc, relu=False)
            sc = _unflatten(sc_flat, hs, ws, ws)
        else:
            sc = xc                                          # identity (cin == cout)

        # conv2 + BN2 + ReLU + residual add + final ReLU (single fused kernel)
        x2_flat, taps2, m2, w_row2, ho2, wo2 = _prep_conv3x3(y1, 1)
        sc_rows = _to_flat_rows(sc, w_row2, m2)
        out_flat = _fused_conv(x2_flat, self.w2_taps, self.bias2, taps2, m2,
                               relu=True, shortcut=sc_rows)
        out = _unflatten(out_flat, ho2, wo2, w_row2)[..., :self.cout]
        return jnp.transpose(out, (0, 3, 1, 2))              # back to NCHW

    # ---- pure-JAX reference (lax.conv) for validation ----
    def reference(self, x_nchw):
        def conv(x, w, b, stride, pad):
            y = lax.conv_general_dilated(
                x, w, (stride, stride), [(pad, pad), (pad, pad)],
                dimension_numbers=("NHWC", "HWIO", "NHWC"))
            return y + b.reshape(1, 1, 1, -1)

        def bn(x, params, eps=1e-5):
            gamma, beta, mean, var = params
            return (x - mean) / jnp.sqrt(var + eps) * gamma + beta

        x = jnp.transpose(x_nchw, (0, 2, 3, 1)).astype(jnp.float32)
        sc = bn(conv(x, self.wsc, self.bsc, 2, 0), self.bnsc) if self.downsample else x
        stride1 = 2 if self.downsample else 1
        h = jax.nn.relu(bn(conv(x, self.w1, self.b1, stride1, 1), self.bn1))
        h = jax.nn.relu(bn(conv(h, self.w2, self.b2, 1, 1), self.bn2))
        return jnp.transpose(jax.nn.relu(h + sc), (0, 3, 1, 2))


# --------------------------------- main ------------------------------------- #

if __name__ == "__main__":
    key = jax.random.PRNGKey(0)
    kx, kp1, kp2 = jax.random.split(key, 3)

    # Small deterministic input, NCHW like PyTorch: (batch=2, C=4, 16, 16)
    x = jax.random.normal(kx, (2, 4, 16, 16), jnp.float32)

    # Case 1: no downsample (identity shortcut), in == out channels
    block_a = ResBlocksPallas(in_channels=4, out_channels=4, downsample=False, key=kp1)
    out_a = jax.block_until_ready(block_a(x))
    ref_a = block_a.reference(x)
    assert out_a.shape == (2, 4, 16, 16)
    assert jnp.allclose(out_a, ref_a, rtol=1e-4, atol=1e-4), \
        float(jnp.max(jnp.abs(out_a - ref_a)))

    # Case 2: downsample (1x1 stride-2 conv + BN shortcut), 4 -> 8 channels
    block_b = ResBlocksPallas(in_channels=4, out_channels=8, downsample=True, key=kp2)
    out_b = jax.block_until_ready(block_b(x))
    ref_b = block_b.reference(x)
    assert out_b.shape == (2, 8, 8, 8)
    assert jnp.allclose(out_b, ref_b, rtol=1e-4, atol=1e-4), \
        float(jnp.max(jnp.abs(out_b - ref_b)))

    print("KERNEL_OK")
</pallas_src>

<mosaic_0001>
module attributes {stable_mosaic.version = 11 : i64} {
  func.func @_conv_bn_kernel(%arg0: i32, %arg1: i32, %arg2: i32, %arg3: memref<1x1x328x128xf32, #tpu.memory_space<vmem>>, %arg4: memref<9x128x128xf32, #tpu.memory_space<vmem>>, %arg5: memref<1x128xf32, #tpu.memory_space<vmem>>, %arg6: memref<1x288x128xf32, #tpu.memory_space<vmem>>, %arg7: memref<288x128xf32, #tpu.memory_space<vmem>>) attributes {dimension_semantics = [#tpu.dimension_semantics<parallel>, #tpu.dimension_semantics<parallel>, #tpu.dimension_semantics<arbitrary>], iteration_bounds = array<i64: 2, 1, 1>, scalar_prefetch = 0 : i64, scratch_operands = 1 : i64, tpu.core_type = #tpu.core_type<tc>, window_params = [{transform_indices = @transform_0, window_bounds = array<i64: 1, 1, 328, 128>}, {transform_indices = @transform_1, window_bounds = array<i64: 9, 128, 128>}, {transform_indices = @transform_2, window_bounds = array<i64: 1, 128>}, {transform_indices = @transform_3, window_bounds = array<i64: 1, 288, 128>}]} {
    %c0_i32 = arith.constant 0 : i32
    %0 = arith.cmpi eq, %arg2, %c0_i32 : i32
    %1 = arith.extui %0 : i1 to i32
    %c0_i32_0 = arith.constant 0 : i32
    %2 = arith.cmpi ne, %1, %c0_i32_0 : i32
    scf.if %2 {
      %cst_63 = arith.constant 0.000000e+00 : f32
      %62 = vector.broadcast %cst_63 : f32 to vector<288x128xf32>
      %c0_64 = arith.constant 0 : index
      %c0_65 = arith.constant 0 : index
      %63 = vector.load %arg7[%c0_64, %c0_65] : memref<288x128xf32, #tpu.memory_space<vmem>>, vector<288x128xf32>
      tpu.vector_store %arg7[%c0_64, %c0_65], %62 {strides = array<i32>} : memref<288x128xf32, #tpu.memory_space<vmem>>, vector<288x128xf32>,
    } else {
    }
    %c0 = arith.constant 0 : index
    %c0_1 = arith.constant 0 : index
    %c0_2 = arith.constant 0 : index
    %c0_3 = arith.constant 0 : index
    %3 = vector.load %arg3[%c0, %c0_1, %c0_2, %c0_3] : memref<1x1x328x128xf32, #tpu.memory_space<vmem>>, vector<1x1x288x128xf32>
    %4 = vector.shape_cast %3 : vector<1x1x288x128xf32> to vector<288x128xf32>
    %c0_4 = arith.constant 0 : index
    %c0_5 = arith.constant 0 : index
    %c0_6 = arith.constant 0 : index
    %5 = vector.load %arg4[%c0_4, %c0_5, %c0_6] : memref<9x128x128xf32, #tpu.memory_space<vmem>>, vector<1x128x128xf32>
    %6 = vector.shape_cast %5 : vector<1x128x128xf32> to vector<128x128xf32>
    %cst = arith.constant dense<0.000000e+00> : vector<288x128xf32>
    %7 = tpu.matmul %4, %6, %cst {dimension_numbers = #tpu.dot_dimension_numbers<[1], [0], [0], [1], [0, 0, 1, 1], [], []>} : vector<288x128xf32>, vector<128x128xf32>, vector<288x128xf32> -> vector<288x128xf32>
    %c0_7 = arith.constant 0 : index
    %c0_8 = arith.constant 0 : index
    %c1 = arith.constant 1 : index
    %c0_9 = arith.constant 0 : index
    %8 = vector.load %arg3[%c0_7, %c0_8, %c1, %c0_9] : memref<1x1x328x128xf32, #tpu.memory_space<vmem>>, vector<1x1x288x128xf32>
    %9 = vector.shape_cast %8 : vector<1x1x288x128xf32> to vector<288x128xf32>
    %c1_10 = arith.constant 1 : index
    %c0_11 = arith.constant 0 : index
    %c0_12 = arith.constant 0 : index
    %10 = vector.load %arg4[%c1_10, %c0_11, %c0_12] : memref<9x128x128xf32, #tpu.memory_space<vmem>>, vector<1x128x128xf32>
    %11 = vector.shape_cast %10 : vector<1x128x128xf32> to vector<128x128xf32>
    %cst_13 = arith.constant dense<0.000000e+00> : vector<288x128xf32>
    %12 = tpu.matmul %9, %11, %cst_13 {dimension_numbers = #tpu.dot_dimension_numbers<[1], [0], [0], [1], [0, 0, 1, 1], [], []>} : vector<288x128xf32>, vector<128x128xf32>, vector<288x128xf32> -> vector<288x128xf32>
    %13 = arith.addf %7, %12 : vector<288x128xf32>
    %c0_14 = arith.constant 0 : index
    %c0_15 = arith.constant 0 : index
    %c2 = arith.constant 2 : index
    %c0_16 = arith.constant 0 : index
    %14 = vector.load %arg3[%c0_14, %c0_15, %c2, %c0_16] : memref<1x1x328x128xf32, #tpu.memory_space<vmem>>, vector<1x1x288x128xf32>
    %15 = vector.shape_cast %14 : vector<1x1x288x128xf32> to vector<288x128xf32>
    %c2_17 = arith.constant 2 : index
    %c0_18 = arith.constant 0 : index
    %c0_19 = arith.constant 0 : index
    %16 = vector.load %arg4[%c2_17, %c0_18, %c0_19] : memref<9x128x128xf32, #tpu.memory_space<vmem>>, vector<1x128x128xf32>
    %17 = vector.shape_cast %16 : vector<1x128x128xf32> to vector<128x128xf32>
    %cst_20 = arith.constant dense<0.000000e+00> : vector<288x128xf32>
    %18 = tpu.matmul %15, %17, %cst_20 {dimension_numbers = #tpu.dot_dimension_numbers<[1], [0], [0], [1], [0, 0, 1, 1], [], []>} : vector<288x128xf32>, vector<128x128xf32>, vector<288x128xf32> -> vector<288x128xf32>
    %19 = arith.addf %13, %18 : vector<288x128xf32>
    %c0_21 = arith.constant 0 : index
    %c0_22 = arith.constant 0 : index
    %c18 = arith.constant 18 : index
    %c0_23 = arith.constant 0 : index
    %20 = vector.load %arg3[%c0_21, %c0_22, %c18, %c0_23] : memref<1x1x328x128xf32, #tpu.memory_space<vmem>>, vector<1x1x288x128xf32>
    %21 = vector.shape_cast %20 : vector<1x1x288x128xf32> to vector<288x128xf32>
    %c3 = arith.constant 3 : index
    %c0_24 = arith.constant 0 : index
    %c0_25 = arith.constant 0 : index
    %22 = vector.load %arg4[%c3, %c0_24, %c0_25] : memref<9x128x128xf32, #tpu.memory_space<vmem>>, vector<1x128x128xf32>
    %23 = vector.shape_cast %22 : vector<1x128x128xf32> to vector<128x128xf32>
    %cst_26 = arith.constant dense<0.000000e+00> : vector<288x128xf32>
    %24 = tpu.matmul %21, %23, %cst_26 {dimension_numbers = #tpu.dot_dimension_numbers<[1], [0], [0], [1], [0, 0, 1, 1], [], []>} : vector<288x128xf32>, vector<128x128xf32>, vector<288x128xf32> -> vector<288x128xf32>
    %25 = arith.addf %19, %24 : vector<288x128xf32>
    %c0_27 = arith.constant 0 : index
    %c0_28 = arith.constant 0 : index
    %c19 = arith.constant 19 : index
    %c0_29 = arith.constant 0 : index
    %26 = vector.load %arg3[%c0_27, %c0_28, %c19, %c0_29] : memref<1x1x328x128xf32, #tpu.memory_space<vmem>>, vector<1x1x288x128xf32>
    %27 = vector.shape_cast %26 : vector<1x1x288x128xf32> to vector<288x128xf32>
    %c4 = arith.constant 4 : index
    %c0_30 = arith.constant 0 : index
    %c0_31 = arith.constant 0 : index
    %28 = vector.load %arg4[%c4, %c0_30, %c0_31] : memref<9x128x128xf32, #tpu.memory_space<vmem>>, vector<1x128x128xf32>
    %29 = vector.shape_cast %28 : vector<1x128x128xf32> to vector<128x128xf32>
    %cst_32 = arith.constant dense<0.000000e+00> : vector<288x128xf32>
    %30 = tpu.matmul %27, %29, %cst_32 {dimension_numbers = #tpu.dot_dimension_numbers<[1], [0], [0], [1], [0, 0, 1, 1], [], []>} : vector<288x128xf32>, vector<128x128xf32>, vector<288x128xf32> -> vector<288x128xf32>
    %31 = arith.addf %25, %30 : vector<288x128xf32>
    %c0_33 = arith.constant 0 : index
    %c0_34 = arith.constant 0 : index
    %c20 = arith.constant 20 : index
    %c0_35 = arith.constant 0 : index
    %32 = vector.load %arg3[%c0_33, %c0_34, %c20, %c0_35] : memref<1x1x328x128xf32, #tpu.memory_space<vmem>>, vector<1x1x288x128xf32>
    %33 = vector.shape_cast %32 : vector<1x1x288x128xf32> to vector<288x128xf32>
    %c5 = arith.constant 5 : index
    %c0_36 = arith.constant 0 : index
    %c0_37 = arith.constant 0 : index
    %34 = vector.load %arg4[%c5, %c0_36, %c0_37] : memref<9x128x128xf32, #tpu.memory_space<vmem>>, vector<1x128x128xf32>
    %35 = vector.shape_cast %34 : vector<1x128x128xf32> to vector<128x128xf32>
    %cst_38 = arith.constant dense<0.000000e+00> : vector<288x128xf32>
    %36 = tpu.matmul %33, %35, %cst_38 {dimension_numbers = #tpu.dot_dimension_numbers<[1], [0], [0], [1], [0, 0, 1, 1], [], []>} : vector<288x128xf32>, vector<128x128xf32>, vector<288x128xf32> -> vector<288x128xf32>
    %37 = arith.addf %31, %36 : vector<288x128xf32>
    %c0_39 = arith.constant 0 : index
    %c0_40 = arith.constant 0 : index
    %c36 = arith.constant 36 : index
    %c0_41 = arith.constant 0 : index
    %38 = vector.load %arg3[%c0_39, %c0_40, %c36, %c0_41] : memref<1x1x328x128xf32, #tpu.memory_space<vmem>>, vector<1x1x288x128xf32>
    %39 = vector.shape_cast %38 : vector<1x1x288x128xf32> to vector<288x128xf32>
    %c6 = arith.constant 6 : index
    %c0_42 = arith.constant 0 : index
    %c0_43 = arith.constant 0 : index
    %40 = vector.load %arg4[%c6, %c0_42, %c0_43] : memref<9x128x128xf32, #tpu.memory_space<vmem>>, vector<1x128x128xf32>
    %41 = vector.shape_cast %40 : vector<1x128x128xf32> to vector<128x128xf32>
    %cst_44 = arith.constant dense<0.000000e+00> : vector<288x128xf32>
    %42 = tpu.matmul %39, %41, %cst_44 {dimension_numbers = #tpu.dot_dimension_numbers<[1], [0], [0], [1], [0, 0, 1, 1], [], []>} : vector<288x128xf32>, vector<128x128xf32>, vector<288x128xf32> -> vector<288x128xf32>
    %43 = arith.addf %37, %42 : vector<288x128xf32>
    %c0_45 = arith.constant 0 : index
    %c0_46 = arith.constant 0 : index
    %c37 = arith.constant 37 : index
    %c0_47 = arith.constant 0 : index
    %44 = vector.load %arg3[%c0_45, %c0_46, %c37, %c0_47] : memref<1x1x328x128xf32, #tpu.memory_space<vmem>>, vector<1x1x288x128xf32>
    %45 = vector.shape_cast %44 : vector<1x1x288x128xf32> to vector<288x128xf32>
    %c7 = arith.constant 7 : index
    %c0_48 = arith.constant 0 : index
    %c0_49 = arith.constant 0 : index
    %46 = vector.load %arg4[%c7, %c0_48, %c0_49] : memref<9x128x128xf32, #tpu.memory_space<vmem>>, vector<1x128x128xf32>
    %47 = vector.shape_cast %46 : vector<1x128x128xf32> to vector<128x128xf32>
    %cst_50 = arith.constant dense<0.000000e+00> : vector<288x128xf32>
    %48 = tpu.matmul %45, %47, %cst_50 {dimension_numbers = #tpu.dot_dimension_numbers<[1], [0], [0], [1], [0, 0, 1, 1], [], []>} : vector<288x128xf32>, vector<128x128xf32>, vector<288x128xf32> -> vector<288x128xf32>
    %49 = arith.addf %43, %48 : vector<288x128xf32>
    %c0_51 = arith.constant 0 : index
    %c0_52 = arith.constant 0 : index
    %c38 = arith.constant 38 : index
    %c0_53 = arith.constant 0 : index
    %50 = vector.load %arg3[%c0_51, %c0_52, %c38, %c0_53] : memref<1x1x328x128xf32, #tpu.memory_space<vmem>>, vector<1x1x288x128xf32>
    %51 = vector.shape_cast %50 : vector<1x1x288x128xf32> to vector<288x128xf32>
    %c8 = arith.constant 8 : index
    %c0_54 = arith.constant 0 : index
    %c0_55 = arith.constant 0 : index
    %52 = vector.load %arg4[%c8, %c0_54, %c0_55] : memref<9x128x128xf32, #tpu.memory_space<vmem>>, vector<1x128x128xf32>
    %53 = vector.shape_cast %52 : vector<1x128x128xf32> to vector<128x128xf32>
    %cst_56 = arith.constant dense<0.000000e+00> : vector<288x128xf32>
    %54 = tpu.matmul %51, %53, %cst_56 {dimension_numbers = #tpu.dot_dimension_numbers<[1], [0], [0], [1], [0, 0, 1, 1], [], []>} : vector<288x128xf32>, vector<128x128xf32>, vector<288x128xf32> -> vector<288x128xf32>
    %55 = arith.addf %49, %54 : vector<288x128xf32>
    %c0_57 = arith.constant 0 : index
    %c0_58 = arith.constant 0 : index
    %56 = vector.load %arg7[%c0_57, %c0_58] : memref<288x128xf32, #tpu.memory_space<vmem>>, vector<288x128xf32>
    %57 = arith.addf %56, %55 : vector<288x128xf32>
    %c0_59 = arith.constant 0 : index
    %c0_60 = arith.constant 0 : index
    %58 = vector.load %arg7[%c0_59, %c0_60] : memref<288x128xf32, #tpu.memory_space<vmem>>, vector<288x128xf32>
    tpu.vector_store %arg7[%c0_59, %c0_60], %57 {strides = array<i32>} : memref<288x128xf32, #tpu.memory_space<vmem>>, vector<288x128xf32>,
    %c0_i32_61 = arith.constant 0 : i32
    %59 = arith.cmpi eq, %arg2, %c0_i32_61 : i32
    %60 = arith.extui %59 : i1 to i32
    %c0_i32_62 = arith.constant 0 : i32
    %61 = arith.cmpi ne, %60, %c0_i32_62 : i32
    scf.if %61 {
      %c0_63 = arith.constant 0 : index
      %c0_64 = arith.constant 0 : index
      %62 = vector.load %arg7[%c0_63, %c0_64] : memref<288x128xf32, #tpu.memory_space<vmem>>, vector<288x128xf32>
      %c0_65 = arith.constant 0 : index
      %c0_66 = arith.constant 0 : index
      %63 = vector.load %arg5[%c0_65, %c0_66] : memref<1x128xf32, #tpu.memory_space<vmem>>, vector<1x128xf32>
      %64 = vector.broadcast %63 : vector<1x128xf32> to vector<288x128xf32>
      %65 = arith.addf %62, %64 : vector<288x128xf32>
      %cst_67 = arith.constant 0.000000e+00 : f32
      %66 = vector.broadcast %cst_67 : f32 to vector<288x128xf32>
      %67 = arith.maximumf %65, %66 : vector<288x128xf32>
      %c0_68 = arith.constant 0 : index
      %c0_69 = arith.constant 0 : index
      %c0_70 = arith.constant 0 : index
      %68 = vector.load %arg6[%c0_68, %c0_69, %c0_70] : memref<1x288x128xf32, #tpu.memory_space<vmem>>, vector<1x288x128xf32>
      %69 = vector.shape_cast %68 : vector<1x288x128xf32> to vector<288x128xf32>
      %70 = vector.shape_cast %67 : vector<288x128xf32> to vector<1x288x128xf32>
      tpu.vector_store %arg6[%c0_68, %c0_69, %c0_70], %70 {strides = array<i32>} : memref<1x288x128xf32, #tpu.memory_space<vmem>>, vector<1x288x128xf32>,
    } else {
    }
    return
  }
  func.func @transform_0(%arg0: i32, %arg1: i32, %arg2: i32) -> (i32, i32, i32, i32) {
    %c0_i32 = arith.constant 0 : i32
    %c0_i32_0 = arith.constant 0 : i32
    %c0_i32_1 = arith.constant 0 : i32
    return %arg0, %c0_i32, %c0_i32_0, %arg2 : i32, i32, i32, i32
  }
  func.func @transform_1(%arg0: i32, %arg1: i32, %arg2: i32) -> (i32, i32, i32) {
    %c0_i32 = arith.constant 0 : i32
    %c0_i32_0 = arith.constant 0 : i32
    return %c0_i32, %arg2, %arg1 : i32, i32, i32
  }
  func.func @transform_2(%arg0: i32, %arg1: i32, %arg2: i32) -> (i32, i32) {
    %c0_i32 = arith.constant 0 : i32
    %c0_i32_0 = arith.constant 0 : i32
    return %c0_i32, %arg1 : i32, i32
  }
  func.func @transform_3(%arg0: i32, %arg1: i32, %arg2: i32) -> (i32, i32, i32) {
    %c0_i32 = arith.constant 0 : i32
    %c0_i32_0 = arith.constant 0 : i32
    return %arg0, %c0_i32, %arg1 : i32, i32, i32
  }
}

</mosaic_0001>

<llo_original>
// kernel: tpu_custom_call.1
$region0: #{tpu_custom_call.1}
  #allocation0 [shape = 'u32[]', space=smem, size = 0x4, offset = 0x4, fixed_abs, tag = 'smem constant byte address 0x4 - core index']
  #allocation1 [shape = 'u32[144,128]{1,0:T(1,128)}', space=vmem, size = 0x12000, scoped, tag = 'internal scratch']
  #allocation2 [shape = 'f32[288,128]{1,0:T(8,128)}', space=vmem, size = 0x24000, scoped, tag = 'scratch operand']
  %s0 = inlined_call_operand.hbm [shape: f32[2,1,328,128], index: 0, kind: input, shape index: {}]
  %s1 = inlined_call_operand.hbm [shape: f32[9,128,128], index: 1, kind: input, shape index: {}]
  %s2 = inlined_call_operand.vmem [shape: f32[1,128], index: 2, kind: input, shape index: {}]
  %s3 = inlined_call_operand.hbm [shape: f32[2,288,128], index: 3, kind: output, shape index: {}]
  %s4 = sld [smem:[#allocation0]]
  $region61: #{tpu_custom_call.1} parent=0
    _
  %s6 = ssub.s32 1, %s4
  %s7 = scalar_select 0, %s6, %s4
  $region1: #{tpu_custom_call.1} parent=0
    #allocation3 [shape = 'u8[335872]{0}', space=vmem, size = 0x52000, scoped, tag = 'input window, operand 0']
    #allocation4 [shape = 's32[2]{0}', space=sflag, size = 0x8, scoped, tag = 'scoped memory for tpu_custom_call.1']
    #allocation5 [shape = 's32[2]{0}', space=sflag, size = 0x8, scoped, tag = 'scoped memory for tpu_custom_call.1']
    #allocation6 [shape = 'u8[589824]{0}', space=vmem, size = 0x90000, scoped, tag = 'input window, operand 1, single buffered']
    #allocation7 [shape = 's32[1]{0}', space=sflag, size = 0x4, scoped, tag = 'scoped memory for tpu_custom_call.1']
    #allocation8 [shape = 'u8[294912]{0}', space=vmem, size = 0x48000, scoped, tag = 'output window, operand 0']
    %8 = vsyncpa [#allocation4], 0
    %s9 = scalar_lea.sflag [#allocation4], 1
    %10 = vsyncpa %s9, 0
    %11 = vsyncpa [#allocation7], 0
    %12 = vsyncpa [#allocation5], 0
    %s13 = scalar_lea.sflag [#allocation5], 1
    %14 = vsyncpa %s13, 0
    loop: start=0, step=1, limit=4
    $region2: #{tpu_custom_call.1} parent=1 // loop_pre_header
      _
    $region3: #{tpu_custom_call.1} parent=1 // loop_header
      %s16 = sphi 0, %s20
      %p17 = scmp.ge.s32.totalorder %s16, 4
      %s23 = sphi 0, %s42
      %s24 = sphi 0, %s38
      %s25 = sphi 0, %s34
      %s26 = sphi 0, %s23
      %s27 = sphi 0, %s24
      %s28 = sphi 0, %s25
      %s29 = sphi 0, %s26
      %s30 = sphi 0, %s27
      %s31 = sphi 0, %s28
      %s47 = sphi 0, %s49
      %s50 = sphi 0, %s47
      %s51 = sphi 0, %s50
      %s67 = sphi 0, %s51
      %s75 = sphi 0, %s77
      %s78 = sphi 0, %s75
      %s79 = sphi 0, %s78
      %s95 = sphi 0, %s79
      %s101 = sphi 0, %s103
      %s104 = sphi 0, %s101
      %s105 = sphi 0, %s104
      %s121 = sphi 0, %s105
      %s129 = sphi 0, %s131
      %s132 = sphi 0, %s129
      %s133 = sphi 0, %s132
      %s149 = sphi 0, %s133
    $region4: #{tpu_custom_call.1} parent=1 // loop_header_branch
      %19 = sbr.rel (%p17) target = $region8
    $region5: #{tpu_custom_call.1} parent=1 // loop_body
      %s21 = ssub.s32 %s16, 1
      %s22 = ssub.s32 %s16, 2
      %s32 = sadd.s32 1, %s25
      %p33 = scmp.ge.s32.totalorder %s32, 1
      %s34 = scalar_select %p33, 0, %s32
      %s35 = sadd.s32 1, %s24
      %s36 = scalar_select %p33, %s35, %s24
      %p37 = scmp.ge.s32.totalorder %s36, 1
      %s38 = scalar_select %p37, 0, %s36
      %s39 = sadd.s32 1, %s23
      %s40 = scalar_select %p37, %s39, %s23
      %p41 = scmp.ge.s32.totalorder %s40, 2
      %s42 = scalar_select %p41, 0, %s40
      %s43 = ssub.s32 %s23, %s42
      %s44 = ssub.s32 %s25, %s34
      %s45 = sor.u32 %s43, %s44
      %p46 = scmp.eq.s32.totalorder %s45, 0
      %s48 = sadd.s32 %s47, 1
      %s49 = scalar_select %p46, %s47, %s48
      %p52 = pneg %p46
      %p53 = scmp.eq.s32.totalorder %s16, 1
      %p54 = por %p52, %p53
      %p55 = scmp.ne.s32.totalorder %s47, %s50
      %p56 = scmp.eq.s32.totalorder %s16, 0
      %p57 = por %p55, %p56
      %p58 = scmp.ne.s32.totalorder %s47, %s50
      %p59 = scmp.eq.s32.totalorder %s21, 1
      %p60 = por %p58, %p59
      %p61 = scmp.ne.s32.totalorder %s50, %s51
      %p62 = scmp.eq.s32.totalorder %s21, 0
      %p63 = por %p61, %p62
      %p64 = scmp.ne.s32.totalorder %s50, %s51
      %p65 = scmp.eq.s32.totalorder %s22, 1
      %p66 = por %p64, %p65
      %p68 = scmp.ne.s32.totalorder %s51, %s67
      %p69 = scmp.eq.s32.totalorder %s22, 0
      %p70 = por %p68, %p69
      %s71 = ssub.s32 %s25, %s34
      %s72 = ssub.s32 %s24, %s38
      %s73 = sor.u32 %s71, %s72
      %p74 = scmp.eq.s32.totalorder %s73, 0
      %s76 = sadd.s32 %s75, 1
      %s77 = scalar_select %p74, %s75, %s76
      %p80 = pneg %p74
      %p81 = scmp.eq.s32.totalorder %s16, 1
      %p82 = por %p80, %p81
      %p83 = scmp.ne.s32.totalorder %s75, %s78
      %p84 = scmp.eq.s32.totalorder %s16, 0
      %p85 = por %p83, %p84
      %p86 = scmp.ne.s32.totalorder %s75, %s78
      %p87 = scmp.eq.s32.totalorder %s21, 1
      %p88 = por %p86, %p87
      %p89 = scmp.ne.s32.totalorder %s78, %s79
      %p90 = scmp.eq.s32.totalorder %s21, 0
      %p91 = por %p89, %p90
      %p92 = scmp.ne.s32.totalorder %s78, %s79
      %p93 = scmp.eq.s32.totalorder %s22, 1
      %p94 = por %p92, %p93
      %p96 = scmp.ne.s32.totalorder %s79, %s95
      %p97 = scmp.eq.s32.totalorder %s22, 0
      %p98 = por %p96, %p97
      %s99 = ssub.s32 %s24, %s38
      %p100 = scmp.eq.s32.totalorder %s99, 0
      %s102 = sadd.s32 %s101, 1
      %s103 = scalar_select %p100, %s101, %s102
      %p106 = pneg %p100
      %p107 = scmp.eq.s32.totalorder %s16, 1
      %p108 = por %p106, %p107
      %p109 = scmp.ne.s32.totalorder %s101, %s104
      %p110 = scmp.eq.s32.totalorder %s16, 0
      %p111 = por %p109, %p110
      %p112 = scmp.ne.s32.totalorder %s101, %s104
      %p113 = scmp.eq.s32.totalorder %s21, 1
      %p114 = por %p112, %p113
      %p115 = scmp.ne.s32.totalorder %s104, %s105
      %p116 = scmp.eq.s32.totalorder %s21, 0
      %p117 = por %p115, %p116
      %p118 = scmp.ne.s32.totalorder %s104, %s105
      %p119 = scmp.eq.s32.totalorder %s22, 1
      %p120 = por %p118, %p119
      %p122 = scmp.ne.s32.totalorder %s105, %s121
      %p123 = scmp.eq.s32.totalorder %s22, 0
      %p124 = por %p122, %p123
      %s125 = ssub.s32 %s23, %s42
      %s126 = ssub.s32 %s24, %s38
      %s127 = sor.u32 %s125, %s126
      %p128 = scmp.eq.s32.totalorder %s127, 0
      %s130 = sadd.s32 %s129, 1
      %s131 = scalar_select %p128, %s129, %s130
      %p134 = pneg %p128
      %p135 = scmp.eq.s32.totalorder %s16, 1
      %p136 = por %p134, %p135
      %p137 = scmp.ne.s32.totalorder %s129, %s132
      %p138 = scmp.eq.s32.totalorder %s16, 0
      %p139 = por %p137, %p138
      %p140 = scmp.ne.s32.totalorder %s129, %s132
      %p141 = scmp.eq.s32.totalorder %s21, 1
      %p142 = por %p140, %p141
      %p143 = scmp.ne.s32.totalorder %s132, %s133
      %p144 = scmp.eq.s32.totalorder %s21, 0
      %p145 = por %p143, %p144
      %p146 = scmp.ne.s32.totalorder %s132, %s133
      %p147 = scmp.eq.s32.totalorder %s22, 1
      %p148 = por %p146, %p147
      %p150 = scmp.ne.s32.totalorder %s133, %s149
      %p151 = scmp.eq.s32.totalorder %s22, 0
      %p152 = por %p150, %p151
      %p153 = scmp.le.s32.totalorder 1, %s16
      %p154 = scmp.lt.s32.totalorder %s16, 3
      %p155 = pnand %p153, %p154
      %p156 = pneg %p155
      // Predicated region
      $region9: #{tpu_custom_call.1} parent=5 // pred_check
        _
      $region10: #{tpu_custom_call.1} parent=5 // pred_check_branch
        %158 = sbr.rel (%p155) target = $region12
      $region11: #{tpu_custom_call.1} parent=5 // pred_region
        %s159 = ssub.s32 %s16, 1
        // Predicated region
        $region13: #{tpu_custom_call.1} parent=11 // pred_check
          %p160 = pneg %p91
        $region14: #{tpu_custom_call.1} parent=11 // pred_check_branch
          %162 = sbr.rel (%p160) target = $region16
        $region15: #{tpu_custom_call.1} parent=11 // pred_region
          %s163 = smul.u32 16, %s28
          %s165 = ssub.s32 18432, 18432
          %166 = vsyncadd [#allocation7], %s165
          %s167 = sadd.s32 %s27, %s163
          %s168 = smul.addr %s167, 128
          %s169 = scalar_lea.hbm %s1, %s168
          %s170 = sshll.u32 [#allocation6], 4
          %s171 = int_to_ptr.vmem [resolvable:$true] %s170
          %176 = dma.hbm_to_vmem [thread:$0]  %s169, 18432, %s171, [#allocation7], 128, 128, 8
        $region16: #{tpu_custom_call.1} parent=11 // pred_fallthru
          _
        // Predicated region
        $region17: #{tpu_custom_call.1} parent=11 // pred_check
          %p177 = pneg %p117
        $region18: #{tpu_custom_call.1} parent=11 // pred_check_branch
          %179 = sbr.rel (%p177) target = $region20
        $region19: #{tpu_custom_call.1} parent=11 // pred_region
          %p180 = scmp.lt.s32.totalorder %s27, 0
          %s181 = scalar_select %p180, %s27, 0
          %s182 = scalar_lea.vmem %s2, %s181
        $region20: #{tpu_custom_call.1} parent=11 // pred_fallthru
          _
      $region12: #{tpu_custom_call.1} parent=5 // pred_fallthru
        _
      %p183 = scmp.lt.s32.totalorder %s16, 2
      // Predicated region
      $region21: #{tpu_custom_call.1} parent=5 // pred_check
        %p184 = pneg %p183
      $region22: #{tpu_custom_call.1} parent=5 // pred_check_branch
        %186 = sbr.rel (%p184) target = $region24
      $region23: #{tpu_custom_call.1} parent=5 // pred_region
        // Predicated region
        $region25: #{tpu_custom_call.1} parent=23 // pred_check
          %p187 = pneg %p57
        $region26: #{tpu_custom_call.1} parent=23 // pred_check_branch
          %189 = sbr.rel (%p187) target = $region28
        $region27: #{tpu_custom_call.1} parent=23 // pred_region
          %s190 = sand.u32 %s47, 1
          %s191 = scalar_lea.sflag [#allocation4], %s190
          %s192 = sand.u32 %s47, 1
          %s193 = smul.addr %s192, 328
          %s194 = scalar_lea.vmem [#allocation3], %s193
          %s196 = ssub.s32 5248, 5248
          %197 = vsyncadd %s191, %s196
          %s198 = smul.addr %s23, 41
          %s199 = sadd.s32 %s25, %s198
          %s200 = smul.addr %s199, 128
          %s201 = scalar_lea.hbm %s0, %s200
          %s202 = sshll.u32 %s194, 4
          %s203 = int_to_ptr.vmem [resolvable:$true] %s202
          %208 = dma.hbm_to_vmem [thread:$0]  %s201, 5248, %s203, %s191, 128, 128, 8
        $region28: #{tpu_custom_call.1} parent=23 // pred_fallthru
          _
      $region24: #{tpu_custom_call.1} parent=5 // pred_fallthru
        _
      %p209 = scmp.le.s32.totalorder 1, %s16
      %p210 = scmp.lt.s32.totalorder %s16, 3
      %p211 = pnand %p209, %p210
      %p212 = pneg %p211
      // Predicated region
      $region29: #{tpu_custom_call.1} parent=5 // pred_check
        _
      $region30: #{tpu_custom_call.1} parent=5 // pred_check_branch
        %214 = sbr.rel (%p211) target = $region32
      $region31: #{tpu_custom_call.1} parent=5 // pred_region
        %s215 = ssub.s32 %s16, 1
        %s216 = sand.u32 %s50, 1
        %s217 = scalar_lea.sflag [#allocation4], %s216
        %s218 = sand.u32 %s50, 1
        %s219 = smul.addr %s218, 328
        %s220 = scalar_lea.vmem [#allocation3], %s219
        // Predicated region
        $region33: #{tpu_custom_call.1} parent=31 // pred_check
          %p221 = pneg %p63
        $region34: #{tpu_custom_call.1} parent=31 // pred_check_branch
          %223 = sbr.rel (%p221) target = $region36
        $region35: #{tpu_custom_call.1} parent=31 // pred_region
          %224 = dma.done %s217, 5248
        $region36: #{tpu_custom_call.1} parent=31 // pred_fallthru
          _
        // Predicated region
        $region37: #{tpu_custom_call.1} parent=31 // pred_check
          %p225 = pneg %p91
        $region38: #{tpu_custom_call.1} parent=31 // pred_check_branch
          %227 = sbr.rel (%p225) target = $region40
        $region39: #{tpu_custom_call.1} parent=31 // pred_region
          %228 = dma.done [#allocation7], 18432
        $region40: #{tpu_custom_call.1} parent=31 // pred_fallthru
          _
        %s229 = sand.u32 %s50, 1
        %s230 = scalar_lea.sflag [#allocation4], %s229
        %s231 = sand.u32 %s50, 1
        %s232 = smul.addr %s231, 328
        %s233 = scalar_lea.vmem [#allocation3], %s232
        %p234 = pneg %p63
        %p235 = pneg %p60
        %p236 = pneg %p91
        %p237 = pneg %p88
        %p238 = scmp.lt.s32.totalorder %s27, 0
        %s239 = scalar_select %p238, %s27, 0
        %s240 = scalar_lea.vmem %s2, %s239
        %p241 = pneg %p117
        %p242 = pneg %p114
        %p243 = pneg %p145
        %p244 = pneg %p142
        %s245 = sand.u32 %s132, 1
        %s246 = scalar_lea.sflag [#allocation5], %s245
        %s247 = sand.u32 %s132, 1
        %s248 = smul.addr %s247, 288
        %s249 = scalar_lea.vmem [#allocation8], %s248
        %s250 = smul.u32 16, %s28
        %p251 = scmp.lt.s32.totalorder %s27, 0
        %s252 = scalar_select %p251, %s27, 0
        %s253 = scalar_lea.vmem %s2, %s252
        %p254 = scmp.eq.s32.totalorder %s28, 0
        // Predicated region
        $region41: #{tpu_custom_call.1} parent=31 // pred_check
          %p255 = pneg %p254
        $region42: #{tpu_custom_call.1} parent=31 // pred_check_branch
          %257 = sbr.rel (%p255) target = $region44
        $region43: #{tpu_custom_call.1} parent=31 // pred_region
          %258 = vst [vmem:[#allocation2] sm:$0xff] 0.0
          %259 = vst [vmem:[#allocation2 + $0x8] sm:$0xff] 0.0
          %260 = vst [vmem:[#allocation2 + $0x10] sm:$0xff] 0.0
          %261 = vst [vmem:[#allocation2 + $0x18] sm:$0xff] 0.0
          %262 = vst [vmem:[#allocation2 + $0x20] sm:$0xff] 0.0
          %263 = vst [vmem:[#allocation2 + $0x28] sm:$0xff] 0.0
          %264 = vst [vmem:[#allocation2 + $0x30] sm:$0xff] 0.0
          %265 = vst [vmem:[#allocation2 + $0x38] sm:$0xff] 0.0
          %266 = vst [vmem:[#allocation2 + $0x40] sm:$0xff] 0.0
          %267 = vst [vmem:[#allocation2 + $0x48] sm:$0xff] 0.0
          %268 = vst [vmem:[#allocation2 + $0x50] sm:$0xff] 0.0
          %269 = vst [vmem:[#allocation2 + $0x58] sm:$0xff] 0.0
          %270 = vst [vmem:[#allocation2 + $0x60] sm:$0xff] 0.0
          %271 = vst [vmem:[#allocation2 + $0x68] sm:$0xff] 0.0
          %272 = vst [vmem:[#allocation2 + $0x70] sm:$0xff] 0.0
          %273 = vst [vmem:[#allocation2 + $0x78] sm:$0xff] 0.0
          %274 = vst [vmem:[#allocation2 + $0x80] sm:$0xff] 0.0
          %275 = vst [vmem:[#allocation2 + $0x88] sm:$0xff] 0.0
          %276 = vst [vmem:[#allocation2 + $0x90] sm:$0xff] 0.0
          %277 = vst [vmem:[#allocation2 + $0x98] sm:$0xff] 0.0
          %278 = vst [vmem:[#allocation2 + $0xa0] sm:$0xff] 0.0
          %279 = vst [vmem:[#allocation2 + $0xa8] sm:$0xff] 0.0
          %280 = vst [vmem:[#allocation2 + $0xb0] sm:$0xff] 0.0
          %281 = vst [vmem:[#allocation2 + $0xb8] sm:$0xff] 0.0
          %282 = vst [vmem:[#allocation2 + $0xc0] sm:$0xff] 0.0
          %283 = vst [vmem:[#allocation2 + $0xc8] sm:$0xff] 0.0
          %284 = vst [vmem:[#allocation2 + $0xd0] sm:$0xff] 0.0
          %285 = vst [vmem:[#allocation2 + $0xd8] sm:$0xff] 0.0
          %286 = vst [vmem:[#allocation2 + $0xe0] sm:$0xff] 0.0
          %287 = vst [vmem:[#allocation2 + $0xe8] sm:$0xff] 0.0
          %288 = vst [vmem:[#allocation2 + $0xf0] sm:$0xff] 0.0
          %289 = vst [vmem:[#allocation2 + $0xf8] sm:$0xff] 0.0
          %290 = vst [vmem:[#allocation2 + $0x100] sm:$0xff] 0.0
          %291 = vst [vmem:[#allocation2 + $0x108] sm:$0xff] 0.0
          %292 = vst [vmem:[#allocation2 + $0x110] sm:$0xff] 0.0
          %293 = vst [vmem:[#allocation2 + $0x118] sm:$0xff] 0.0
        $region44: #{tpu_custom_call.1} parent=31 // pred_fallthru
          _
        %v294 = vld [vmem:[%s220] sm:$0xff]
        %v295 = vld [vmem:[%s220 + $0x8] sm:$0xff]
        %v296 = vld [vmem:[%s220 + $0x10] sm:$0xff]
        %v297 = vld [vmem:[%s220 + $0x18] sm:$0xff]
        %v298 = vld [vmem:[%s220 + $0x20] sm:$0xff]
        %v299 = vld [vmem:[%s220 + $0x28] sm:$0xff]
        %v300 = vld [vmem:[%s220 + $0x30] sm:$0xff]
        %v301 = vld [vmem:[%s220 + $0x38] sm:$0xff]
        %v302 = vld [vmem:[%s220 + $0x40] sm:$0xff]
        %v303 = vld [vmem:[%s220 + $0x48] sm:$0xff]
        %v304 = vld [vmem:[%s220 + $0x50] sm:$0xff]
        %v305 = vld [vmem:[%s220 + $0x58] sm:$0xff]
        %v306 = vld [vmem:[%s220 + $0x60] sm:$0xff]
        %v307 = vld [vmem:[%s220 + $0x68] sm:$0xff]
        %v308 = vld [vmem:[%s220 + $0x70] sm:$0xff]
        %v309 = vld [vmem:[%s220 + $0x78] sm:$0xff]
        %v310 = vld [vmem:[%s220 + $0x80] sm:$0xff]
        %v311 = vld [vmem:[%s220 + $0x88] sm:$0xff]
        %v312 = vld [vmem:[%s220 + $0x90] sm:$0xff]
        %v313 = vld [vmem:[%s220 + $0x98] sm:$0xff]
        %v314 = vld [vmem:[%s220 + $0xa0] sm:$0xff]
        %v315 = vld [vmem:[%s220 + $0xa8] sm:$0xff]
        %v316 = vld [vmem:[%s220 + $0xb0] sm:$0xff]
        %v317 = vld [vmem:[%s220 + $0xb8] sm:$0xff]
        %v318 = vld [vmem:[%s220 + $0xc0] sm:$0xff]
        %v319 = vld [vmem:[%s220 + $0xc8] sm:$0xff]
        %v320 = vld [vmem:[%s220 + $0xd0] sm:$0xff]
        %v321 = vld [vmem:[%s220 + $0xd8] sm:$0xff]
        %v322 = vld [vmem:[%s220 + $0xe0] sm:$0xff]
        %v323 = vld [vmem:[%s220 + $0xe8] sm:$0xff]
        %v324 = vld [vmem:[%s220 + $0xf0] sm:$0xff]
        %v325 = vld [vmem:[%s220 + $0xf8] sm:$0xff]
        %v326 = vld [vmem:[%s220 + $0x100] sm:$0xff]
        %v327 = vld [vmem:[%s220 + $0x108] sm:$0xff]
        %v328 = vld [vmem:[%s220 + $0x110] sm:$0xff]
        %v329 = vld [vmem:[%s220 + $0x118] sm:$0xff]
        %v330 = vld [vmem:[#allocation6] sm:$0xff]
        %v331 = vld [vmem:[#allocation6 + $0x8] sm:$0xff]
        %v332 = vld [vmem:[#allocation6 + $0x10] sm:$0xff]
        %v333 = vld [vmem:[#allocation6 + $0x18] sm:$0xff]
        %v334 = vld [vmem:[#allocation6 + $0x20] sm:$0xff]
        %v335 = vld [vmem:[#allocation6 + $0x28] sm:$0xff]
        %v336 = vld [vmem:[#allocation6 + $0x30] sm:$0xff]
        %v337 = vld [vmem:[#allocation6 + $0x38] sm:$0xff]
        %v338 = vld [vmem:[#allocation6 + $0x40] sm:$0xff]
        %v339 = vld [vmem:[#allocation6 + $0x48] sm:$0xff]
        %v340 = vld [vmem:[#allocation6 + $0x50] sm:$0xff]
        %v341 = vld [vmem:[#allocation6 + $0x58] sm:$0xff]
        %v342 = vld [vmem:[#allocation6 + $0x60] sm:$0xff]
        %v343 = vld [vmem:[#allocation6 + $0x68] sm:$0xff]
        %v344 = vld [vmem:[#allocation6 + $0x70] sm:$0xff]
        %v345 = vld [vmem:[#allocation6 + $0x78] sm:$0xff]
        %v346 = vld [vmem:[%s220 + $0x1] sm:$0xff]
        %v347 = vld [vmem:[%s220 + $0x9] sm:$0xff]
        %v348 = vld [vmem:[%s220 + $0x11] sm:$0xff]
        %v349 = vld [vmem:[%s220 + $0x19] sm:$0xff]
        %v350 = vld [vmem:[%s220 + $0x21] sm:$0xff]
        %v351 = vld [vmem:[%s220 + $0x29] sm:$0xff]
        %v352 = vld [vmem:[%s220 + $0x31] sm:$0xff]
        %v353 = vld [vmem:[%s220 + $0x39] sm:$0xff]
        %v354 = vld [vmem:[%s220 + $0x41] sm:$0xff]
        %v355 = vld [vmem:[%s220 + $0x49] sm:$0xff]
        %v356 = vld [vmem:[%s220 + $0x51] sm:$0xff]
        %v357 = vld [vmem:[%s220 + $0x59] sm:$0xff]
        %v358 = vld [vmem:[%s220 + $0x61] sm:$0xff]
        %v359 = vld [vmem:[%s220 + $0x69] sm:$0xff]
        %v360 = vld [vmem:[%s220 + $0x71] sm:$0xff]
        %v361 = vld [vmem:[%s220 + $0x79] sm:$0xff]
        %v362 = vld [vmem:[%s220 + $0x81] sm:$0xff]
        %v363 = vld [vmem:[%s220 + $0x89] sm:$0xff]
        %v364 = vld [vmem:[%s220 + $0x91] sm:$0xff]
        %v365 = vld [vmem:[%s220 + $0x99] sm:$0xff]
        %v366 = vld [vmem:[%s220 + $0xa1] sm:$0xff]
        %v367 = vld [vmem:[%s220 + $0xa9] sm:$0xff]
        %v368 = vld [vmem:[%s220 + $0xb1] sm:$0xff]
        %v369 = vld [vmem:[%s220 + $0xb9] sm:$0xff]
        %v370 = vld [vmem:[%s220 + $0xc1] sm:$0xff]
        %v371 = vld [vmem:[%s220 + $0xc9] sm:$0xff]
        %v372 = vld [vmem:[%s220 + $0xd1] sm:$0xff]
        %v373 = vld [vmem:[%s220 + $0xd9] sm:$0xff]
        %v374 = vld [vmem:[%s220 + $0xe1] sm:$0xff]
        %v375 = vld [vmem:[%s220 + $0xe9] sm:$0xff]
        %v376 = vld [vmem:[%s220 + $0xf1] sm:$0xff]
        %v377 = vld [vmem:[%s220 + $0xf9] sm:$0xff]
        %v378 = vld [vmem:[%s220 + $0x101] sm:$0xff]
        %v379 = vld [vmem:[%s220 + $0x109] sm:$0xff]
        %v380 = vld [vmem:[%s220 + $0x111] sm:$0xff]
        %v381 = vld [vmem:[%s220 + $0x119] sm:$0xff]
        %s382 = scalar_lea.vmem [#allocation6], 128
        %v383 = vld [vmem:[%s382] sm:$0xff]
        %v384 = vld [vmem:[%s382 + $0x8] sm:$0xff]
        %v385 = vld [vmem:[%s382 + $0x10] sm:$0xff]
        %v386 = vld [vmem:[%s382 + $0x18] sm:$0xff]
        %v387 = vld [vmem:[%s382 + $0x20] sm:$0xff]
        %v388 = vld [vmem:[%s382 + $0x28] sm:$0xff]
        %v389 = vld [vmem:[%s382 + $0x30] sm:$0xff]
        %v390 = vld [vmem:[%s382 + $0x38] sm:$0xff]
        %v391 = vld [vmem:[%s382 + $0x40] sm:$0xff]
        %v392 = vld [vmem:[%s382 + $0x48] sm:$0xff]
        %v393 = vld [vmem:[%s382 + $0x50] sm:$0xff]
        %v394 = vld [vmem:[%s382 + $0x58] sm:$0xff]
        %v395 = vld [vmem:[%s382 + $0x60] sm:$0xff]
        %v396 = vld [vmem:[%s382 + $0x68] sm:$0xff]
        %v397 = vld [vmem:[%s382 + $0x70] sm:$0xff]
        %v398 = vld [vmem:[%s382 + $0x78] sm:$0xff]
        %399 = vmatprep.subr.mxu0 0.0
        %400 = vmatpush1.msra.mxu0 %v383
        %401 = vmatprep.subr.mxu0 0.0
        %402 = vmatpush1.msra.mxu0 %v384
        %403 = vmatprep.subr.mxu0 0.0
        %404 = vmatpush1.msra.mxu0 %v385
        %405 = vmatprep.subr.mxu0 0.0
        %406 = vmatpush1.msra.mxu0 %v386
        %407 = vmatprep.subr.mxu0 0.0
        %408 = vmatpush1.msra.mxu0 %v387
        %409 = vmatprep.subr.mxu0 0.0
        %410 = vmatpush1.msra.mxu0 %v388
        %411 = vmatprep.subr.mxu0 0.0
        %412 = vmatpush1.msra.mxu0 %v389
        %413 = vmatprep.subr.mxu0 0.0
        %414 = vmatpush1.msra.mxu0 %v390
        %415 = vmatprep.subr.mxu0 0.0
        %416 = vmatpush1.msra.mxu0 %v391
        %417 = vmatprep.subr.mxu0 0.0
        %418 = vmatpush1.msra.mxu0 %v392
        %419 = vmatprep.subr.mxu0 0.0
        %420 = vmatpush1.msra.mxu0 %v393
        %421 = vmatprep.subr.mxu0 0.0
        %422 = vmatpush1.msra.mxu0 %v394
        %423 = vmatprep.subr.mxu0 0.0
        %424 = vmatpush1.msra.mxu0 %v395
        %425 = vmatprep.subr.mxu0 0.0
        %426 = vmatpush1.msra.mxu0 %v396
        %427 = vmatprep.subr.mxu0 0.0
        %428 = vmatpush1.msra.mxu0 %v397
        %429 = vmatprep.subr.mxu0 0.0
        %430 = vmatpush1.msra.mxu0 %v398
        %431 = vmatprep.subr.mxu0 0.0
        %432 = vmatpush1.msra.mxu0 0.0
        %433 = vmatprep.subr.mxu0 0.0
        %434 = vmatpush1.msra.mxu0 0.0
        %435 = vmatprep.subr.mxu0 0.0
        %436 = vmatpush1.msra.mxu0 0.0
        %437 = vmatprep.subr.mxu0 0.0
        %438 = vmatpush1.msra.mxu0 0.0
        %439 = vmatprep.subr.mxu0 0.0
        %440 = vmatpush1.msra.mxu0 0.0
        %441 = vmatprep.subr.mxu0 0.0
        %442 = vmatpush1.msra.mxu0 0.0
        %443 = vmatprep.subr.mxu0 0.0
        %444 = vmatpush1.msra.mxu0 0.0
        %445 = vmatprep.subr.mxu0 0.0
        %446 = vmatpush1.msra.mxu0 0.0
        %447 = vmatprep.subr.mxu0 0.0
        %448 = vmatpush1.msra.mxu0 0.0
        %449 = vmatprep.subr.mxu0 0.0
        %450 = vmatpush1.msra.mxu0 0.0
        %451 = vmatprep.subr.mxu0 0.0
        %452 = vmatpush1.msra.mxu0 0.0
        %453 = vmatprep.subr.mxu0 0.0
        %454 = vmatpush1.msra.mxu0 0.0
        %455 = vmatprep.subr.mxu0 0.0
        %456 = vmatpush1.msra.mxu0 0.0
        %457 = vmatprep.subr.mxu0 0.0
        %458 = vmatpush1.msra.mxu0 0.0
        %459 = vmatprep.subr.mxu0 0.0
        %460 = vmatpush1.msra.mxu0 0.0
        %461 = vmatprep.subr.mxu0 0.0
        %462 = vmatpush1.msra.mxu0 0.0
        %463 = vmatprep.mubr.f32.mxu0 0.0
        %464 = vmatmul.mubr.f32.gmra.mrb[0].mxu0 %v346
        %v465 = vpop.f32.mrb[0].mxu0
        %v466 = vadd.f32 0.0, %v465
        %v467 = vpop.f32.mrb[0].mxu0
        %468 = vmatprep.mubr.f32.mxu0 0.0
        %469 = vmatmul.mubr.f32.gmra.mrb[0].mxu0 %v347
        %v470 = vpop.f32.mrb[0].mxu0
        %v471 = vadd.f32 0.0, %v470
        %v472 = vpop.f32.mrb[0].mxu0
        %473 = vmatprep.mubr.f32.mxu0 0.0
        %474 = vmatmul.mubr.f32.gmra.mrb[0].mxu0 %v348
        %v475 = vpop.f32.mrb[0].mxu0
        %v476 = vadd.f32 0.0, %v475
        %v477 = vpop.f32.mrb[0].mxu0
        %478 = vmatprep.mubr.f32.mxu0 0.0
        %479 = vmatmul.mubr.f32.gmra.mrb[0].mxu0 %v349
        %v480 = vpop.f32.mrb[0].mxu0
        %v481 = vadd.f32 0.0, %v480
        %v482 = vpop.f32.mrb[0].mxu0
        %483 = vmatprep.mubr.f32.mxu0 0.0
        %484 = vmatmul.mubr.f32.gmra.mrb[0].mxu0 %v350
        %v485 = vpop.f32.mrb[0].mxu0
        %v486 = vadd.f32 0.0, %v485
        %v487 = vpop.f32.mrb[0].mxu0
        %488 = vmatprep.mubr.f32.mxu0 0.0
        %489 = vmatmul.mubr.f32.gmra.mrb[0].mxu0 %v351
        %v490 = vpop.f32.mrb[0].mxu0
        %v491 = vadd.f32 0.0, %v490
        %v492 = vpop.f32.mrb[0].mxu0
        %493 = vmatprep.mubr.f32.mxu0 0.0
        %494 = vmatmul.mubr.f32.gmra.mrb[0].mxu0 %v352
        %v495 = vpop.f32.mrb[0].mxu0
        %v496 = vadd.f32 0.0, %v495
        %v497 = vpop.f32.mrb[0].mxu0
        %498 = vmatprep.mubr.f32.mxu0 0.0
        %499 = vmatmul.mubr.f32.gmra.mrb[0].mxu0 %v353
        %v500 = vpop.f32.mrb[0].mxu0
        %v501 = vadd.f32 0.0, %v500
        %v502 = vpop.f32.mrb[0].mxu0
        %503 = vmatprep.mubr.f32.mxu0 0.0
        %504 = vmatmul.mubr.f32.gmra.mrb[0].mxu0 %v354
        %v505 = vpop.f32.mrb[0].mxu0
        %v506 = vadd.f32 0.0, %v505
        %v507 = vpop.f32.mrb[0].mxu0
        %508 = vmatprep.mubr.f32.mxu0 0.0
        %509 = vmatmul.mubr.f32.gmra.mrb[0].mxu0 %v355
        %v510 = vpop.f32.mrb[0].mxu0
        %v511 = vadd.f32 0.0, %v510
        %v512 = vpop.f32.mrb[0].mxu0
        %513 = vmatprep.mubr.f32.mxu0 0.0
        %514 = vmatmul.mubr.f32.gmra.mrb[0].mxu0 %v356
        %v515 = vpop.f32.mrb[0].mxu0
        %v516 = vadd.f32 0.0, %v515
        %v517 = vpop.f32.mrb[0].mxu0
        %518 = vmatprep.mubr.f32.mxu0 0.0
        %519 = vmatmul.mubr.f32.gmra.mrb[0].mxu0 %v357
        %v520 = vpop.f32.mrb[0].mxu0
        %v521 = vadd.f32 0.0, %v520
        %v522 = vpop.f32.mrb[0].mxu0
        %523 = vmatprep.mubr.f32.mxu0 0.0
        %524 = vmatmul.mubr.f32.gmra.mrb[0].mxu0 %v358
        %v525 = vpop.f32.mrb[0].mxu0
        %v526 = vadd.f32 0.0, %v525
        %v527 = vpop.f32.mrb[0].mxu0
        %528 = vmatprep.mubr.f32.mxu0 0.0
        %529 = vmatmul.mubr.f32.gmra.mrb[0].mxu0 %v359
        %v530 = vpop.f32.mrb[0].mxu0
        %v531 = vadd.f32 0.0, %v530
        %v532 = vpop.f32.mrb[0].mxu0
        %533 = vmatprep.mubr.f32.mxu0 0.0
        %534 = vmatmul.mubr.f32.gmra.mrb[0].mxu0 %v360
        %v535 = vpop.f32.mrb[0].mxu0
        %v536 = vadd.f32 0.0, %v535
        %v537 = vpop.f32.mrb[0].mxu0
        %538 = vmatprep.mubr.f32.mxu0 0.0
        %539 = vmatmul.mubr.f32.gmra.mrb[0].mxu0 %v361
        %v540 = vpop.f32.mrb[0].mxu0
        %v541 = vadd.f32 0.0, %v540
        %v542 = vpop.f32.mrb[0].mxu0
        %543 = vmatprep.mubr.f32.mxu0 0.0
        %544 = vmatmul.mubr.f32.gmra.mrb[0].mxu0 %v362
        %v545 = vpop.f32.mrb[0].mxu0
        %v546 = vadd.f32 0.0, %v545
        %v547 = vpop.f32.mrb[0].mxu0
        %548 = vmatprep.mubr.f32.mxu0 0.0
        %549 = vmatmul.mubr.f32.gmra.mrb[0].mxu0 %v363
        %v550 = vpop.f32.mrb[0].mxu0
        %v551 = vadd.f32 0.0, %v550
        %v552 = vpop.f32.mrb[0].mxu0
        %553 = vmatprep.mubr.f32.mxu0 0.0
        %554 = vmatmul.mubr.f32.gmra.mrb[0].mxu0 %v364
        %v555 = vpop.f32.mrb[0].mxu0
        %v556 = vadd.f32 0.0, %v555
        %v557 = vpop.f32.mrb[0].mxu0
        %558 = vmatprep.mubr.f32.mxu0 0.0
        %559 = vmatmul.mubr.f32.gmra.mrb[0].mxu0 %v365
        %v560 = vpop.f32.mrb[0].mxu0
        %v561 = vadd.f32 0.0, %v560
        %v562 = vpop.f32.mrb[0].mxu0
        %563 = vmatprep.mubr.f32.mxu0 0.0
        %564 = vmatmul.mubr.f32.gmra.mrb[0].mxu0 %v366
        %v565 = vpop.f32.mrb[0].mxu0
        %v566 = vadd.f32 0.0, %v565
        %v567 = vpop.f32.mrb[0].mxu0
        %568 = vmatprep.mubr.f32.mxu0 0.0
        %569 = vmatmul.mubr.f32.gmra.mrb[0].mxu0 %v367
        %v570 = vpop.f32.mrb[0].mxu0
        %v571 = vadd.f32 0.0, %v570
        %v572 = vpop.f32.mrb[0].mxu0
        %573 = vmatprep.mubr.f32.mxu0 0.0
        %574 = vmatmul.mubr.f32.gmra.mrb[0].mxu0 %v368
        %v575 = vpop.f32.mrb[0].mxu0
        %v576 = vadd.f32 0.0, %v575
        %v577 = vpop.f32.mrb[0].mxu0
        %578 = vmatprep.mubr.f32.mxu0 0.0
        %579 = vmatmul.mubr.f32.gmra.mrb[0].mxu0 %v369
        %v580 = vpop.f32.mrb[0].mxu0
        %v581 = vadd.f32 0.0, %v580
        %v582 = vpop.f32.mrb[0].mxu0
        %583 = vmatprep.mubr.f32.mxu0 0.0
        %584 = vmatmul.mubr.f32.gmra.mrb[0].mxu0 %v370
        %v585 = vpop.f32.mrb[0].mxu0
        %v586 = vadd.f32 0.0, %v585
        %v587 = vpop.f32.mrb[0].mxu0
        %588 = vmatprep.mubr.f32.mxu0 0.0
        %589 = vmatmul.mubr.f32.gmra.mrb[0].mxu0 %v371
        %v590 = vpop.f32.mrb[0].mxu0
        %v591 = vadd.f32 0.0, %v590
        %v592 = vpop.f32.mrb[0].mxu0
        %593 = vmatprep.mubr.f32.mxu0 0.0
        %594 = vmatmul.mubr.f32.gmra.mrb[0].mxu0 %v372
        %v595 = vpop.f32.mrb[0].mxu0
        %v596 = vadd.f32 0.0, %v595
        %v597 = vpop.f32.mrb[0].mxu0
        %598 = vmatprep.mubr.f32.mxu0 0.0
        %599 = vmatmul.mubr.f32.gmra.mrb[0].mxu0 %v373
        %v600 = vpop.f32.mrb[0].mxu0
        %v601 = vadd.f32 0.0, %v600
        %v602 = vpop.f32.mrb[0].mxu0
        %603 = vmatprep.mubr.f32.mxu0 0.0
        %604 = vmatmul.mubr.f32.gmra.mrb[0].mxu0 %v374
        %v605 = vpop.f32.mrb[0].mxu0
        %v606 = vadd.f32 0.0, %v605
        %v607 = vpop.f32.mrb[0].mxu0
        %608 = vmatprep.mubr.f32.mxu0 0.0
        %609 = vmatmul.mubr.f32.gmra.mrb[0].mxu0 %v375
        %v610 = vpop.f32.mrb[0].mxu0
        %v611 = vadd.f32 0.0, %v610
        %v612 = vpop.f32.mrb[0].mxu0
        %613 = vmatprep.mubr.f32.mxu0 0.0
        %614 = vmatmul.mubr.f32.gmra.mrb[0].mxu0 %v376
        %v615 = vpop.f32.mrb[0].mxu0
        %v616 = vadd.f32 0.0, %v615
        %v617 = vpop.f32.mrb[0].mxu0
        %618 = vmatprep.mubr.f32.mxu0 0.0
        %619 = vmatmul.mubr.f32.gmra.mrb[0].mxu0 %v377
        %v620 = vpop.f32.mrb[0].mxu0
        %v621 = vadd.f32 0.0, %v620
        %v622 = vpop.f32.mrb[0].mxu0
        %623 = vmatprep.mubr.f32.mxu0 0.0
        %624 = vmatmul.mubr.f32.gmra.mrb[0].mxu0 %v378
        %v625 = vpop.f32.mrb[0].mxu0
        %v626 = vadd.f32 0.0, %v625
        %v627 = vpop.f32.mrb[0].mxu0
        %628 = vmatprep.mubr.f32.mxu0 0.0
        %629 = vmatmul.mubr.f32.gmra.mrb[0].mxu0 %v379
        %v630 = vpop.f32.mrb[0].mxu0
        %v631 = vadd.f32 0.0, %v630
        %v632 = vpop.f32.mrb[0].mxu0
        %633 = vmatprep.mubr.f32.mxu0 0.0
        %634 = vmatmul.mubr.f32.gmra.mrb[0].mxu0 %v380
        %v635 = vpop.f32.mrb[0].mxu0
        %v636 = vadd.f32 0.0, %v635
        %v637 = vpop.f32.mrb[0].mxu0
        %638 = vmatprep.mubr.f32.mxu0 0.0
        %639 = vmatmul.mubr.f32.gmra.mrb[0].mxu0 %v381
        %v640 = vpop.f32.mrb[0].mxu0
        %v641 = vadd.f32 0.0, %v640
        %v642 = vpop.f32.mrb[0].mxu0
        %643 = vdwg.mxu0
        %644 = vmatprep.subr.mxu0 0.0
        %645 = vmatpush1.msra.mxu0 %v330
        %646 = vmatprep.subr.mxu0 0.0
        %647 = vmatpush1.msra.mxu0 %v331
        %648 = vmatprep.subr.mxu0 0.0
        %649 = vmatpush1.msra.mxu0 %v332
        %650 = vmatprep.subr.mxu0 0.0
        %651 = vmatpush1.msra.mxu0 %v333
        %652 = vmatprep.subr.mxu0 0.0
        %653 = vmatpush1.msra.mxu0 %v334
        %654 = vmatprep.subr.mxu0 0.0
        %655 = vmatpush1.msra.mxu0 %v335
        %656 = vmatprep.subr.mxu0 0.0
        %657 = vmatpush1.msra.mxu0 %v336
        %658 = vmatprep.subr.mxu0 0.0
        %659 = vmatpush1.msra.mxu0 %v337
        %660 = vmatprep.subr.mxu0 0.0
        %661 = vmatpush1.msra.mxu0 %v338
        %662 = vmatprep.subr.mxu0 0.0
        %663 = vmatpush1.msra.mxu0 %v339
        %664 = vmatprep.subr.mxu0 0.0
        %665 = vmatpush1.msra.mxu0 %v340
        %666 = vmatprep.subr.mxu0 0.0
        %667 = vmatpush1.msra.mxu0 %v341
        %668 = vmatprep.subr.mxu0 0.0
        %669 = vmatpush1.msra.mxu0 %v342
        %670 = vmatprep.subr.mxu0 0.0
        %671 = vmatpush1.msra.mxu0 %v343
        %672 = vmatprep.subr.mxu0 0.0
        %673 = vmatpush1.msra.mxu0 %v344
        %674 = vmatprep.subr.mxu0 0.0
        %675 = vmatpush1.msra.mxu0 %v345
        %676 = vmatprep.subr.mxu0 0.0
        %677 = vmatpush1.msra.mxu0 0.0
        %678 = vmatprep.subr.mxu0 0.0
        %679 = vmatpush1.msra.mxu0 0.0
        %680 = vmatprep.subr.mxu0 0.0
        %681 = vmatpush1.msra.mxu0 0.0
        %682 = vmatprep.subr.mxu0 0.0
        %683 = vmatpush1.msra.mxu0 0.0
        %684 = vmatprep.subr.mxu0 0.0
        %685 = vmatpush1.msra.mxu0 0.0
        %686 = vmatprep.subr.mxu0 0.0
        %687 = vmatpush1.msra.mxu0 0.0
        %688 = vmatprep.subr.mxu0 0.0
        %689 = vmatpush1.msra.mxu0 0.0
        %690 = vmatprep.subr.mxu0 0.0
        %691 = vmatpush1.msra.mxu0 0.0
        %692 = vmatprep.subr.mxu0 0.0
        %693 = vmatpush1.msra.mxu0 0.0
        %694 = vmatprep.subr.mxu0 0.0
        %695 = vmatpush1.msra.mxu0 0.0
        %696 = vmatprep.subr.mxu0 0.0
        %697 = vmatpush1.msra.mxu0 0.0
        %698 = vmatprep.subr.mxu0 0.0
        %699 = vmatpush1.msra.mxu0 0.0
        %700 = vmatprep.subr.mxu0 0.0
        %701 = vmatpush1.msra.mxu0 0.0
        %702 = vmatprep.subr.mxu0 0.0
        %703 = vmatpush1.msra.mxu0 0.0
        %704 = vmatprep.subr.mxu0 0.0
        %705 = vmatpush1.msra.mxu0 0.0
        %706 = vmatprep.subr.mxu0 0.0
        %707 = vmatpush1.msra.mxu0 0.0
        %708 = vmatprep.mubr.f32.mxu0 0.0
        %709 = vmatmul.mubr.f32.gmra.mrb[0].mxu0 %v294
        %v710 = vpop.f32.mrb[0].mxu0
        %v711 = vadd.f32 %v466, %v710
        %v712 = vpop.f32.mrb[0].mxu0
        %713 = vmatprep.mubr.f32.mxu0 0.0
        %714 = vmatmul.mubr.f32.gmra.mrb[0].mxu0 %v295
        %v715 = vpop.f32.mrb[0].mxu0
        %v716 = vadd.f32 %v471, %v715
        %v717 = vpop.f32.mrb[0].mxu0
        %718 = vmatprep.mubr.f32.mxu0 0.0
        %719 = vmatmul.mubr.f32.gmra.mrb[0].mxu0 %v296
        %v720 = vpop.f32.mrb[0].mxu0
        %v721 = vadd.f32 %v476, %v720
        %v722 = vpop.f32.mrb[0].mxu0
        %723 = vmatprep.mubr.f32.mxu0 0.0
        %724 = vmatmul.mubr.f32.gmra.mrb[0].mxu0 %v297
        %v725 = vpop.f32.mrb[0].mxu0
        %v726 = vadd.f32 %v481, %v725
        %v727 = vpop.f32.mrb[0].mxu0
        %728 = vmatprep.mubr.f32.mxu0 0.0
        %729 = vmatmul.mubr.f32.gmra.mrb[0].mxu0 %v298
        %v730 = vpop.f32.mrb[0].mxu0
        %v731 = vadd.f32 %v486, %v730
        %v732 = vpop.f32.mrb[0].mxu0
        %733 = vmatprep.mubr.f32.mxu0 0.0
        %734 = vmatmul.mubr.f32.gmra.mrb[0].mxu0 %v299
        %v735 = vpop.f32.mrb[0].mxu0
        %v736 = vadd.f32 %v491, %v735
        %v737 = vpop.f32.mrb[0].mxu0
        %738 = vmatprep.mubr.f32.mxu0 0.0
        %739 = vmatmul.mubr.f32.gmra.mrb[0].mxu0 %v300
        %v740 = vpop.f32.mrb[0].mxu0
        %v741 = vadd.f32 %v496, %v740
        %v742 = vpop.f32.mrb[0].mxu0
        %743 = vmatprep.mubr.f32.mxu0 0.0
        %744 = vmatmul.mubr.f32.gmra.mrb[0].mxu0 %v301
        %v745 = vpop.f32.mrb[0].mxu0
        %v746 = vadd.f32 %v501, %v745
        %v747 = vpop.f32.mrb[0].mxu0
        %748 = vmatprep.mubr.f32.mxu0 0.0
        %749 = vmatmul.mubr.f32.gmra.mrb[0].mxu0 %v302
        %v750 = vpop.f32.mrb[0].mxu0
        %v751 = vadd.f32 %v506, %v750
        %v752 = vpop.f32.mrb[0].mxu0
        %753 = vmatprep.mubr.f32.mxu0 0.0
        %754 = vmatmul.mubr.f32.gmra.mrb[0].mxu0 %v303
        %v755 = vpop.f32.mrb[0].mxu0
        %v756 = vadd.f32 %v511, %v755
        %v757 = vpop.f32.mrb[0].mxu0
        %758 = vmatprep.mubr.f32.mxu0 0.0
        %759 = vmatmul.mubr.f32.gmra.mrb[0].mxu0 %v304
        %v760 = vpop.f32.mrb[0].mxu0
        %v761 = vadd.f32 %v516, %v760
        %v762 = vpop.f32.mrb[0].mxu0
        %763 = vmatprep.mubr.f32.mxu0 0.0
        %764 = vmatmul.mubr.f32.gmra.mrb[0].mxu0 %v305
        %v765 = vpop.f32.mrb[0].mxu0
        %v766 = vadd.f32 %v521, %v765
        %v767 = vpop.f32.mrb[0].mxu0
        %768 = vmatprep.mubr.f32.mxu0 0.0
        %769 = vmatmul.mubr.f32.gmra.mrb[0].mxu0 %v306
        %v770 = vpop.f32.mrb[0].mxu0
        %v771 = vadd.f32 %v526, %v770
        %v772 = vpop.f32.mrb[0].mxu0
        %773 = vmatprep.mubr.f32.mxu0 0.0
        %774 = vmatmul.mubr.f32.gmra.mrb[0].mxu0 %v307
        %v775 = vpop.f32.mrb[0].mxu0
        %v776 = vadd.f32 %v531, %v775
        %v777 = vpop.f32.mrb[0].mxu0
        %778 = vmatprep.mubr.f32.mxu0 0.0
        %779 = vmatmul.mubr.f32.gmra.mrb[0].mxu0 %v308
        %v780 = vpop.f32.mrb[0].mxu0
        %v781 = vadd.f32 %v536, %v780
        %v782 = vpop.f32.mrb[0].mxu0
        %783 = vmatprep.mubr.f32.mxu0 0.0
        %784 = vmatmul.mubr.f32.gmra.mrb[0].mxu0 %v309
        %v785 = vpop.f32.mrb[0].mxu0
        %v786 = vadd.f32 %v541, %v785
        %v787 = vpop.f32.mrb[0].mxu0
        %788 = vmatprep.mubr.f32.mxu0 0.0
        %789 = vmatmul.mubr.f32.gmra.mrb[0].mxu0 %v310
        %v790 = vpop.f32.mrb[0].mxu0
        %v791 = vadd.f32 %v546, %v790
        %v792 = vpop.f32.mrb[0].mxu0
        %793 = vmatprep.mubr.f32.mxu0 0.0
        %794 = vmatmul.mubr.f32.gmra.mrb[0].mxu0 %v311
        %v795 = vpop.f32.mrb[0].mxu0
        %v796 = vadd.f32 %v551, %v795
        %v797 = vpop.f32.mrb[0].mxu0
        %798 = vmatprep.mubr.f32.mxu0 0.0
        %799 = vmatmul.mubr.f32.gmra.mrb[0].mxu0 %v312
        %v800 = vpop.f32.mrb[0].mxu0
        %v801 = vadd.f32 %v556, %v800
        %v802 = vpop.f32.mrb[0].mxu0
        %803 = vmatprep.mubr.f32.mxu0 0.0
        %804 = vmatmul.mubr.f32.gmra.mrb[0].mxu0 %v313
        %v805 = vpop.f32.mrb[0].mxu0
        %v806 = vadd.f32 %v561, %v805
        %v807 = vpop.f32.mrb[0].mxu0
        %808 = vmatprep.mubr.f32.mxu0 0.0
        %809 = vmatmul.mubr.f32.gmra.mrb[0].mxu0 %v314
        %v810 = vpop.f32.mrb[0].mxu0
        %v811 = vadd.f32 %v566, %v810
        %v812 = vpop.f32.mrb[0].mxu0
        %813 = vmatprep.mubr.f32.mxu0 0.0
        %814 = vmatmul.mubr.f32.gmra.mrb[0].mxu0 %v315
        %v815 = vpop.f32.mrb[0].mxu0
        %v816 = vadd.f32 %v571, %v815
        %v817 = vpop.f32.mrb[0].mxu0
        %818 = vmatprep.mubr.f32.mxu0 0.0
        %819 = vmatmul.mubr.f32.gmra.mrb[0].mxu0 %v316
        %v820 = vpop.f32.mrb[0].mxu0
        %v821 = vadd.f32 %v576, %v820
        %v822 = vpop.f32.mrb[0].mxu0
        %823 = vmatprep.mubr.f32.mxu0 0.0
        %824 = vmatmul.mubr.f32.gmra.mrb[0].mxu0 %v317
        %v825 = vpop.f32.mrb[0].mxu0
        %v826 = vadd.f32 %v581, %v825
        %v827 = vpop.f32.mrb[0].mxu0
        %828 = vmatprep.mubr.f32.mxu0 0.0
        %829 = vmatmul.mubr.f32.gmra.mrb[0].mxu0 %v318
        %v830 = vpop.f32.mrb[0].mxu0
        %v831 = vadd.f32 %v586, %v830
        %v832 = vpop.f32.mrb[0].mxu0
        %833 = vmatprep.mubr.f32.mxu0 0.0
        %834 = vmatmul.mubr.f32.gmra.mrb[0].mxu0 %v319
        %v835 = vpop.f32.mrb[0].mxu0
        %v836 = vadd.f32 %v591, %v835
        %v837 = vpop.f32.mrb[0].mxu0
        %838 = vmatprep.mubr.f32.mxu0 0.0
        %839 = vmatmul.mubr.f32.gmra.mrb[0].mxu0 %v320
        %v840 = vpop.f32.mrb[0].mxu0
        %v841 = vadd.f32 %v596, %v840
        %v842 = vpop.f32.mrb[0].mxu0
        %843 = vmatprep.mubr.f32.mxu0 0.0
        %844 = vmatmul.mubr.f32.gmra.mrb[0].mxu0 %v321
        %v845 = vpop.f32.mrb[0].mxu0
        %v846 = vadd.f32 %v601, %v845
        %v847 = vpop.f32.mrb[0].mxu0
        %848 = vmatprep.mubr.f32.mxu0 0.0
        %849 = vmatmul.mubr.f32.gmra.mrb[0].mxu0 %v322
        %v850 = vpop.f32.mrb[0].mxu0
        %v851 = vadd.f32 %v606, %v850
        %v852 = vpop.f32.mrb[0].mxu0
        %853 = vmatprep.mubr.f32.mxu0 0.0
        %854 = vmatmul.mubr.f32.gmra.mrb[0].mxu0 %v323
        %v855 = vpop.f32.mrb[0].mxu0
        %v856 = vadd.f32 %v611, %v855
        %v857 = vpop.f32.mrb[0].mxu0
        %858 = vmatprep.mubr.f32.mxu0 0.0
        %859 = vmatmul.mubr.f32.gmra.mrb[0].mxu0 %v324
        %v860 = vpop.f32.mrb[0].mxu0
        %v861 = vadd.f32 %v616, %v860
        %v862 = vpop.f32.mrb[0].mxu0
        %863 = vmatprep.mubr.f32.mxu0 0.0
        %864 = vmatmul.mubr.f32.gmra.mrb[0].mxu0 %v325
        %v865 = vpop.f32.mrb[0].mxu0
        %v866 = vadd.f32 %v621, %v865
        %v867 = vpop.f32.mrb[0].mxu0
        %868 = vmatprep.mubr.f32.mxu0 0.0
        %869 = vmatmul.mubr.f32.gmra.mrb[0].mxu0 %v326
        %v870 = vpop.f32.mrb[0].mxu0
        %v871 = vadd.f32 %v626, %v870
        %v872 = vpop.f32.mrb[0].mxu0
        %873 = vmatprep.mubr.f32.mxu0 0.0
        %874 = vmatmul.mubr.f32.gmra.mrb[0].mxu0 %v327
        %v875 = vpop.f32.mrb[0].mxu0
        %v876 = vadd.f32 %v631, %v875
        %v877 = vpop.f32.mrb[0].mxu0
        %878 = vmatprep.mubr.f32.mxu0 0.0
        %879 = vmatmul.mubr.f32.gmra.mrb[0].mxu0 %v328
        %v880 = vpop.f32.mrb[0].mxu0
        %v881 = vadd.f32 %v636, %v880
        %v882 = vpop.f32.mrb[0].mxu0
        %883 = vmatprep.mubr.f32.mxu0 0.0
        %884 = vmatmul.mubr.f32.gmra.mrb[0].mxu0 %v329
        %v885 = vpop.f32.mrb[0].mxu0
        %v886 = vadd.f32 %v641, %v885
        %v887 = vpop.f32.mrb[0].mxu0
        %888 = vdwg.mxu0
        %v889 = vld [vmem:[%s220 + $0x2] sm:$0xff]
        %v890 = vld [vmem:[%s220 + $0xa] sm:$0xff]
        %v891 = vld [vmem:[%s220 + $0x12] sm:$0xff]
        %v892 = vld [vmem:[%s220 + $0x1a] sm:$0xff]
        %v893 = vld [vmem:[%s220 + $0x22] sm:$0xff]
        %v894 = vld [vmem:[%s220 + $0x2a] sm:$0xff]
        %v895 = vld [vmem:[%s220 + $0x32] sm:$0xff]
        %v896 = vld [vmem:[%s220 + $0x3a] sm:$0xff]
        %v897 = vld [vmem:[%s220 + $0x42] sm:$0xff]
        %v898 = vld [vmem:[%s220 + $0x4a] sm:$0xff]
        %v899 = vld [vmem:[%s220 + $0x52] sm:$0xff]
        %v900 = vld [vmem:[%s220 + $0x5a] sm:$0xff]
        %v901 = vld [vmem:[%s220 + $0x62] sm:$0xff]
        %v902 = vld [vmem:[%s220 + $0x6a] sm:$0xff]
        %v903 = vld [vmem:[%s220 + $0x72] sm:$0xff]
        %v904 = vld [vmem:[%s220 + $0x7a] sm:$0xff]
        %v905 = vld [vmem:[%s220 + $0x82] sm:$0xff]
        %v906 = vld [vmem:[%s220 + $0x8a] sm:$0xff]
        %v907 = vld [vmem:[%s220 + $0x92] sm:$0xff]
        %v908 = vld [vmem:[%s220 + $0x9a] sm:$0xff]
        %v909 = vld [vmem:[%s220 + $0xa2] sm:$0xff]
        %v910 = vld [vmem:[%s220 + $0xaa] sm:$0xff]
        %v911 = vld [vmem:[%s220 + $0xb2] sm:$0xff]
        %v912 = vld [vmem:[%s220 + $0xba] sm:$0xff]
        %v913 = vld [vmem:[%s220 + $0xc2] sm:$0xff]
        %v914 = vld [vmem:[%s220 + $0xca] sm:$0xff]
        %v915 = vld [vmem:[%s220 + $0xd2] sm:$0xff]
        %v916 = vld [vmem:[%s220 + $0xda] sm:$0xff]
        %v917 = vld [vmem:[%s220 + $0xe2] sm:$0xff]
        %v918 = vld [vmem:[%s220 + $0xea] sm:$0xff]
        %v919 = vld [vmem:[%s220 + $0xf2] sm:$0xff]
        %v920 = vld [vmem:[%s220 + $0xfa] sm:$0xff]
        %v921 = vld [vmem:[%s220 + $0x102] sm:$0xff]
        %v922 = vld [vmem:[%s220 + $0x10a] sm:$0xff]
        %v923 = vld [vmem:[%s220 + $0x112] sm:$0xff]
        %v924 = vld [vmem:[%s220 + $0x11a] sm:$0xff]
        %s925 = scalar_lea.vmem [#allocation6], 256
        %v926 = vld [vmem:[%s925] sm:$0xff]
        %v927 = vld [vmem:[%s925 + $0x8] sm:$0xff]
        %v928 = vld [vmem:[%s925 + $0x10] sm:$0xff]
        %v929 = vld [vmem:[%s925 + $0x18] sm:$0xff]
        %v930 = vld [vmem:[%s925 + $0x20] sm:$0xff]
        %v931 = vld [vmem:[%s925 + $0x28] sm:$0xff]
        %v932 = vld [vmem:[%s925 + $0x30] sm:$0xff]
        %v933 = vld [vmem:[%s925 + $0x38] sm:$0xff]
        %v934 = vld [vmem:[%s925 + $0x40] sm:$0xff]
        %v935 = vld [vmem:[%s925 + $0x48] sm:$0xff]
        %v936 = vld [vmem:[%s925 + $0x50] sm:$0xff]
        %v937 = vld [vmem:[%s925 + $0x58] sm:$0xff]
        %v938 = vld [vmem:[%s925 + $0x60] sm:$0xff]
        %v939 = vld [vmem:[%s925 + $0x68] sm:$0xff]
        %v940 = vld [vmem:[%s925 + $0x70] sm:$0xff]
        %v941 = vld [vmem:[%s925 + $0x78] sm:$0xff]
        %942 = vmatprep.subr.mxu0 0.0
        %943 = vmatpush1.msra.mxu0 %v926
        %944 = vmatprep.subr.mxu0 0.0
        %945 = vmatpush1.msra.mxu0 %v927
        %946 = vmatprep.subr.mxu0 0.0
        %947 = vmatpush1.msra.mxu0 %v928
        %948 = vmatprep.subr.mxu0 0.0
        %949 = vmatpush1.msra.mxu0 %v929
        %950 = vmatprep.subr.mxu0 0.0
        %951 = vmatpush1.msra.mxu0 %v930
        %952 = vmatprep.subr.mxu0 0.0
        %953 = vmatpush1.msra.mxu0 %v931
        %954 = vmatprep.subr.mxu0 0.0
        %955 = vmatpush1.msra.mxu0 %v932
        %956 = vmatprep.subr.mxu0 0.0
        %957 = vmatpush1.msra.mxu0 %v933
        %958 = vmatprep.subr.mxu0 0.0
        %959 = vmatpush1.msra.mxu0 %v934
        %960 = vmatprep.subr.mxu0 0.0
        %961 = vmatpush1.msra.mxu0 %v935
        %962 = vmatprep.subr.mxu0 0.0
        %963 = vmatpush1.msra.mxu0 %v936
        %964 = vmatprep.subr.mxu0 0.0
        %965 = vmatpush1.msra.mxu0 %v937
        %966 = vmatprep.subr.mxu0 0.0
        %967 = vmatpush1.msra.mxu0 %v938
        %968 = vmatprep.subr.mxu0 0.0
        %969 = vmatpush1.msra.mxu0 %v939
        %970 = vmatprep.subr.mxu0 0.0
        %971 = vmatpush1.msra.mxu0 %v940
        %972 = vmatprep.subr.mxu0 0.0
        %973 = vmatpush1.msra.mxu0 %v941
        %974 = vmatprep.subr.mxu0 0.0
        %975 = vmatpush1.msra.mxu0 0.0
        %976 = vmatprep.subr.mxu0 0.0
        %977 = vmatpush1.msra.mxu0 0.0
        %978 = vmatprep.subr.mxu0 0.0
        %979 = vmatpush1.msra.mxu0 0.0
        %980 = vmatprep.subr.mxu0 0.0
        %981 = vmatpush1.msra.mxu0 0.0
        %982 = vmatprep.subr.mxu0 0.0
        %983 = vmatpush1.msra.mxu0 0.0
        %984 = vmatprep.subr.mxu0 0.0
        %985 = vmatpush1.msra.mxu0 0.0
        %986 = vmatprep.subr.mxu0 0.0
        %987 = vmatpush1.msra.mxu0 0.0
        %988 = vmatprep.subr.mxu0 0.0
        %989 = vmatpush1.msra.mxu0 0.0
        %990 = vmatprep.subr.mxu0 0.0
        %991 = vmatpush1.msra.mxu0 0.0
        %992 = vmatprep.subr.mxu0 0.0
        %993 = vmatpush1.msra.mxu0 0.0
        %994 = vmatprep.subr.mxu0 0.0
        %995 = vmatpush1.msra.mxu0 0.0
        %996 = vmatprep.subr.mxu0 0.0
        %997 = vmatpush1.msra.mxu0 0.0
        %998 = vmatprep.subr.mxu0 0.0
        %999 = vmatpush1.msra.mxu0 0.0
        %1000 = vmatprep.subr.mxu0 0.0
        %1001 = vmatpush1.msra.mxu0 0.0
        %1002 = vmatprep.subr.mxu0 0.0
        %1003 = vmatpush1.msra.mxu0 0.0
        %1004 = vmatprep.subr.mxu0 0.0
        %1005 = vmatpush1.msra.mxu0 0.0
        %1006 = vmatprep.mubr.f32.mxu0 0.0
        %1007 = vmatmul.mubr.f32.gmra.mrb[0].mxu0 %v889
        %v1008 = vpop.f32.mrb[0].mxu0
        %v1009 = vadd.f32 0.0, %v1008
        %v1010 = vpop.f32.mrb[0].mxu0
        %1011 = vmatprep.mubr.f32.mxu0 0.0
        %1012 = vmatmul.mubr.f32.gmra.mrb[0].mxu0 %v890
        %v1013 = vpop.f32.mrb[0].mxu0
        %v1014 = vadd.f32 0.0, %v1013
        %v1015 = vpop.f32.mrb[0].mxu0
        %1016 = vmatprep.mubr.f32.mxu0 0.0
        %1017 = vmatmul.mubr.f32.gmra.mrb[0].mxu0 %v891
        %v1018 = vpop.f32.mrb[0].mxu0
        %v1019 = vadd.f32 0.0, %v1018
        %v1020 = vpop.f32.mrb[0].mxu0
        %1021 = vmatprep.mubr.f32.mxu0 0.0
        %1022 = vmatmul.mubr.f32.gmra.mrb[0].mxu0 %v892
        %v1023 = vpop.f32.mrb[0].mxu0
        %v1024 = vadd.f32 0.0, %v1023
        %v1025 = vpop.f32.mrb[0].mxu0
        %1026 = vmatprep.mubr.f32.mxu0 0.0
        %1027 = vmatmul.mubr.f32.gmra.mrb[0].mxu0 %v893
        %v1028 = vpop.f32.mrb[0].mxu0
        %v1029 = vadd.f32 0.0, %v1028
        %v1030 = vpop.f32.mrb[0].mxu0
        %1031 = vmatprep.mubr.f32.mxu0 0.0
        %1032 = vmatmul.mubr.f32.gmra.mrb[0].mxu0 %v894
        %v1033 = vpop.f32.mrb[0].mxu0
        %v1034 = vadd.f32 0.0, %v1033
        %v1035 = vpop.f32.mrb[0].mxu0
        %1036 = vmatprep.mubr.f32.mxu0 0.0
        %1037 = vmatmul.mubr.f32.gmra.mrb[0].mxu0 %v895
        %v1038 = vpop.f32.mrb[0].mxu0
        %v1039 = vadd.f32 0.0, %v1038
        %v1040 = vpop.f32.mrb[0].mxu0
        %1041 = vmatprep.mubr.f32.mxu0 0.0
        %1042 = vmatmul.mubr.f32.gmra.mrb[0].mxu0 %v896
        %v1043 = vpop.f32.mrb[0].mxu0
        %v1044 = vadd.f32 0.0, %v1043
        %v1045 = vpop.f32.mrb[0].mxu0
        %1046 = vmatprep.mubr.f32.mxu0 0.0
        %1047 = vmatmul.mubr.f32.gmra.mrb[0].mxu0 %v897
        %v1048 = vpop.f32.mrb[0].mxu0
        %v1049 = vadd.f32 0.0, %v1048
        %v1050 = vpop.f32.mrb[0].mxu0
        %1051 = vmatprep.mubr.f32.mxu0 0.0
        %1052 = vmatmul.mubr.f32.gmra.mrb[0].mxu0 %v898
        %v1053 = vpop.f32.mrb[0].mxu0
        %v1054 = vadd.f32 0.0, %v1053
        %v1055 = vpop.f32.mrb[0].mxu0
        %1056 = vmatprep.mubr.f32.mxu0 0.0
        %1057 = vmatmul.mubr.f32.gmra.mrb[0].mxu0 %v899
        %v1058 = vpop.f32.mrb[0].mxu0
        %v1059 = vadd.f32 0.0, %v1058
        %v1060 = vpop.f32.mrb[0].mxu0
        %1061 = vmatprep.mubr.f32.mxu0 0.0
        %1062 = vmatmul.mubr.f32.gmra.mrb[0].mxu0 %v900
        %v1063 = vpop.f32.mrb[0].mxu0
        %v1064 = vadd.f32 0.0, %v1063
        %v1065 = vpop.f32.mrb[0].mxu0
        %1066 = vmatprep.mubr.f32.mxu0 0.0
        %1067 = vmatmul.mubr.f32.gmra.mrb[0].mxu0 %v901
        %v1068 = vpop.f32.mrb[0].mxu0
        %v1069 = vadd.f32 0.0, %v1068
        %v1070 = vpop.f32.mrb[0].mxu0
        %1071 = vmatprep.mubr.f32.mxu0 0.0
        %1072 = vmatmul.mubr.f32.gmra.mrb[0].mxu0 %v902
        %v1073 = vpop.f32.mrb[0].mxu0
        %v1074 = vadd.f32 0.0, %v1073
        %v1075 = vpop.f32.mrb[0].mxu0
        %1076 = vmatprep.mubr.f32.mxu0 0.0
        %1077 = vmatmul.mubr.f32.gmra.mrb[0].mxu0 %v903
        %v1078 = vpop.f32.mrb[0].mxu0
        %v1079 = vadd.f32 0.0, %v1078
        %v1080 = vpop.f32.mrb[0].mxu0
        %1081 = vmatprep.mubr.f32.mxu0 0.0
        %1082 = vmatmul.mubr.f32.gmra.mrb[0].mxu0 %v904
        %v1083 = vpop.f32.mrb[0].mxu0
        %v1084 = vadd.f32 0.0, %v1083
        %v1085 = vpop.f32.mrb[0].mxu0
        %1086 = vmatprep.mubr.f32.mxu0 0.0
        %1087 = vmatmul.mubr.f32.gmra.mrb[0].mxu0 %v905
        %v1088 = vpop.f32.mrb[0].mxu0
        %v1089 = vadd.f32 0.0, %v1088
        %v1090 = vpop.f32.mrb[0].mxu0
        %1091 = vmatprep.mubr.f32.mxu0 0.0
        %1092 = vmatmul.mubr.f32.gmra.mrb[0].mxu0 %v906
        %v1093 = vpop.f32.mrb[0].mxu0
        %v1094 = vadd.f32 0.0, %v1093
        %v1095 = vpop.f32.mrb[0].mxu0
        %1096 = vmatprep.mubr.f32.mxu0 0.0
        %1097 = vmatmul.mubr.f32.gmra.mrb[0].mxu0 %v907
        %v1098 = vpop.f32.mrb[0].mxu0
        %v1099 = vadd.f32 0.0, %v1098
        %v1100 = vpop.f32.mrb[0].mxu0
        %1101 = vmatprep.mubr.f32.mxu0 0.0
        %1102 = vmatmul.mubr.f32.gmra.mrb[0].mxu0 %v908
        %v1103 = vpop.f32.mrb[0].mxu0
        %v1104 = vadd.f32 0.0, %v1103
        %v1105 = vpop.f32.mrb[0].mxu0
        %1106 = vmatprep.mubr.f32.mxu0 0.0
        %1107 = vmatmul.mubr.f32.gmra.mrb[0].mxu0 %v909
        %v1108 = vpop.f32.mrb[0].mxu0
        %v1109 = vadd.f32 0.0, %v1108
        %v1110 = vpop.f32.mrb[0].mxu0
        %1111 = vmatprep.mubr.f32.mxu0 0.0
        %1112 = vmatmul.mubr.f32.gmra.mrb[0].mxu0 %v910
        %v1113 = vpop.f32.mrb[0].mxu0
        %v1114 = vadd.f32 0.0, %v1113
        %v1115 = vpop.f32.mrb[0].mxu0
        %1116 = vmatprep.mubr.f32.mxu0 0.0
        %1117 = vmatmul.mubr.f32.gmra.mrb[0].mxu0 %v911
        %v1118 = vpop.f32.mrb[0].mxu0
        %v1119 = vadd.f32 0.0, %v1118
        %v1120 = vpop.f32.mrb[0].mxu0
        %1121 = vmatprep.mubr.f32.mxu0 0.0
        %1122 = vmatmul.mubr.f32.gmra.mrb[0].mxu0 %v912
        %v1123 = vpop.f32.mrb[0].mxu0
        %v1124 = vadd.f32 0.0, %v1123
        %v1125 = vpop.f32.mrb[0].mxu0
        %1126 = vmatprep.mubr.f32.mxu0 0.0
        %1127 = vmatmul.mubr.f32.gmra.mrb[0].mxu0 %v913
        %v1128 = vpop.f32.mrb[0].mxu0
        %v1129 = vadd.f32 0.0, %v1128
        %v1130 = vpop.f32.mrb[0].mxu0
        %1131 = vmatprep.mubr.f32.mxu0 0.0
        %1132 = vmatmul.mubr.f32.gmra.mrb[0].mxu0 %v914
        %v1133 = vpop.f32.mrb[0].mxu0
        %v1134 = vadd.f32 0.0, %v1133
        %v1135 = vpop.f32.mrb[0].mxu0
        %1136 = vmatprep.mubr.f32.mxu0 0.0
        %1137 = vmatmul.mubr.f32.gmra.mrb[0].mxu0 %v915
        %v1138 = vpop.f32.mrb[0].mxu0
        %v1139 = vadd.f32 0.0, %v1138
        %v1140 = vpop.f32.mrb[0].mxu0
        %1141 = vmatprep.mubr.f32.mxu0 0.0
        %1142 = vmatmul.mubr.f32.gmra.mrb[0].mxu0 %v916
        %v1143 = vpop.f32.mrb[0].mxu0
        %v1144 = vadd.f32 0.0, %v1143
        %v1145 = vpop.f32.mrb[0].mxu0
        %1146 = vmatprep.mubr.f32.mxu0 0.0
        %1147 = vmatmul.mubr.f32.gmra.mrb[0].mxu0 %v917
        %v1148 = vpop.f32.mrb[0].mxu0
        %v1149 = vadd.f32 0.0, %v1148
        %v1150 = vpop.f32.mrb[0].mxu0
        %1151 = vmatprep.mubr.f32.mxu0 0.0
        %1152 = vmatmul.mubr.f32.gmra.mrb[0].mxu0 %v918
        %v1153 = vpop.f32.mrb[0].mxu0
        %v1154 = vadd.f32 0.0, %v1153
        %v1155 = vpop.f32.mrb[0].mxu0
        %1156 = vmatprep.mubr.f32.mxu0 0.0
        %1157 = vmatmul.mubr.f32.gmra.mrb[0].mxu0 %v919
        %v1158 = vpop.f32.mrb[0].mxu0
        %v1159 = vadd.f32 0.0, %v1158
        %v1160 = vpop.f32.mrb[0].mxu0
        %1161 = vmatprep.mubr.f32.mxu0 0.0
        %1162 = vmatmul.mubr.f32.gmra.mrb[0].mxu0 %v920
        %v1163 = vpop.f32.mrb[0].mxu0
        %v1164 = vadd.f32 0.0, %v1163
        %v1165 = vpop.f32.mrb[0].mxu0
        %1166 = vmatprep.mubr.f32.mxu0 0.0
        %1167 = vmatmul.mubr.f32.gmra.mrb[0].mxu0 %v921
        %v1168 = vpop.f32.mrb[0].mxu0
        %v1169 = vadd.f32 0.0, %v1168
        %v1170 = vpop.f32.mrb[0].mxu0
        %1171 = vmatprep.mubr.f32.mxu0 0.0
        %1172 = vmatmul.mubr.f32.gmra.mrb[0].mxu0 %v922
        %v1173 = vpop.f32.mrb[0].mxu0
        %v1174 = vadd.f32 0.0, %v1173
        %v1175 = vpop.f32.mrb[0].mxu0
        %1176 = vmatprep.mubr.f32.mxu0 0.0
        %1177 = vmatmul.mubr.f32.gmra.mrb[0].mxu0 %v923
        %v1178 = vpop.f32.mrb[0].mxu0
        %v1179 = vadd.f32 0.0, %v1178
        %v1180 = vpop.f32.mrb[0].mxu0
        %1181 = vmatprep.mubr.f32.mxu0 0.0
        %1182 = vmatmul.mubr.f32.gmra.mrb[0].mxu0 %v924
        %v1183 = vpop.f32.mrb[0].mxu0
        %v1184 = vadd.f32 0.0, %v1183
        %v1185 = vpop.f32.mrb[0].mxu0
        %1186 = vdwg.mxu0
        %v1187 = vadd.f32 %v711, %v1009
        %v1188 = vadd.f32 %v716, %v1014
        %v1189 = vadd.f32 %v721, %v1019
        %v1190 = vadd.f32 %v726, %v1024
        %v1191 = vadd.f32 %v731, %v1029
        %v1192 = vadd.f32 %v736, %v1034
        %v1193 = vadd.f32 %v741, %v1039
        %v1194 = vadd.f32 %v746, %v1044
        %v1195 = vadd.f32 %v751, %v1049
        %v1196 = vadd.f32 %v756, %v1054
        %v1197 = vadd.f32 %v761, %v1059
        %v1198 = vadd.f32 %v766, %v1064
        %v1199 = vadd.f32 %v771, %v1069
        %v1200 = vadd.f32 %v776, %v1074
        %v1201 = vadd.f32 %v781, %v1079
        %v1202 = vadd.f32 %v786, %v1084
        %v1203 = vadd.f32 %v791, %v1089
        %v1204 = vadd.f32 %v796, %v1094
        %v1205 = vadd.f32 %v801, %v1099
        %v1206 = vadd.f32 %v806, %v1104
        %v1207 = vadd.f32 %v811, %v1109
        %v1208 = vadd.f32 %v816, %v1114
        %v1209 = vadd.f32 %v821, %v1119
        %v1210 = vadd.f32 %v826, %v1124
        %v1211 = vadd.f32 %v831, %v1129
        %v1212 = vadd.f32 %v836, %v1134
        %v1213 = vadd.f32 %v841, %v1139
        %v1214 = vadd.f32 %v846, %v1144
        %v1215 = vadd.f32 %v851, %v1149
        %v1216 = vadd.f32 %v856, %v1154
        %v1217 = vadd.f32 %v861, %v1159
        %v1218 = vadd.f32 %v866, %v1164
        %v1219 = vadd.f32 %v871, %v1169
        %v1220 = vadd.f32 %v876, %v1174
        %v1221 = vadd.f32 %v881, %v1179
        %v1222 = vadd.f32 %v886, %v1184
        %v1223 = vld [vmem:[%s220 + $0x12] sm:$0xff]
        %v1224 = vld [vmem:[%s220 + $0x1a] sm:$0xff]
        %v1225 = vld [vmem:[%s220 + $0x22] sm:$0xff]
        %v1226 = vld [vmem:[%s220 + $0x2a] sm:$0xff]
        %v1227 = vld [vmem:[%s220 + $0x32] sm:$0xff]
        %v1228 = vld [vmem:[%s220 + $0x3a] sm:$0xff]
        %v1229 = vld [vmem:[%s220 + $0x42] sm:$0xff]
        %v1230 = vld [vmem:[%s220 + $0x4a] sm:$0xff]
        %v1231 = vld [vmem:[%s220 + $0x52] sm:$0xff]
        %v1232 = vld [vmem:[%s220 + $0x5a] sm:$0xff]
        %v1233 = vld [vmem:[%s220 + $0x62] sm:$0xff]
        %v1234 = vld [vmem:[%s220 + $0x6a] sm:$0xff]
        %v1235 = vld [vmem:[%s220 + $0x72] sm:$0xff]
        %v1236 = vld [vmem:[%s220 + $0x7a] sm:$0xff]
        %v1237 = vld [vmem:[%s220 + $0x82] sm:$0xff]
        %v1238 = vld [vmem:[%s220 + $0x8a] sm:$0xff]
        %v1239 = vld [vmem:[%s220 + $0x92] sm:$0xff]
        %v1240 = vld [vmem:[%s220 + $0x9a] sm:$0xff]
        %v1241 = vld [vmem:[%s220 + $0xa2] sm:$0xff]
        %v1242 = vld [vmem:[%s220 + $0xaa] sm:$0xff]
        %v1243 = vld [vmem:[%s220 + $0xb2] sm:$0xff]
        %v1244 = vld [vmem:[%s220 + $0xba] sm:$0xff]
        %v1245 = vld [vmem:[%s220 + $0xc2] sm:$0xff]
        %v1246 = vld [vmem:[%s220 + $0xca] sm:$0xff]
        %v1247 = vld [vmem:[%s220 + $0xd2] sm:$0xff]
        %v1248 = vld [vmem:[%s220 + $0xda] sm:$0xff]
        %v1249 = vld [vmem:[%s220 + $0xe2] sm:$0xff]
        %v1250 = vld [vmem:[%s220 + $0xea] sm:$0xff]
        %v1251 = vld [vmem:[%s220 + $0xf2] sm:$0xff]
        %v1252 = vld [vmem:[%s220 + $0xfa] sm:$0xff]
        %v1253 = vld [vmem:[%s220 + $0x102] sm:$0xff]
        %v1254 = vld [vmem:[%s220 + $0x10a] sm:$0xff]
        %v1255 = vld [vmem:[%s220 + $0x112] sm:$0xff]
        %v1256 = vld [vmem:[%s220 + $0x11a] sm:$0xff]
        %v1257 = vld [vmem:[%s220 + $0x122] sm:$0xff]
        %v1258 = vld [vmem:[%s220 + $0x12a] sm:$0xff]
        %s1259 = scalar_lea.vmem [#allocation6], 384
        %v1260 = vld [vmem:[%s1259] sm:$0xff]
        %v1261 = vld [vmem:[%s1259 + $0x8] sm:$0xff]
        %v1262 = vld [vmem:[%s1259 + $0x10] sm:$0xff]
        %v1263 = vld [vmem:[%s1259 + $0x18] sm:$0xff]
        %v1264 = vld [vmem:[%s1259 + $0x20] sm:$0xff]
        %v1265 = vld [vmem:[%s1259 + $0x28] sm:$0xff]
        %v1266 = vld [vmem:[%s1259 + $0x30] sm:$0xff]
        %v1267 = vld [vmem:[%s1259 + $0x38] sm:$0xff]
        %v1268 = vld [vmem:[%s1259 + $0x40] sm:$0xff]
        %v1269 = vld [vmem:[%s1259 + $0x48] sm:$0xff]
        %v1270 = vld [vmem:[%s1259 + $0x50] sm:$0xff]
        %v1271 = vld [vmem:[%s1259 + $0x58] sm:$0xff]
        %v1272 = vld [vmem:[%s1259 + $0x60] sm:$0xff]
        %v1273 = vld [vmem:[%s1259 + $0x68] sm:$0xff]
        %v1274 = vld [vmem:[%s1259 + $0x70] sm:$0xff]
        %v1275 = vld [vmem:[%s1259 + $0x78] sm:$0xff]
        %1276 = vmatprep.subr.mxu0 0.0
        %1277 = vmatpush1.msra.mxu0 %v1260
        %1278 = vmatprep.subr.mxu0 0.0
        %1279 = vmatpush1.msra.mxu0 %v1261
        %1280 = vmatprep.subr.mxu0 0.0
        %1281 = vmatpush1.msra.mxu0 %v1262
        %1282 = vmatprep.subr.mxu0 0.0
        %1283 = vmatpush1.msra.mxu0 %v1263
        %1284 = vmatprep.subr.mxu0 0.0
        %1285 = vmatpush1.msra.mxu0 %v1264
        %1286 = vmatprep.subr.mxu0 0.0
        %1287 = vmatpush1.msra.mxu0 %v1265
        %1288 = vmatprep.subr.mxu0 0.0
        %1289 = vmatpush1.msra.mxu0 %v1266
        %1290 = vmatprep.subr.mxu0 0.0
        %1291 = vmatpush1.msra.mxu0 %v1267
        %1292 = vmatprep.subr.mxu0 0.0
        %1293 = vmatpush1.msra.mxu0 %v1268
        %1294 = vmatprep.subr.mxu0 0.0
        %1295 = vmatpush1.msra.mxu0 %v1269
        %1296 = vmatprep.subr.mxu0 0.0
        %1297 = vmatpush1.msra.mxu0 %v1270
        %1298 = vmatprep.subr.mxu0 0.0
        %1299 = vmatpush1.msra.mxu0 %v1271
        %1300 = vmatprep.subr.mxu0 0.0
        %1301 = vmatpush1.msra.mxu0 %v1272
        %1302 = vmatprep.subr.mxu0 0.0
        %1303 = vmatpush1.msra.mxu0 %v1273
        %1304 = vmatprep.subr.mxu0 0.0
        %1305 = vmatpush1.msra.mxu0 %v1274
        %1306 = vmatprep.subr.mxu0 0.0
        %1307 = vmatpush1.msra.mxu0 %v1275
        %1308 = vmatprep.subr.mxu0 0.0
        %1309 = vmatpush1.msra.mxu0 0.0
        %1310 = vmatprep.subr.mxu0 0.0
        %1311 = vmatpush1.msra.mxu0 0.0
        %1312 = vmatprep.subr.mxu0 0.0
        %1313 = vmatpush1.msra.mxu0 0.0
        %1314 = vmatprep.subr.mxu0 0.0
        %1315 = vmatpush1.msra.mxu0 0.0
        %1316 = vmatprep.subr.mxu0 0.0
        %1317 = vmatpush1.msra.mxu0 0.0
        %1318 = vmatprep.subr.mxu0 0.0
        %1319 = vmatpush1.msra.mxu0 0.0
        %1320 = vmatprep.subr.mxu0 0.0
        %1321 = vmatpush1.msra.mxu0 0.0
        %1322 = vmatprep.subr.mxu0 0.0
        %1323 = vmatpush1.msra.mxu0 0.0
        %1324 = vmatprep.subr.mxu0 0.0
        %1325 = vmatpush1.msra.mxu0 0.0
        %1326 = vmatprep.subr.mxu0 0.0
        %1327 = vmatpush1.msra.mxu0 0.0
        %1328 = vmatprep.subr.mxu0 0.0
        %1329 = vmatpush1.msra.mxu0 0.0
        %1330 = vmatprep.subr.mxu0 0.0
        %1331 = vmatpush1.msra.mxu0 0.0
        %1332 = vmatprep.subr.mxu0 0.0
        %1333 = vmatpush1.msra.mxu0 0.0
        %1334 = vmatprep.subr.mxu0 0.0
        %1335 = vmatpush1.msra.mxu0 0.0
        %1336 = vmatprep.subr.mxu0 0.0
        %1337 = vmatpush1.msra.mxu0 0.0
        %1338 = vmatprep.subr.mxu0 0.0
        %1339 = vmatpush1.msra.mxu0 0.0
        %1340 = vmatprep.mubr.f32.mxu0 0.0
        %1341 = vmatmul.mubr.f32.gmra.mrb[0].mxu0 %v1223
        %v1342 = vpop.f32.mrb[0].mxu0
        %v1343 = vadd.f32 0.0, %v1342
        %v1344 = vpop.f32.mrb[0].mxu0
        %1345 = vmatprep.mubr.f32.mxu0 0.0
        %1346 = vmatmul.mubr.f32.gmra.mrb[0].mxu0 %v1224
        %v1347 = vpop.f32.mrb[0].mxu0
        %v1348 = vadd.f32 0.0, %v1347
        %v1349 = vpop.f32.mrb[0].mxu0
        %1350 = vmatprep.mubr.f32.mxu0 0.0
        %1351 = vmatmul.mubr.f32.gmra.mrb[0].mxu0 %v1225
        %v1352 = vpop.f32.mrb[0].mxu0
        %v1353 = vadd.f32 0.0, %v1352
        %v1354 = vpop.f32.mrb[0].mxu0
        %1355 = vmatprep.mubr.f32.mxu0 0.0
        %1356 = vmatmul.mubr.f32.gmra.mrb[0].mxu0 %v1226
        %v1357 = vpop.f32.mrb[0].mxu0
        %v1358 = vadd.f32 0.0, %v1357
        %v1359 = vpop.f32.mrb[0].mxu0
        %1360 = vmatprep.mubr.f32.mxu0 0.0
        %1361 = vmatmul.mubr.f32.gmra.mrb[0].mxu0 %v1227
        %v1362 = vpop.f32.mrb[0].mxu0
        %v1363 = vadd.f32 0.0, %v1362
        %v1364 = vpop.f32.mrb[0].mxu0
        %1365 = vmatprep.mubr.f32.mxu0 0.0
        %1366 = vmatmul.mubr.f32.gmra.mrb[0].mxu0 %v1228
        %v1367 = vpop.f32.mrb[0].mxu0
        %v1368 = vadd.f32 0.0, %v1367
        %v1369 = vpop.f32.mrb[0].mxu0
        %1370 = vmatprep.mubr.f32.mxu0 0.0
        %1371 = vmatmul.mubr.f32.gmra.mrb[0].mxu0 %v1229
        %v1372 = vpop.f32.mrb[0].mxu0
        %v1373 = vadd.f32 0.0, %v1372
        %v1374 = vpop.f32.mrb[0].mxu0
        %1375 = vmatprep.mubr.f32.mxu0 0.0
        %1376 = vmatmul.mubr.f32.gmra.mrb[0].mxu0 %v1230
        %v1377 = vpop.f32.mrb[0].mxu0
        %v1378 = vadd.f32 0.0, %v1377
        %v1379 = vpop.f32.mrb[0].mxu0
        %1380 = vmatprep.mubr.f32.mxu0 0.0
        %1381 = vmatmul.mubr.f32.gmra.mrb[0].mxu0 %v1231
        %v1382 = vpop.f32.mrb[0].mxu0
        %v1383 = vadd.f32 0.0, %v1382
        %v1384 = vpop.f32.mrb[0].mxu0
        %1385 = vmatprep.mubr.f32.mxu0 0.0
        %1386 = vmatmul.mubr.f32.gmra.mrb[0].mxu0 %v1232
        %v1387 = vpop.f32.mrb[0].mxu0
        %v1388 = vadd.f32 0.0, %v1387
        %v1389 = vpop.f32.mrb[0].mxu0
        %1390 = vmatprep.mubr.f32.mxu0 0.0
        %1391 = vmatmul.mubr.f32.gmra.mrb[0].mxu0 %v1233
        %v1392 = vpop.f32.mrb[0].mxu0
        %v1393 = vadd.f32 0.0, %v1392
        %v1394 = vpop.f32.mrb[0].mxu0
        %1395 = vmatprep.mubr.f32.mxu0 0.0
        %1396 = vmatmul.mubr.f32.gmra.mrb[0].mxu0 %v1234
        %v1397 = vpop.f32.mrb[0].mxu0
        %v1398 = vadd.f32 0.0, %v1397
        %v1399 = vpop.f32.mrb[0].mxu0
        %1400 = vmatprep.mubr.f32.mxu0 0.0
        %1401 = vmatmul.mubr.f32.gmra.mrb[0].mxu0 %v1235
        %v1402 = vpop.f32.mrb[0].mxu0
        %v1403 = vadd.f32 0.0, %v1402
        %v1404 = vpop.f32.mrb[0].mxu0
        %1405 = vmatprep.mubr.f32.mxu0 0.0
        %1406 = vmatmul.mubr.f32.gmra.mrb[0].mxu0 %v1236
        %v1407 = vpop.f32.mrb[0].mxu0
        %v1408 = vadd.f32 0.0, %v1407
        %v1409 = vpop.f32.mrb[0].mxu0
        %1410 = vmatprep.mubr.f32.mxu0 0.0
        %1411 = vmatmul.mubr.f32.gmra.mrb[0].mxu0 %v1237
        %v1412 = vpop.f32.mrb[0].mxu0
        %v1413 = vadd.f32 0.0, %v1412
        %v1414 = vpop.f32.mrb[0].mxu0
        %1415 = vmatprep.mubr.f32.mxu0 0.0
        %1416 = vmatmul.mubr.f32.gmra.mrb[0].mxu0 %v1238
        %v1417 = vpop.f32.mrb[0].mxu0
        %v1418 = vadd.f32 0.0, %v1417
        %v1419 = vpop.f32.mrb[0].mxu0
        %1420 = vmatprep.mubr.f32.mxu0 0.0
        %1421 = vmatmul.mubr.f32.gmra.mrb[0].mxu0 %v1239
        %v1422 = vpop.f32.mrb[0].mxu0
        %v1423 = vadd.f32 0.0, %v1422
        %v1424 = vpop.f32.mrb[0].mxu0
        %1425 = vmatprep.mubr.f32.mxu0 0.0
        %1426 = vmatmul.mubr.f32.gmra.mrb[0].mxu0 %v1240
        %v1427 = vpop.f32.mrb[0].mxu0
        %v1428 = vadd.f32 0.0, %v1427
        %v1429 = vpop.f32.mrb[0].mxu0
        %1430 = vmatprep.mubr.f32.mxu0 0.0
        %1431 = vmatmul.mubr.f32.gmra.mrb[0].mxu0 %v1241
        %v1432 = vpop.f32.mrb[0].mxu0
        %v1433 = vadd.f32 0.0, %v1432
        %v1434 = vpop.f32.mrb[0].mxu0
        %1435 = vmatprep.mubr.f32.mxu0 0.0
        %1436 = vmatmul.mubr.f32.gmra.mrb[0].mxu0 %v1242
        %v1437 = vpop.f32.mrb[0].mxu0
        %v1438 = vadd.f32 0.0, %v1437
        %v1439 = vpop.f32.mrb[0].mxu0
        %1440 = vmatprep.mubr.f32.mxu0 0.0
        %1441 = vmatmul.mubr.f32.gmra.mrb[0].mxu0 %v1243
        %v1442 = vpop.f32.mrb[0].mxu0
        %v1443 = vadd.f32 0.0, %v1442
        %v1444 = vpop.f32.mrb[0].mxu0
        %1445 = vmatprep.mubr.f32.mxu0 0.0
        %1446 = vmatmul.mubr.f32.gmra.mrb[0].mxu0 %v1244
        %v1447 = vpop.f32.mrb[0].mxu0
        %v1448 = vadd.f32 0.0, %v1447
        %v1449 = vpop.f32.mrb[0].mxu0
        %1450 = vmatprep.mubr.f32.mxu0 0.0
        %1451 = vmatmul.mubr.f32.gmra.mrb[0].mxu0 %v1245
        %v1452 = vpop.f32.mrb[0].mxu0
        %v1453 = vadd.f32 0.0, %v1452
        %v1454 = vpop.f32.mrb[0].mxu0
        %1455 = vmatprep.mubr.f32.mxu0 0.0
        %1456 = vmatmul.mubr.f32.gmra.mrb[0].mxu0 %v1246
        %v1457 = vpop.f32.mrb[0].mxu0
        %v1458 = vadd.f32 0.0, %v1457
        %v1459 = vpop.f32.mrb[0].mxu0
        %1460 = vmatprep.mubr.f32.mxu0 0.0
        %1461 = vmatmul.mubr.f32.gmra.mrb[0].mxu0 %v1247
        %v1462 = vpop.f32.mrb[0].mxu0
        %v1463 = vadd.f32 0.0, %v1462
        %v1464 = vpop.f32.mrb[0].mxu0
        %1465 = vmatprep.mubr.f32.mxu0 0.0
        %1466 = vmatmul.mubr.f32.gmra.mrb[0].mxu0 %v1248
        %v1467 = vpop.f32.mrb[0].mxu0
        %v1468 = vadd.f32 0.0, %v1467
        %v1469 = vpop.f32.mrb[0].mxu0
        %1470 = vmatprep.mubr.f32.mxu0 0.0
        %1471 = vmatmul.mubr.f32.gmra.mrb[0].mxu0 %v1249
        %v1472 = vpop.f32.mrb[0].mxu0
        %v1473 = vadd.f32 0.0, %v1472
        %v1474 = vpop.f32.mrb[0].mxu0
        %1475 = vmatprep.mubr.f32.mxu0 0.0
        %1476 = vmatmul.mubr.f32.gmra.mrb[0].mxu0 %v1250
        %v1477 = vpop.f32.mrb[0].mxu0
        %v1478 = vadd.f32 0.0, %v1477
        %v1479 = vpop.f32.mrb[0].mxu0
        %1480 = vmatprep.mubr.f32.mxu0 0.0
        %1481 = vmatmul.mubr.f32.gmra.mrb[0].mxu0 %v1251
        %v1482 = vpop.f32.mrb[0].mxu0
        %v1483 = vadd.f32 0.0, %v1482
        %v1484 = vpop.f32.mrb[0].mxu0
        %1485 = vmatprep.mubr.f32.mxu0 0.0
        %1486 = vmatmul.mubr.f32.gmra.mrb[0].mxu0 %v1252
        %v1487 = vpop.f32.mrb[0].mxu0
        %v1488 = vadd.f32 0.0, %v1487
        %v1489 = vpop.f32.mrb[0].mxu0
        %1490 = vmatprep.mubr.f32.mxu0 0.0
        %1491 = vmatmul.mubr.f32.gmra.mrb[0].mxu0 %v1253
        %v1492 = vpop.f32.mrb[0].mxu0
        %v1493 = vadd.f32 0.0, %v1492
        %v1494 = vpop.f32.mrb[0].mxu0
        %1495 = vmatprep.mubr.f32.mxu0 0.0
        %1496 = vmatmul.mubr.f32.gmra.mrb[0].mxu0 %v1254
        %v1497 = vpop.f32.mrb[0].mxu0
        %v1498 = vadd.f32 0.0, %v1497
        %v1499 = vpop.f32.mrb[0].mxu0
        %1500 = vmatprep.mubr.f32.mxu0 0.0
        %1501 = vmatmul.mubr.f32.gmra.mrb[0].mxu0 %v1255
        %v1502 = vpop.f32.mrb[0].mxu0
        %v1503 = vadd.f32 0.0, %v1502
        %v1504 = vpop.f32.mrb[0].mxu0
        %1505 = vmatprep.mubr.f32.mxu0 0.0
        %1506 = vmatmul.mubr.f32.gmra.mrb[0].mxu0 %v1256
        %v1507 = vpop.f32.mrb[0].mxu0
        %v1508 = vadd.f32 0.0, %v1507
        %v1509 = vpop.f32.mrb[0].mxu0
        %1510 = vmatprep.mubr.f32.mxu0 0.0
        %1511 = vmatmul.mubr.f32.gmra.mrb[0].mxu0 %v1257
        %v1512 = vpop.f32.mrb[0].mxu0
        %v1513 = vadd.f32 0.0, %v1512
        %v1514 = vpop.f32.mrb[0].mxu0
        %1515 = vmatprep.mubr.f32.mxu0 0.0
        %1516 = vmatmul.mubr.f32.gmra.mrb[0].mxu0 %v1258
        %v1517 = vpop.f32.mrb[0].mxu0
        %v1518 = vadd.f32 0.0, %v1517
        %v1519 = vpop.f32.mrb[0].mxu0
        %1520 = vdwg.mxu0
        %v1521 = vadd.f32 %v1187, %v1343
        %v1522 = vadd.f32 %v1188, %v1348
        %v1523 = vadd.f32 %v1189, %v1353
        %v1524 = vadd.f32 %v1190, %v1358
        %v1525 = vadd.f32 %v1191, %v1363
        %v1526 = vadd.f32 %v1192, %v1368
        %v1527 = vadd.f32 %v1193, %v1373
        %v1528 = vadd.f32 %v1194, %v1378
        %v1529 = vadd.f32 %v1195, %v1383
        %v1530 = vadd.f32 %v1196, %v1388
        %v1531 = vadd.f32 %v1197, %v1393
        %v1532 = vadd.f32 %v1198, %v1398
        %v1533 = vadd.f32 %v1199, %v1403
        %v1534 = vadd.f32 %v1200, %v1408
        %v1535 = vadd.f32 %v1201, %v1413
        %v1536 = vadd.f32 %v1202, %v1418
        %v1537 = vadd.f32 %v1203, %v1423
        %v1538 = vadd.f32 %v1204, %v1428
        %v1539 = vadd.f32 %v1205, %v1433
        %v1540 = vadd.f32 %v1206, %v1438
        %v1541 = vadd.f32 %v1207, %v1443
        %v1542 = vadd.f32 %v1208, %v1448
        %v1543 = vadd.f32 %v1209, %v1453
        %v1544 = vadd.f32 %v1210, %v1458
        %v1545 = vadd.f32 %v1211, %v1463
        %v1546 = vadd.f32 %v1212, %v1468
        %v1547 = vadd.f32 %v1213, %v1473
        %v1548 = vadd.f32 %v1214, %v1478
        %v1549 = vadd.f32 %v1215, %v1483
        %v1550 = vadd.f32 %v1216, %v1488
        %v1551 = vadd.f32 %v1217, %v1493
        %v1552 = vadd.f32 %v1218, %v1498
        %v1553 = vadd.f32 %v1219, %v1503
        %v1554 = vadd.f32 %v1220, %v1508
        %v1555 = vadd.f32 %v1221, %v1513
        %v1556 = vadd.f32 %v1222, %v1518
        %v1557 = vld [vmem:[%s220 + $0x13] sm:$0xff]
        %v1558 = vld [vmem:[%s220 + $0x1b] sm:$0xff]
        %v1559 = vld [vmem:[%s220 + $0x23] sm:$0xff]
        %v1560 = vld [vmem:[%s220 + $0x2b] sm:$0xff]
        %v1561 = vld [vmem:[%s220 + $0x33] sm:$0xff]
        %v1562 = vld [vmem:[%s220 + $0x3b] sm:$0xff]
        %v1563 = vld [vmem:[%s220 + $0x43] sm:$0xff]
        %v1564 = vld [vmem:[%s220 + $0x4b] sm:$0xff]
        %v1565 = vld [vmem:[%s220 + $0x53] sm:$0xff]
        %v1566 = vld [vmem:[%s220 + $0x5b] sm:$0xff]
        %v1567 = vld [vmem:[%s220 + $0x63] sm:$0xff]
        %v1568 = vld [vmem:[%s220 + $0x6b] sm:$0xff]
        %v1569 = vld [vmem:[%s220 + $0x73] sm:$0xff]
        %v1570 = vld [vmem:[%s220 + $0x7b] sm:$0xff]
        %v1571 = vld [vmem:[%s220 + $0x83] sm:$0xff]
        %v1572 = vld [vmem:[%s220 + $0x8b] sm:$0xff]
        %v1573 = vld [vmem:[%s220 + $0x93] sm:$0xff]
        %v1574 = vld [vmem:[%s220 + $0x9b] sm:$0xff]
        %v1575 = vld [vmem:[%s220 + $0xa3] sm:$0xff]
        %v1576 = vld [vmem:[%s220 + $0xab] sm:$0xff]
        %v1577 = vld [vmem:[%s220 + $0xb3] sm:$0xff]
        %v1578 = vld [vmem:[%s220 + $0xbb] sm:$0xff]
        %v1579 = vld [vmem:[%s220 + $0xc3] sm:$0xff]
        %v1580 = vld [vmem:[%s220 + $0xcb] sm:$0xff]
        %v1581 = vld [vmem:[%s220 + $0xd3] sm:$0xff]
        %v1582 = vld [vmem:[%s220 + $0xdb] sm:$0xff]
        %v1583 = vld [vmem:[%s220 + $0xe3] sm:$0xff]
        %v1584 = vld [vmem:[%s220 + $0xeb] sm:$0xff]
        %v1585 = vld [vmem:[%s220 + $0xf3] sm:$0xff]
        %v1586 = vld [vmem:[%s220 + $0xfb] sm:$0xff]
        %v1587 = vld [vmem:[%s220 + $0x103] sm:$0xff]
        %v1588 = vld [vmem:[%s220 + $0x10b] sm:$0xff]
        %v1589 = vld [vmem:[%s220 + $0x113] sm:$0xff]
        %v1590 = vld [vmem:[%s220 + $0x11b] sm:$0xff]
        %v1591 = vld [vmem:[%s220 + $0x123] sm:$0xff]
        %v1592 = vld [vmem:[%s220 + $0x12b] sm:$0xff]
        %s1593 = scalar_lea.vmem [#allocation6], 512
        %v1594 = vld [vmem:[%s1593] sm:$0xff]
        %v1595 = vld [vmem:[%s1593 + $0x8] sm:$0xff]
        %v1596 = vld [vmem:[%s1593 + $0x10] sm:$0xff]
        %v1597 = vld [vmem:[%s1593 + $0x18] sm:$0xff]
        %v1598 = vld [vmem:[%s1593 + $0x20] sm:$0xff]
        %v1599 = vld [vmem:[%s1593 + $0x28] sm:$0xff]
        %v1600 = vld [vmem:[%s1593 + $0x30] sm:$0xff]
        %v1601 = vld [vmem:[%s1593 + $0x38] sm:$0xff]
        %v1602 = vld [vmem:[%s1593 + $0x40] sm:$0xff]
        %v1603 = vld [vmem:[%s1593 + $0x48] sm:$0xff]
        %v1604 = vld [vmem:[%s1593 + $0x50] sm:$0xff]
        %v1605 = vld [vmem:[%s1593 + $0x58] sm:$0xff]
        %v1606 = vld [vmem:[%s1593 + $0x60] sm:$0xff]
        %v1607 = vld [vmem:[%s1593 + $0x68] sm:$0xff]
        %v1608 = vld [vmem:[%s1593 + $0x70] sm:$0xff]
        %v1609 = vld [vmem:[%s1593 + $0x78] sm:$0xff]
        %1610 = vmatprep.subr.mxu0 0.0
        %1611 = vmatpush1.msra.mxu0 %v1594
        %1612 = vmatprep.subr.mxu0 0.0
        %1613 = vmatpush1.msra.mxu0 %v1595
        %1614 = vmatprep.subr.mxu0 0.0
        %1615 = vmatpush1.msra.mxu0 %v1596
        %1616 = vmatprep.subr.mxu0 0.0
        %1617 = vmatpush1.msra.mxu0 %v1597
        %1618 = vmatprep.subr.mxu0 0.0
        %1619 = vmatpush1.msra.mxu0 %v1598
        %1620 = vmatprep.subr.mxu0 0.0
        %1621 = vmatpush1.msra.mxu0 %v1599
        %1622 = vmatprep.subr.mxu0 0.0
        %1623 = vmatpush1.msra.mxu0 %v1600
        %1624 = vmatprep.subr.mxu0 0.0
        %1625 = vmatpush1.msra.mxu0 %v1601
        %1626 = vmatprep.subr.mxu0 0.0
        %1627 = vmatpush1.msra.mxu0 %v1602
        %1628 = vmatprep.subr.mxu0 0.0
        %1629 = vmatpush1.msra.mxu0 %v1603
        %1630 = vmatprep.subr.mxu0 0.0
        %1631 = vmatpush1.msra.mxu0 %v1604
        %1632 = vmatprep.subr.mxu0 0.0
        %1633 = vmatpush1.msra.mxu0 %v1605
        %1634 = vmatprep.subr.mxu0 0.0
        %1635 = vmatpush1.msra.mxu0 %v1606
        %1636 = vmatprep.subr.mxu0 0.0
        %1637 = vmatpush1.msra.mxu0 %v1607
        %1638 = vmatprep.subr.mxu0 0.0
        %1639 = vmatpush1.msra.mxu0 %v1608
        %1640 = vmatprep.subr.mxu0 0.0
        %1641 = vmatpush1.msra.mxu0 %v1609
        %1642 = vmatprep.subr.mxu0 0.0
        %1643 = vmatpush1.msra.mxu0 0.0
        %1644 = vmatprep.subr.mxu0 0.0
        %1645 = vmatpush1.msra.mxu0 0.0
        %1646 = vmatprep.subr.mxu0 0.0
        %1647 = vmatpush1.msra.mxu0 0.0
        %1648 = vmatprep.subr.mxu0 0.0
        %1649 = vmatpush1.msra.mxu0 0.0
        %1650 = vmatprep.subr.mxu0 0.0
        %1651 = vmatpush1.msra.mxu0 0.0
        %1652 = vmatprep.subr.mxu0 0.0
        %1653 = vmatpush1.msra.mxu0 0.0
        %1654 = vmatprep.subr.mxu0 0.0
        %1655 = vmatpush1.msra.mxu0 0.0
        %1656 = vmatprep.subr.mxu0 0.0
        %1657 = vmatpush1.msra.mxu0 0.0
        %1658 = vmatprep.subr.mxu0 0.0
        %1659 = vmatpush1.msra.mxu0 0.0
        %1660 = vmatprep.subr.mxu0 0.0
        %1661 = vmatpush1.msra.mxu0 0.0
        %1662 = vmatprep.subr.mxu0 0.0
        %1663 = vmatpush1.msra.mxu0 0.0
        %1664 = vmatprep.subr.mxu0 0.0
        %1665 = vmatpush1.msra.mxu0 0.0
        %1666 = vmatprep.subr.mxu0 0.0
        %1667 = vmatpush1.msra.mxu0 0.0
        %1668 = vmatprep.subr.mxu0 0.0
        %1669 = vmatpush1.msra.mxu0 0.0
        %1670 = vmatprep.subr.mxu0 0.0
        %1671 = vmatpush1.msra.mxu0 0.0
        %1672 = vmatprep.subr.mxu0 0.0
        %1673 = vmatpush1.msra.mxu0 0.0
        %1674 = vmatprep.mubr.f32.mxu0 0.0
        %1675 = vmatmul.mubr.f32.gmra.mrb[0].mxu0 %v1557
        %v1676 = vpop.f32.mrb[0].mxu0
        %v1677 = vadd.f32 0.0, %v1676
        %v1678 = vpop.f32.mrb[0].mxu0
        %1679 = vmatprep.mubr.f32.mxu0 0.0
        %1680 = vmatmul.mubr.f32.gmra.mrb[0].mxu0 %v1558
        %v1681 = vpop.f32.mrb[0].mxu0
        %v1682 = vadd.f32 0.0, %v1681
        %v1683 = vpop.f32.mrb[0].mxu0
        %1684 = vmatprep.mubr.f32.mxu0 0.0
        %1685 = vmatmul.mubr.f32.gmra.mrb[0].mxu0 %v1559
        %v1686 = vpop.f32.mrb[0].mxu0
        %v1687 = vadd.f32 0.0, %v1686
        %v1688 = vpop.f32.mrb[0].mxu0
        %1689 = vmatprep.mubr.f32.mxu0 0.0
        %1690 = vmatmul.mubr.f32.gmra.mrb[0].mxu0 %v1560
        %v1691 = vpop.f32.mrb[0].mxu0
        %v1692 = vadd.f32 0.0, %v1691
        %v1693 = vpop.f32.mrb[0].mxu0
        %1694 = vmatprep.mubr.f32.mxu0 0.0
        %1695 = vmatmul.mubr.f32.gmra.mrb[0].mxu0 %v1561
        %v1696 = vpop.f32.mrb[0].mxu0
        %v1697 = vadd.f32 0.0, %v1696
        %v1698 = vpop.f32.mrb[0].mxu0
        %1699 = vmatprep.mubr.f32.mxu0 0.0
        %1700 = vmatmul.mubr.f32.gmra.mrb[0].mxu0 %v1562
        %v1701 = vpop.f32.mrb[0].mxu0
        %v1702 = vadd.f32 0.0, %v1701
        %v1703 = vpop.f32.mrb[0].mxu0
        %1704 = vmatprep.mubr.f32.mxu0 0.0
        %1705 = vmatmul.mubr.f32.gmra.mrb[0].mxu0 %v1563
        %v1706 = vpop.f32.mrb[0].mxu0
        %v1707 = vadd.f32 0.0, %v1706
        %v1708 = vpop.f32.mrb[0].mxu0
        %1709 = vmatprep.mubr.f32.mxu0 0.0
        %1710 = vmatmul.mubr.f32.gmra.mrb[0].mxu0 %v1564
        %v1711 = vpop.f32.mrb[0].mxu0
        %v1712 = vadd.f32 0.0, %v1711
        %v1713 = vpop.f32.mrb[0].mxu0
        %1714 = vmatprep.mubr.f32.mxu0 0.0
        %1715 = vmatmul.mubr.f32.gmra.mrb[0].mxu0 %v1565
        %v1716 = vpop.f32.mrb[0].mxu0
        %v1717 = vadd.f32 0.0, %v1716
        %v1718 = vpop.f32.mrb[0].mxu0
        %1719 = vmatprep.mubr.f32.mxu0 0.0
        %1720 = vmatmul.mubr.f32.gmra.mrb[0].mxu0 %v1566
        %v1721 = vpop.f32.mrb[0].mxu0
        %v1722 = vadd.f32 0.0, %v1721
        %v1723 = vpop.f32.mrb[0].mxu0
        %1724 = vmatprep.mubr.f32.mxu0 0.0
        %1725 = vmatmul.mubr.f32.gmra.mrb[0].mxu0 %v1567
        %v1726 = vpop.f32.mrb[0].mxu0
        %v1727 = vadd.f32 0.0, %v1726
        %v1728 = vpop.f32.mrb[0].mxu0
        %1729 = vmatprep.mubr.f32.mxu0 0.0
        %1730 = vmatmul.mubr.f32.gmra.mrb[0].mxu0 %v1568
        %v1731 = vpop.f32.mrb[0].mxu0
        %v1732 = vadd.f32 0.0, %v1731
        %v1733 = vpop.f32.mrb[0].mxu0
        %1734 = vmatprep.mubr.f32.mxu0 0.0
        %1735 = vmatmul.mubr.f32.gmra.mrb[0].mxu0 %v1569
        %v1736 = vpop.f32.mrb[0].mxu0
        %v1737 = vadd.f32 0.0, %v1736
        %v1738 = vpop.f32.mrb[0].mxu0
        %1739 = vmatprep.mubr.f32.mxu0 0.0
        %1740 = vmatmul.mubr.f32.gmra.mrb[0].mxu0 %v1570
        %v1741 = vpop.f32.mrb[0].mxu0
        %v1742 = vadd.f32 0.0, %v1741
        %v1743 = vpop.f32.mrb[0].mxu0
        %1744 = vmatprep.mubr.f32.mxu0 0.0
        %1745 = vmatmul.mubr.f32.gmra.mrb[0].mxu0 %v1571
        %v1746 = vpop.f32.mrb[0].mxu0
        %v1747 = vadd.f32 0.0, %v1746
        %v1748 = vpop.f32.mrb[0].mxu0
        %1749 = vmatprep.mubr.f32.mxu0 0.0
        %1750 = vmatmul.mubr.f32.gmra.mrb[0].mxu0 %v1572
        %v1751 = vpop.f32.mrb[0].mxu0
        %v1752 = vadd.f32 0.0, %v1751
        %v1753 = vpop.f32.mrb[0].mxu0
        %1754 = vmatprep.mubr.f32.mxu0 0.0
        %1755 = vmatmul.mubr.f32.gmra.mrb[0].mxu0 %v1573
        %v1756 = vpop.f32.mrb[0].mxu0
        %v1757 = vadd.f32 0.0, %v1756
        %v1758 = vpop.f32.mrb[0].mxu0
        %1759 = vmatprep.mubr.f32.mxu0 0.0
        %1760 = vmatmul.mubr.f32.gmra.mrb[0].mxu0 %v1574
        %v1761 = vpop.f32.mrb[0].mxu0
        %v1762 = vadd.f32 0.0, %v1761
        %v1763 = vpop.f32.mrb[0].mxu0
        %1764 = vmatprep.mubr.f32.mxu0 0.0
        %1765 = vmatmul.mubr.f32.gmra.mrb[0].mxu0 %v1575
        %v1766 = vpop.f32.mrb[0].mxu0
        %v1767 = vadd.f32 0.0, %v1766
        %v1768 = vpop.f32.mrb[0].mxu0
        %1769 = vmatprep.mubr.f32.mxu0 0.0
        %1770 = vmatmul.mubr.f32.gmra.mrb[0].mxu0 %v1576
        %v1771 = vpop.f32.mrb[0].mxu0
        %v1772 = vadd.f32 0.0, %v1771
        %v1773 = vpop.f32.mrb[0].mxu0
        %1774 = vmatprep.mubr.f32.mxu0 0.0
        %1775 = vmatmul.mubr.f32.gmra.mrb[0].mxu0 %v1577
        %v1776 = vpop.f32.mrb[0].mxu0
        %v1777 = vadd.f32 0.0, %v1776
        %v1778 = vpop.f32.mrb[0].mxu0
        %1779 = vmatprep.mubr.f32.mxu0 0.0
        %1780 = vmatmul.mubr.f32.gmra.mrb[0].mxu0 %v1578
        %v1781 = vpop.f32.mrb[0].mxu0
        %v1782 = vadd.f32 0.0, %v1781
        %v1783 = vpop.f32.mrb[0].mxu0
        %1784 = vmatprep.mubr.f32.mxu0 0.0
        %1785 = vmatmul.mubr.f32.gmra.mrb[0].mxu0 %v1579
        %v1786 = vpop.f32.mrb[0].mxu0
        %v1787 = vadd.f32 0.0, %v1786
        %v1788 = vpop.f32.mrb[0].mxu0
        %1789 = vmatprep.mubr.f32.mxu0 0.0
        %1790 = vmatmul.mubr.f32.gmra.mrb[0].mxu0 %v1580
        %v1791 = vpop.f32.mrb[0].mxu0
        %v1792 = vadd.f32 0.0, %v1791
        %v1793 = vpop.f32.mrb[0].mxu0
        %1794 = vmatprep.mubr.f32.mxu0 0.0
        %1795 = vmatmul.mubr.f32.gmra.mrb[0].mxu0 %v1581
        %v1796 = vpop.f32.mrb[0].mxu0
        %v1797 = vadd.f32 0.0, %v1796
        %v1798 = vpop.f32.mrb[0].mxu0
        %1799 = vmatprep.mubr.f32.mxu0 0.0
        %1800 = vmatmul.mubr.f32.gmra.mrb[0].mxu0 %v1582
        %v1801 = vpop.f32.mrb[0].mxu0
        %v1802 = vadd.f32 0.0, %v1801
        %v1803 = vpop.f32.mrb[0].mxu0
        %1804 = vmatprep.mubr.f32.mxu0 0.0
        %1805 = vmatmul.mubr.f32.gmra.mrb[0].mxu0 %v1583
        %v1806 = vpop.f32.mrb[0].mxu0
        %v1807 = vadd.f32 0.0, %v1806
        %v1808 = vpop.f32.mrb[0].mxu0
        %1809 = vmatprep.mubr.f32.mxu0 0.0
        %1810 = vmatmul.mubr.f32.gmra.mrb[0].mxu0 %v1584
        %v1811 = vpop.f32.mrb[0].mxu0
        %v1812 = vadd.f32 0.0, %v1811
        %v1813 = vpop.f32.mrb[0].mxu0
        %1814 = vmatprep.mubr.f32.mxu0 0.0
        %1815 = vmatmul.mubr.f32.gmra.mrb[0].mxu0 %v1585
        %v1816 = vpop.f32.mrb[0].mxu0
        %v1817 = vadd.f32 0.0, %v1816
        %v1818 = vpop.f32.mrb[0].mxu0
        %1819 = vmatprep.mubr.f32.mxu0 0.0
        %1820 = vmatmul.mubr.f32.gmra.mrb[0].mxu0 %v1586
        %v1821 = vpop.f32.mrb[0].mxu0
        %v1822 = vadd.f32 0.0, %v1821
        %v1823 = vpop.f32.mrb[0].mxu0
        %1824 = vmatprep.mubr.f32.mxu0 0.0
        %1825 = vmatmul.mubr.f32.gmra.mrb[0].mxu0 %v1587
        %v1826 = vpop.f32.mrb[0].mxu0
        %v1827 = vadd.f32 0.0, %v1826
        %v1828 = vpop.f32.mrb[0].mxu0
        %1829 = vmatprep.mubr.f32.mxu0 0.0
        %1830 = vmatmul.mubr.f32.gmra.mrb[0].mxu0 %v1588
        %v1831 = vpop.f32.mrb[0].mxu0
        %v1832 = vadd.f32 0.0, %v1831
        %v1833 = vpop.f32.mrb[0].mxu0
        %1834 = vmatprep.mubr.f32.mxu0 0.0
        %1835 = vmatmul.mubr.f32.gmra.mrb[0].mxu0 %v1589
        %v1836 = vpop.f32.mrb[0].mxu0
        %v1837 = vadd.f32 0.0, %v1836
        %v1838 = vpop.f32.mrb[0].mxu0
        %1839 = vmatprep.mubr.f32.mxu0 0.0
        %1840 = vmatmul.mubr.f32.gmra.mrb[0].mxu0 %v1590
        %v1841 = vpop.f32.mrb[0].mxu0
        %v1842 = vadd.f32 0.0, %v1841
        %v1843 = vpop.f32.mrb[0].mxu0
        %1844 = vmatprep.mubr.f32.mxu0 0.0
        %1845 = vmatmul.mubr.f32.gmra.mrb[0].mxu0 %v1591
        %v1846 = vpop.f32.mrb[0].mxu0
        %v1847 = vadd.f32 0.0, %v1846
        %v1848 = vpop.f32.mrb[0].mxu0
        %1849 = vmatprep.mubr.f32.mxu0 0.0
        %1850 = vmatmul.mubr.f32.gmra.mrb[0].mxu0 %v1592
        %v1851 = vpop.f32.mrb[0].mxu0
        %v1852 = vadd.f32 0.0, %v1851
        %v1853 = vpop.f32.mrb[0].mxu0
        %1854 = vdwg.mxu0
        %v1855 = vadd.f32 %v1521, %v1677
        %v1856 = vadd.f32 %v1522, %v1682
        %v1857 = vadd.f32 %v1523, %v1687
        %v1858 = vadd.f32 %v1524, %v1692
        %v1859 = vadd.f32 %v1525, %v1697
        %v1860 = vadd.f32 %v1526, %v1702
        %v1861 = vadd.f32 %v1527, %v1707
        %v1862 = vadd.f32 %v1528, %v1712
        %v1863 = vadd.f32 %v1529, %v1717
        %v1864 = vadd.f32 %v1530, %v1722
        %v1865 = vadd.f32 %v1531, %v1727
        %v1866 = vadd.f32 %v1532, %v1732
        %v1867 = vadd.f32 %v1533, %v1737
        %v1868 = vadd.f32 %v1534, %v1742
        %v1869 = vadd.f32 %v1535, %v1747
        %v1870 = vadd.f32 %v1536, %v1752
        %v1871 = vadd.f32 %v1537, %v1757
        %v1872 = vadd.f32 %v1538, %v1762
        %v1873 = vadd.f32 %v1539, %v1767
        %v1874 = vadd.f32 %v1540, %v1772
        %v1875 = vadd.f32 %v1541, %v1777
        %v1876 = vadd.f32 %v1542, %v1782
        %v1877 = vadd.f32 %v1543, %v1787
        %v1878 = vadd.f32 %v1544, %v1792
        %v1879 = vadd.f32 %v1545, %v1797
        %v1880 = vadd.f32 %v1546, %v1802
        %v1881 = vadd.f32 %v1547, %v1807
        %v1882 = vadd.f32 %v1548, %v1812
        %v1883 = vadd.f32 %v1549, %v1817
        %v1884 = vadd.f32 %v1550, %v1822
        %v1885 = vadd.f32 %v1551, %v1827
        %v1886 = vadd.f32 %v1552, %v1832
        %v1887 = vadd.f32 %v1553, %v1837
        %v1888 = vadd.f32 %v1554, %v1842
        %v1889 = vadd.f32 %v1555, %v1847
        %v1890 = vadd.f32 %v1556, %v1852
        %v1891 = vld [vmem:[%s220 + $0x14] sm:$0xff]
        %v1892 = vld [vmem:[%s220 + $0x1c] sm:$0xff]
        %v1893 = vld [vmem:[%s220 + $0x24] sm:$0xff]
        %v1894 = vld [vmem:[%s220 + $0x2c] sm:$0xff]
        %v1895 = vld [vmem:[%s220 + $0x34] sm:$0xff]
        %v1896 = vld [vmem:[%s220 + $0x3c] sm:$0xff]
        %v1897 = vld [vmem:[%s220 + $0x44] sm:$0xff]
        %v1898 = vld [vmem:[%s220 + $0x4c] sm:$0xff]
        %v1899 = vld [vmem:[%s220 + $0x54] sm:$0xff]
        %v1900 = vld [vmem:[%s220 + $0x5c] sm:$0xff]
        %v1901 = vld [vmem:[%s220 + $0x64] sm:$0xff]
        %v1902 = vld [vmem:[%s220 + $0x6c] sm:$0xff]
        %v1903 = vld [vmem:[%s220 + $0x74] sm:$0xff]
        %v1904 = vld [vmem:[%s220 + $0x7c] sm:$0xff]
        %v1905 = vld [vmem:[%s220 + $0x84] sm:$0xff]
        %v1906 = vld [vmem:[%s220 + $0x8c] sm:$0xff]
        %v1907 = vld [vmem:[%s220 + $0x94] sm:$0xff]
        %v1908 = vld [vmem:[%s220 + $0x9c] sm:$0xff]
        %v1909 = vld [vmem:[%s220 + $0xa4] sm:$0xff]
        %v1910 = vld [vmem:[%s220 + $0xac] sm:$0xff]
        %v1911 = vld [vmem:[%s220 + $0xb4] sm:$0xff]
        %v1912 = vld [vmem:[%s220 + $0xbc] sm:$0xff]
        %v1913 = vld [vmem:[%s220 + $0xc4] sm:$0xff]
        %v1914 = vld [vmem:[%s220 + $0xcc] sm:$0xff]
        %v1915 = vld [vmem:[%s220 + $0xd4] sm:$0xff]
        %v1916 = vld [vmem:[%s220 + $0xdc] sm:$0xff]
        %v1917 = vld [vmem:[%s220 + $0xe4] sm:$0xff]
        %v1918 = vld [vmem:[%s220 + $0xec] sm:$0xff]
        %v1919 = vld [vmem:[%s220 + $0xf4] sm:$0xff]
        %v1920 = vld [vmem:[%s220 + $0xfc] sm:$0xff]
        %v1921 = vld [vmem:[%s220 + $0x104] sm:$0xff]
        %v1922 = vld [vmem:[%s220 + $0x10c] sm:$0xff]
        %v1923 = vld [vmem:[%s220 + $0x114] sm:$0xff]
        %v1924 = vld [vmem:[%s220 + $0x11c] sm:$0xff]
        %v1925 = vld [vmem:[%s220 + $0x124] sm:$0xff]
        %v1926 = vld [vmem:[%s220 + $0x12c] sm:$0xff]
        %s1927 = scalar_lea.vmem [#allocation6], 640
        %v1928 = vld [vmem:[%s1927] sm:$0xff]
        %v1929 = vld [vmem:[%s1927 + $0x8] sm:$0xff]
        %v1930 = vld [vmem:[%s1927 + $0x10] sm:$0xff]
        %v1931 = vld [vmem:[%s1927 + $0x18] sm:$0xff]
        %v1932 = vld [vmem:[%s1927 + $0x20] sm:$0xff]
        %v1933 = vld [vmem:[%s1927 + $0x28] sm:$0xff]
        %v1934 = vld [vmem:[%s1927 + $0x30] sm:$0xff]
        %v1935 = vld [vmem:[%s1927 + $0x38] sm:$0xff]
        %v1936 = vld [vmem:[%s1927 + $0x40] sm:$0xff]
        %v1937 = vld [vmem:[%s1927 + $0x48] sm:$0xff]
        %v1938 = vld [vmem:[%s1927 + $0x50] sm:$0xff]
        %v1939 = vld [vmem:[%s1927 + $0x58] sm:$0xff]
        %v1940 = vld [vmem:[%s1927 + $0x60] sm:$0xff]
        %v1941 = vld [vmem:[%s1927 + $0x68] sm:$0xff]
        %v1942 = vld [vmem:[%s1927 + $0x70] sm:$0xff]
        %v1943 = vld [vmem:[%s1927 + $0x78] sm:$0xff]
        %1944 = vmatprep.subr.mxu0 0.0
        %1945 = vmatpush1.msra.mxu0 %v1928
        %1946 = vmatprep.subr.mxu0 0.0
        %1947 = vmatpush1.msra.mxu0 %v1929
        %1948 = vmatprep.subr.mxu0 0.0
        %1949 = vmatpush1.msra.mxu0 %v1930
        %1950 = vmatprep.subr.mxu0 0.0
        %1951 = vmatpush1.msra.mxu0 %v1931
        %1952 = vmatprep.subr.mxu0 0.0
        %1953 = vmatpush1.msra.mxu0 %v1932
        %1954 = vmatprep.subr.mxu0 0.0
        %1955 = vmatpush1.msra.mxu0 %v1933
        %1956 = vmatprep.subr.mxu0 0.0
        %1957 = vmatpush1.msra.mxu0 %v1934
        %1958 = vmatprep.subr.mxu0 0.0
        %1959 = vmatpush1.msra.mxu0 %v1935
        %1960 = vmatprep.subr.mxu0 0.0
        %1961 = vmatpush1.msra.mxu0 %v1936
        %1962 = vmatprep.subr.mxu0 0.0
        %1963 = vmatpush1.msra.mxu0 %v1937
        %1964 = vmatprep.subr.mxu0 0.0
        %1965 = vmatpush1.msra.mxu0 %v1938
        %1966 = vmatprep.subr.mxu0 0.0
        %1967 = vmatpush1.msra.mxu0 %v1939
        %1968 = vmatprep.subr.mxu0 0.0
        %1969 = vmatpush1.msra.mxu0 %v1940
        %1970 = vmatprep.subr.mxu0 0.0
        %1971 = vmatpush1.msra.mxu0 %v1941
        %1972 = vmatprep.subr.mxu0 0.0
        %1973 = vmatpush1.msra.mxu0 %v1942
        %1974 = vmatprep.subr.mxu0 0.0
        %1975 = vmatpush1.msra.mxu0 %v1943
        %1976 = vmatprep.subr.mxu0 0.0
        %1977 = vmatpush1.msra.mxu0 0.0
        %1978 = vmatprep.subr.mxu0 0.0
        %1979 = vmatpush1.msra.mxu0 0.0
        %1980 = vmatprep.subr.mxu0 0.0
        %1981 = vmatpush1.msra.mxu0 0.0
        %1982 = vmatprep.subr.mxu0 0.0
        %1983 = vmatpush1.msra.mxu0 0.0
        %1984 = vmatprep.subr.mxu0 0.0
        %1985 = vmatpush1.msra.mxu0 0.0
        %1986 = vmatprep.subr.mxu0 0.0
        %1987 = vmatpush1.msra.mxu0 0.0
        %1988 = vmatprep.subr.mxu0 0.0
        %1989 = vmatpush1.msra.mxu0 0.0
        %1990 = vmatprep.subr.mxu0 0.0
        %1991 = vmatpush1.msra.mxu0 0.0
        %1992 = vmatprep.subr.mxu0 0.0
        %1993 = vmatpush1.msra.mxu0 0.0
        %1994 = vmatprep.subr.mxu0 0.0
        %1995 = vmatpush1.msra.mxu0 0.0
        %1996 = vmatprep.subr.mxu0 0.0
        %1997 = vmatpush1.msra.mxu0 0.0
        %1998 = vmatprep.subr.mxu0 0.0
        %1999 = vmatpush1.msra.mxu0 0.0
        %2000 = vmatprep.subr.mxu0 0.0
        %2001 = vmatpush1.msra.mxu0 0.0
        %2002 = vmatprep.subr.mxu0 0.0
        %2003 = vmatpush1.msra.mxu0 0.0
        %2004 = vmatprep.subr.mxu0 0.0
        %2005 = vmatpush1.msra.mxu0 0.0
        %2006 = vmatprep.subr.mxu0 0.0
        %2007 = vmatpush1.msra.mxu0 0.0
        %2008 = vmatprep.mubr.f32.mxu0 0.0
        %2009 = vmatmul.mubr.f32.gmra.mrb[0].mxu0 %v1891
        %v2010 = vpop.f32.mrb[0].mxu0
        %v2011 = vadd.f32 0.0, %v2010
        %v2012 = vpop.f32.mrb[0].mxu0
        %2013 = vmatprep.mubr.f32.mxu0 0.0
        %2014 = vmatmul.mubr.f32.gmra.mrb[0].mxu0 %v1892
        %v2015 = vpop.f32.mrb[0].mxu0
        %v2016 = vadd.f32 0.0, %v2015
        %v2017 = vpop.f32.mrb[0].mxu0
        %2018 = vmatprep.mubr.f32.mxu0 0.0
        %2019 = vmatmul.mubr.f32.gmra.mrb[0].mxu0 %v1893
        %v2020 = vpop.f32.mrb[0].mxu0
        %v2021 = vadd.f32 0.0, %v2020
        %v2022 = vpop.f32.mrb[0].mxu0
        %2023 = vmatprep.mubr.f32.mxu0 0.0
        %2024 = vmatmul.mubr.f32.gmra.mrb[0].mxu0 %v1894
        %v2025 = vpop.f32.mrb[0].mxu0
        %v2026 = vadd.f32 0.0, %v2025
        %v2027 = vpop.f32.mrb[0].mxu0
        %2028 = vmatprep.mubr.f32.mxu0 0.0
        %2029 = vmatmul.mubr.f32.gmra.mrb[0].mxu0 %v1895
        %v2030 = vpop.f32.mrb[0].mxu0
        %v2031 = vadd.f32 0.0, %v2030
        %v2032 = vpop.f32.mrb[0].mxu0
        %2033 = vmatprep.mubr.f32.mxu0 0.0
        %2034 = vmatmul.mubr.f32.gmra.mrb[0].mxu0 %v1896
        %v2035 = vpop.f32.mrb[0].mxu0
        %v2036 = vadd.f32 0.0, %v2035
        %v2037 = vpop.f32.mrb[0].mxu0
        %2038 = vmatprep.mubr.f32.mxu0 0.0
        %2039 = vmatmul.mubr.f32.gmra.mrb[0].mxu0 %v1897
        %v2040 = vpop.f32.mrb[0].mxu0
        %v2041 = vadd.f32 0.0, %v2040
        %v2042 = vpop.f32.mrb[0].mxu0
        %2043 = vmatprep.mubr.f32.mxu0 0.0
        %2044 = vmatmul.mubr.f32.gmra.mrb[0].mxu0 %v1898
        %v2045 = vpop.f32.mrb[0].mxu0
        %v2046 = vadd.f32 0.0, %v2045
        %v2047 = vpop.f32.mrb[0].mxu0
        %2048 = vmatprep.mubr.f32.mxu0 0.0
        %2049 = vmatmul.mubr.f32.gmra.mrb[0].mxu0 %v1899
        %v2050 = vpop.f32.mrb[0].mxu0
        %v2051 = vadd.f32 0.0, %v2050
        %v2052 = vpop.f32.mrb[0].mxu0
        %2053 = vmatprep.mubr.f32.mxu0 0.0
        %2054 = vmatmul.mubr.f32.gmra.mrb[0].mxu0 %v1900
        %v2055 = vpop.f32.mrb[0].mxu0
        %v2056 = vadd.f32 0.0, %v2055
        %v2057 = vpop.f32.mrb[0].mxu0
        %2058 = vmatprep.mubr.f32.mxu0 0.0
        %2059 = vmatmul.mubr.f32.gmra.mrb[0].mxu0 %v1901
        %v2060 = vpop.f32.mrb[0].mxu0
        %v2061 = vadd.f32 0.0, %v2060
        %v2062 = vpop.f32.mrb[0].mxu0
        %2063 = vmatprep.mubr.f32.mxu0 0.0
        %2064 = vmatmul.mubr.f32.gmra.mrb[0].mxu0 %v1902
        %v2065 = vpop.f32.mrb[0].mxu0
        %v2066 = vadd.f32 0.0, %v2065
        %v2067 = vpop.f32.mrb[0].mxu0
        %2068 = vmatprep.mubr.f32.mxu0 0.0
        %2069 = vmatmul.mubr.f32.gmra.mrb[0].mxu0 %v1903
        %v2070 = vpop.f32.mrb[0].mxu0
        %v2071 = vadd.f32 0.0, %v2070
        %v2072 = vpop.f32.mrb[0].mxu0
        %2073 = vmatprep.mubr.f32.mxu0 0.0
        %2074 = vmatmul.mubr.f32.gmra.mrb[0].mxu0 %v1904
        %v2075 = vpop.f32.mrb[0].mxu0
        %v2076 = vadd.f32 0.0, %v2075
        %v2077 = vpop.f32.mrb[0].mxu0
        %2078 = vmatprep.mubr.f32.mxu0 0.0
        %2079 = vmatmul.mubr.f32.gmra.mrb[0].mxu0 %v1905
        %v2080 = vpop.f32.mrb[0].mxu0
        %v2081 = vadd.f32 0.0, %v2080
        %v2082 = vpop.f32.mrb[0].mxu0
        %2083 = vmatprep.mubr.f32.mxu0 0.0
        %2084 = vmatmul.mubr.f32.gmra.mrb[0].mxu0 %v1906
        %v2085 = vpop.f32.mrb[0].mxu0
        %v2086 = vadd.f32 0.0, %v2085
        %v2087 = vpop.f32.mrb[0].mxu0
        %2088 = vmatprep.mubr.f32.mxu0 0.0
        %2089 = vmatmul.mubr.f32.gmra.mrb[0].mxu0 %v1907
        %v2090 = vpop.f32.mrb[0].mxu0
        %v2091 = vadd.f32 0.0, %v2090
        %v2092 = vpop.f32.mrb[0].mxu0
        %2093 = vmatprep.mubr.f32.mxu0 0.0
        %2094 = vmatmul.mubr.f32.gmra.mrb[0].mxu0 %v1908
        %v2095 = vpop.f32.mrb[0].mxu0
        %v2096 = vadd.f32 0.0, %v2095
        %v2097 = vpop.f32.mrb[0].mxu0
        %2098 = vmatprep.mubr.f32.mxu0 0.0
        %2099 = vmatmul.mubr.f32.gmra.mrb[0].mxu0 %v1909
        %v2100 = vpop.f32.mrb[0].mxu0
        %v2101 = vadd.f32 0.0, %v2100
        %v2102 = vpop.f32.mrb[0].mxu0
        %2103 = vmatprep.mubr.f32.mxu0 0.0
        %2104 = vmatmul.mubr.f32.gmra.mrb[0].mxu0 %v1910
        %v2105 = vpop.f32.mrb[0].mxu0
        %v2106 = vadd.f32 0.0, %v2105
        %v2107 = vpop.f32.mrb[0].mxu0
        %2108 = vmatprep.mubr.f32.mxu0 0.0
        %2109 = vmatmul.mubr.f32.gmra.mrb[0].mxu0 %v1911
        %v2110 = vpop.f32.mrb[0].mxu0
        %v2111 = vadd.f32 0.0, %v2110
        %v2112 = vpop.f32.mrb[0].mxu0
        %2113 = vmatprep.mubr.f32.mxu0 0.0
        %2114 = vmatmul.mubr.f32.gmra.mrb[0].mxu0 %v1912
        %v2115 = vpop.f32.mrb[0].mxu0
        %v2116 = vadd.f32 0.0, %v2115
        %v2117 = vpop.f32.mrb[0].mxu0
        %2118 = vmatprep.mubr.f32.mxu0 0.0
        %2119 = vmatmul.mubr.f32.gmra.mrb[0].mxu0 %v1913
        %v2120 = vpop.f32.mrb[0].mxu0
        %v2121 = vadd.f32 0.0, %v2120
        %v2122 = vpop.f32.mrb[0].mxu0
        %2123 = vmatprep.mubr.f32.mxu0 0.0
        %2124 = vmatmul.mubr.f32.gmra.mrb[0].mxu0 %v1914
        %v2125 = vpop.f32.mrb[0].mxu0
        %v2126 = vadd.f32 0.0, %v2125
        %v2127 = vpop.f32.mrb[0].mxu0
        %2128 = vmatprep.mubr.f32.mxu0 0.0
        %2129 = vmatmul.mubr.f32.gmra.mrb[0].mxu0 %v1915
        %v2130 = vpop.f32.mrb[0].mxu0
        %v2131 = vadd.f32 0.0, %v2130
        %v2132 = vpop.f32.mrb[0].mxu0
        %2133 = vmatprep.mubr.f32.mxu0 0.0
        %2134 = vmatmul.mubr.f32.gmra.mrb[0].mxu0 %v1916
        %v2135 = vpop.f32.mrb[0].mxu0
        %v2136 = vadd.f32 0.0, %v2135
        %v2137 = vpop.f32.mrb[0].mxu0
        %2138 = vmatprep.mubr.f32.mxu0 0.0
        %2139 = vmatmul.mubr.f32.gmra.mrb[0].mxu0 %v1917
        %v2140 = vpop.f32.mrb[0].mxu0
        %v2141 = vadd.f32 0.0, %v2140
        %v2142 = vpop.f32.mrb[0].mxu0
        %2143 = vmatprep.mubr.f32.mxu0 0.0
        %2144 = vmatmul.mubr.f32.gmra.mrb[0].mxu0 %v1918
        %v2145 = vpop.f32.mrb[0].mxu0
        %v2146 = vadd.f32 0.0, %v2145
        %v2147 = vpop.f32.mrb[0].mxu0
        %2148 = vmatprep.mubr.f32.mxu0 0.0
        %2149 = vmatmul.mubr.f32.gmra.mrb[0].mxu0 %v1919
        %v2150 = vpop.f32.mrb[0].mxu0
        %v2151 = vadd.f32 0.0, %v2150
        %v2152 = vpop.f32.mrb[0].mxu0
        %2153 = vmatprep.mubr.f32.mxu0 0.0
        %2154 = vmatmul.mubr.f32.gmra.mrb[0].mxu0 %v1920
        %v2155 = vpop.f32.mrb[0].mxu0
        %v2156 = vadd.f32 0.0, %v2155
        %v2157 = vpop.f32.mrb[0].mxu0
        %2158 = vmatprep.mubr.f32.mxu0 0.0
        %2159 = vmatmul.mubr.f32.gmra.mrb[0].mxu0 %v1921
        %v2160 = vpop.f32.mrb[0].mxu0
        %v2161 = vadd.f32 0.0, %v2160
        %v2162 = vpop.f32.mrb[0].mxu0
        %2163 = vmatprep.mubr.f32.mxu0 0.0
        %2164 = vmatmul.mubr.f32.gmra.mrb[0].mxu0 %v1922
        %v2165 = vpop.f32.mrb[0].mxu0
        %v2166 = vadd.f32 0.0, %v2165
        %v2167 = vpop.f32.mrb[0].mxu0
        %2168 = vmatprep.mubr.f32.mxu0 0.0
        %2169 = vmatmul.mubr.f32.gmra.mrb[0].mxu0 %v1923
        %v2170 = vpop.f32.mrb[0].mxu0
        %v2171 = vadd.f32 0.0, %v2170
        %v2172 = vpop.f32.mrb[0].mxu0
        %2173 = vmatprep.mubr.f32.mxu0 0.0
        %2174 = vmatmul.mubr.f32.gmra.mrb[0].mxu0 %v1924
        %v2175 = vpop.f32.mrb[0].mxu0
        %v2176 = vadd.f32 0.0, %v2175
        %v2177 = vpop.f32.mrb[0].mxu0
        %2178 = vmatprep.mubr.f32.mxu0 0.0
        %2179 = vmatmul.mubr.f32.gmra.mrb[0].mxu0 %v1925
        %v2180 = vpop.f32.mrb[0].mxu0
        %v2181 = vadd.f32 0.0, %v2180
        %v2182 = vpop.f32.mrb[0].mxu0
        %2183 = vmatprep.mubr.f32.mxu0 0.0
        %2184 = vmatmul.mubr.f32.gmra.mrb[0].mxu0 %v1926
        %v2185 = vpop.f32.mrb[0].mxu0
        %v2186 = vadd.f32 0.0, %v2185
        %v2187 = vpop.f32.mrb[0].mxu0
        %2188 = vdwg.mxu0
        %v2189 = vadd.f32 %v1855, %v2011
        %v2190 = vadd.f32 %v1856, %v2016
        %v2191 = vadd.f32 %v1857, %v2021
        %v2192 = vadd.f32 %v1858, %v2026
        %v2193 = vadd.f32 %v1859, %v2031
        %v2194 = vadd.f32 %v1860, %v2036
        %v2195 = vadd.f32 %v1861, %v2041
        %v2196 = vadd.f32 %v1862, %v2046
        %v2197 = vadd.f32 %v1863, %v2051
        %v2198 = vadd.f32 %v1864, %v2056
        %v2199 = vadd.f32 %v1865, %v2061
        %v2200 = vadd.f32 %v1866, %v2066
        %v2201 = vadd.f32 %v1867, %v2071
        %v2202 = vadd.f32 %v1868, %v2076
        %v2203 = vadd.f32 %v1869, %v2081
        %v2204 = vadd.f32 %v1870, %v2086
        %v2205 = vadd.f32 %v1871, %v2091
        %v2206 = vadd.f32 %v1872, %v2096
        %v2207 = vadd.f32 %v1873, %v2101
        %v2208 = vadd.f32 %v1874, %v2106
        %v2209 = vadd.f32 %v1875, %v2111
        %v2210 = vadd.f32 %v1876, %v2116
        %v2211 = vadd.f32 %v1877, %v2121
        %v2212 = vadd.f32 %v1878, %v2126
        %v2213 = vadd.f32 %v1879, %v2131
        %v2214 = vadd.f32 %v1880, %v2136
        %v2215 = vadd.f32 %v1881, %v2141
        %v2216 = vadd.f32 %v1882, %v2146
        %v2217 = vadd.f32 %v1883, %v2151
        %v2218 = vadd.f32 %v1884, %v2156
        %v2219 = vadd.f32 %v1885, %v2161
        %v2220 = vadd.f32 %v1886, %v2166
        %v2221 = vadd.f32 %v1887, %v2171
        %v2222 = vadd.f32 %v1888, %v2176
        %v2223 = vadd.f32 %v1889, %v2181
        %v2224 = vadd.f32 %v1890, %v2186
        %v2225 = vld [vmem:[%s220 + $0x24] sm:$0xff]
        %v2226 = vld [vmem:[%s220 + $0x2c] sm:$0xff]
        %v2227 = vld [vmem:[%s220 + $0x34] sm:$0xff]
        %v2228 = vld [vmem:[%s220 + $0x3c] sm:$0xff]
        %v2229 = vld [vmem:[%s220 + $0x44] sm:$0xff]
        %v2230 = vld [vmem:[%s220 + $0x4c] sm:$0xff]
        %v2231 = vld [vmem:[%s220 + $0x54] sm:$0xff]
        %v2232 = vld [vmem:[%s220 + $0x5c] sm:$0xff]
        %v2233 = vld [vmem:[%s220 + $0x64] sm:$0xff]
        %v2234 = vld [vmem:[%s220 + $0x6c] sm:$0xff]
        %v2235 = vld [vmem:[%s220 + $0x74] sm:$0xff]
        %v2236 = vld [vmem:[%s220 + $0x7c] sm:$0xff]
        %v2237 = vld [vmem:[%s220 + $0x84] sm:$0xff]
        %v2238 = vld [vmem:[%s220 + $0x8c] sm:$0xff]
        %v2239 = vld [vmem:[%s220 + $0x94] sm:$0xff]
        %v2240 = vld [vmem:[%s220 + $0x9c] sm:$0xff]
        %v2241 = vld [vmem:[%s220 + $0xa4] sm:$0xff]
        %v2242 = vld [vmem:[%s220 + $0xac] sm:$0xff]
        %v2243 = vld [vmem:[%s220 + $0xb4] sm:$0xff]
        %v2244 = vld [vmem:[%s220 + $0xbc] sm:$0xff]
        %v2245 = vld [vmem:[%s220 + $0xc4] sm:$0xff]
        %v2246 = vld [vmem:[%s220 + $0xcc] sm:$0xff]
        %v2247 = vld [vmem:[%s220 + $0xd4] sm:$0xff]
        %v2248 = vld [vmem:[%s220 + $0xdc] sm:$0xff]
        %v2249 = vld [vmem:[%s220 + $0xe4] sm:$0xff]
        %v2250 = vld [vmem:[%s220 + $0xec] sm:$0xff]
        %v2251 = vld [vmem:[%s220 + $0xf4] sm:$0xff]
        %v2252 = vld [vmem:[%s220 + $0xfc] sm:$0xff]
        %v2253 = vld [vmem:[%s220 + $0x104] sm:$0xff]
        %v2254 = vld [vmem:[%s220 + $0x10c] sm:$0xff]
        %v2255 = vld [vmem:[%s220 + $0x114] sm:$0xff]
        %v2256 = vld [vmem:[%s220 + $0x11c] sm:$0xff]
        %v2257 = vld [vmem:[%s220 + $0x124] sm:$0xff]
        %v2258 = vld [vmem:[%s220 + $0x12c] sm:$0xff]
        %v2259 = vld [vmem:[%s220 + $0x134] sm:$0xff]
        %v2260 = vld [vmem:[%s220 + $0x13c] sm:$0xff]
        %s2261 = scalar_lea.vmem [#allocation6], 768
        %v2262 = vld [vmem:[%s2261] sm:$0xff]
        %v2263 = vld [vmem:[%s2261 + $0x8] sm:$0xff]
        %v2264 = vld [vmem:[%s2261 + $0x10] sm:$0xff]
        %v2265 = vld [vmem:[%s2261 + $0x18] sm:$0xff]
        %v2266 = vld [vmem:[%s2261 + $0x20] sm:$0xff]
        %v2267 = vld [vmem:[%s2261 + $0x28] sm:$0xff]
        %v2268 = vld [vmem:[%s2261 + $0x30] sm:$0xff]
        %v2269 = vld [vmem:[%s2261 + $0x38] sm:$0xff]
        %v2270 = vld [vmem:[%s2261 + $0x40] sm:$0xff]
        %v2271 = vld [vmem:[%s2261 + $0x48] sm:$0xff]
        %v2272 = vld [vmem:[%s2261 + $0x50] sm:$0xff]
        %v2273 = vld [vmem:[%s2261 + $0x58] sm:$0xff]
        %v2274 = vld [vmem:[%s2261 + $0x60] sm:$0xff]
        %v2275 = vld [vmem:[%s2261 + $0x68] sm:$0xff]
        %v2276 = vld [vmem:[%s2261 + $0x70] sm:$0xff]
        %v2277 = vld [vmem:[%s2261 + $0x78] sm:$0xff]
        %2278 = vmatprep.subr.mxu0 0.0
        %2279 = vmatpush1.msra.mxu0 %v2262
        %2280 = vmatprep.subr.mxu0 0.0
        %2281 = vmatpush1.msra.mxu0 %v2263
        %2282 = vmatprep.subr.mxu0 0.0
        %2283 = vmatpush1.msra.mxu0 %v2264
        %2284 = vmatprep.subr.mxu0 0.0
        %2285 = vmatpush1.msra.mxu0 %v2265
        %2286 = vmatprep.subr.mxu0 0.0
        %2287 = vmatpush1.msra.mxu0 %v2266
        %2288 = vmatprep.subr.mxu0 0.0
        %2289 = vmatpush1.msra.mxu0 %v2267
        %2290 = vmatprep.subr.mxu0 0.0
        %2291 = vmatpush1.msra.mxu0 %v2268
        %2292 = vmatprep.subr.mxu0 0.0
        %2293 = vmatpush1.msra.mxu0 %v2269
        %2294 = vmatprep.subr.mxu0 0.0
        %2295 = vmatpush1.msra.mxu0 %v2270
        %2296 = vmatprep.subr.mxu0 0.0
        %2297 = vmatpush1.msra.mxu0 %v2271
        %2298 = vmatprep.subr.mxu0 0.0
        %2299 = vmatpush1.msra.mxu0 %v2272
        %2300 = vmatprep.subr.mxu0 0.0
        %2301 = vmatpush1.msra.mxu0 %v2273
        %2302 = vmatprep.subr.mxu0 0.0
        %2303 = vmatpush1.msra.mxu0 %v2274
        %2304 = vmatprep.subr.mxu0 0.0
        %2305 = vmatpush1.msra.mxu0 %v2275
        %2306 = vmatprep.subr.mxu0 0.0
        %2307 = vmatpush1.msra.mxu0 %v2276
        %2308 = vmatprep.subr.mxu0 0.0
        %2309 = vmatpush1.msra.mxu0 %v2277
        %2310 = vmatprep.subr.mxu0 0.0
        %2311 = vmatpush1.msra.mxu0 0.0
        %2312 = vmatprep.subr.mxu0 0.0
        %2313 = vmatpush1.msra.mxu0 0.0
        %2314 = vmatprep.subr.mxu0 0.0
        %2315 = vmatpush1.msra.mxu0 0.0
        %2316 = vmatprep.subr.mxu0 0.0
        %2317 = vmatpush1.msra.mxu0 0.0
        %2318 = vmatprep.subr.mxu0 0.0
        %2319 = vmatpush1.msra.mxu0 0.0
        %2320 = vmatprep.subr.mxu0 0.0
        %2321 = vmatpush1.msra.mxu0 0.0
        %2322 = vmatprep.subr.mxu0 0.0
        %2323 = vmatpush1.msra.mxu0 0.0
        %2324 = vmatprep.subr.mxu0 0.0
        %2325 = vmatpush1.msra.mxu0 0.0
        %2326 = vmatprep.subr.mxu0 0.0
        %2327 = vmatpush1.msra.mxu0 0.0
        %2328 = vmatprep.subr.mxu0 0.0
        %2329 = vmatpush1.msra.mxu0 0.0
        %2330 = vmatprep.subr.mxu0 0.0
        %2331 = vmatpush1.msra.mxu0 0.0
        %2332 = vmatprep.subr.mxu0 0.0
        %2333 = vmatpush1.msra.mxu0 0.0
        %2334 = vmatprep.subr.mxu0 0.0
        %2335 = vmatpush1.msra.mxu0 0.0
        %2336 = vmatprep.subr.mxu0 0.0
        %2337 = vmatpush1.msra.mxu0 0.0
        %2338 = vmatprep.subr.mxu0 0.0
        %2339 = vmatpush1.msra.mxu0 0.0
        %2340 = vmatprep.subr.mxu0 0.0
        %2341 = vmatpush1.msra.mxu0 0.0
        %2342 = vmatprep.mubr.f32.mxu0 0.0
        %2343 = vmatmul.mubr.f32.gmra.mrb[0].mxu0 %v2225
        %v2344 = vpop.f32.mrb[0].mxu0
        %v2345 = vadd.f32 0.0, %v2344
        %v2346 = vpop.f32.mrb[0].mxu0
        %2347 = vmatprep.mubr.f32.mxu0 0.0
        %2348 = vmatmul.mubr.f32.gmra.mrb[0].mxu0 %v2226
        %v2349 = vpop.f32.mrb[0].mxu0
        %v2350 = vadd.f32 0.0, %v2349
        %v2351 = vpop.f32.mrb[0].mxu0
        %2352 = vmatprep.mubr.f32.mxu0 0.0
        %2353 = vmatmul.mubr.f32.gmra.mrb[0].mxu0 %v2227
        %v2354 = vpop.f32.mrb[0].mxu0
        %v2355 = vadd.f32 0.0, %v2354
        %v2356 = vpop.f32.mrb[0].mxu0
        %2357 = vmatprep.mubr.f32.mxu0 0.0
        %2358 = vmatmul.mubr.f32.gmra.mrb[0].mxu0 %v2228
        %v2359 = vpop.f32.mrb[0].mxu0
        %v2360 = vadd.f32 0.0, %v2359
        %v2361 = vpop.f32.mrb[0].mxu0
        %2362 = vmatprep.mubr.f32.mxu0 0.0
        %2363 = vmatmul.mubr.f32.gmra.mrb[0].mxu0 %v2229
        %v2364 = vpop.f32.mrb[0].mxu0
        %v2365 = vadd.f32 0.0, %v2364
        %v2366 = vpop.f32.mrb[0].mxu0
        %2367 = vmatprep.mubr.f32.mxu0 0.0
        %2368 = vmatmul.mubr.f32.gmra.mrb[0].mxu0 %v2230
        %v2369 = vpop.f32.mrb[0].mxu0
        %v2370 = vadd.f32 0.0, %v2369
        %v2371 = vpop.f32.mrb[0].mxu0
        %2372 = vmatprep.mubr.f32.mxu0 0.0
        %2373 = vmatmul.mubr.f32.gmra.mrb[0].mxu0 %v2231
        %v2374 = vpop.f32.mrb[0].mxu0
        %v2375 = vadd.f32 0.0, %v2374
        %v2376 = vpop.f32.mrb[0].mxu0
        %2377 = vmatprep.mubr.f32.mxu0 0.0
        %2378 = vmatmul.mubr.f32.gmra.mrb[0].mxu0 %v2232
        %v2379 = vpop.f32.mrb[0].mxu0
        %v2380 = vadd.f32 0.0, %v2379
        %v2381 = vpop.f32.mrb[0].mxu0
        %2382 = vmatprep.mubr.f32.mxu0 0.0
        %2383 = vmatmul.mubr.f32.gmra.mrb[0].mxu0 %v2233
        %v2384 = vpop.f32.mrb[0].mxu0
        %v2385 = vadd.f32 0.0, %v2384
        %v2386 = vpop.f32.mrb[0].mxu0
        %2387 = vmatprep.mubr.f32.mxu0 0.0
        %2388 = vmatmul.mubr.f32.gmra.mrb[0].mxu0 %v2234
        %v2389 = vpop.f32.mrb[0].mxu0
        %v2390 = vadd.f32 0.0, %v2389
        %v2391 = vpop.f32.mrb[0].mxu0
        %2392 = vmatprep.mubr.f32.mxu0 0.0
        %2393 = vmatmul.mubr.f32.gmra.mrb[0].mxu0 %v2235
        %v2394 = vpop.f32.mrb[0].mxu0
        %v2395 = vadd.f32 0.0, %v2394
        %v2396 = vpop.f32.mrb[0].mxu0
        %2397 = vmatprep.mubr.f32.mxu0 0.0
        %2398 = vmatmul.mubr.f32.gmra.mrb[0].mxu0 %v2236
        %v2399 = vpop.f32.mrb[0].mxu0
        %v2400 = vadd.f32 0.0, %v2399
        %v2401 = vpop.f32.mrb[0].mxu0
        %2402 = vmatprep.mubr.f32.mxu0 0.0
        %2403 = vmatmul.mubr.f32.gmra.mrb[0].mxu0 %v2237
        %v2404 = vpop.f32.mrb[0].mxu0
        %v2405 = vadd.f32 0.0, %v2404
        %v2406 = vpop.f32.mrb[0].mxu0
        %2407 = vmatprep.mubr.f32.mxu0 0.0
        %2408 = vmatmul.mubr.f32.gmra.mrb[0].mxu0 %v2238
        %v2409 = vpop.f32.mrb[0].mxu0
        %v2410 = vadd.f32 0.0, %v2409
        %v2411 = vpop.f32.mrb[0].mxu0
        %2412 = vmatprep.mubr.f32.mxu0 0.0
        %2413 = vmatmul.mubr.f32.gmra.mrb[0].mxu0 %v2239
        %v2414 = vpop.f32.mrb[0].mxu0
        %v2415 = vadd.f32 0.0, %v2414
        %v2416 = vpop.f32.mrb[0].mxu0
        %2417 = vmatprep.mubr.f32.mxu0 0.0
        %2418 = vmatmul.mubr.f32.gmra.mrb[0].mxu0 %v2240
        %v2419 = vpop.f32.mrb[0].mxu0
        %v2420 = vadd.f32 0.0, %v2419
        %v2421 = vpop.f32.mrb[0].mxu0
        %2422 = vmatprep.mubr.f32.mxu0 0.0
        %2423 = vmatmul.mubr.f32.gmra.mrb[0].mxu0 %v2241
        %v2424 = vpop.f32.mrb[0].mxu0
        %v2425 = vadd.f32 0.0, %v2424
        %v2426 = vpop.f32.mrb[0].mxu0
        %2427 = vmatprep.mubr.f32.mxu0 0.0
        %2428 = vmatmul.mubr.f32.gmra.mrb[0].mxu0 %v2242
        %v2429 = vpop.f32.mrb[0].mxu0
        %v2430 = vadd.f32 0.0, %v2429
        %v2431 = vpop.f32.mrb[0].mxu0
        %2432 = vmatprep.mubr.f32.mxu0 0.0
        %2433 = vmatmul.mubr.f32.gmra.mrb[0].mxu0 %v2243
        %v2434 = vpop.f32.mrb[0].mxu0
        %v2435 = vadd.f32 0.0, %v2434
        %v2436 = vpop.f32.mrb[0].mxu0
        %2437 = vmatprep.mubr.f32.mxu0 0.0
        %2438 = vmatmul.mubr.f32.gmra.mrb[0].mxu0 %v2244
        %v2439 = vpop.f32.mrb[0].mxu0
        %v2440 = vadd.f32 0.0, %v2439
        %v2441 = vpop.f32.mrb[0].mxu0
        %2442 = vmatprep.mubr.f32.mxu0 0.0
        %2443 = vmatmul.mubr.f32.gmra.mrb[0].mxu0 %v2245
        %v2444 = vpop.f32.mrb[0].mxu0
        %v2445 = vadd.f32 0.0, %v2444
        %v2446 = vpop.f32.mrb[0].mxu0
        %2447 = vmatprep.mubr.f32.mxu0 0.0
        %2448 = vmatmul.mubr.f32.gmra.mrb[0].mxu0 %v2246
        %v2449 = vpop.f32.mrb[0].mxu0
        %v2450 = vadd.f32 0.0, %v2449
        %v2451 = vpop.f32.mrb[0].mxu0
        %2452 = vmatprep.mubr.f32.mxu0 0.0
        %2453 = vmatmul.mubr.f32.gmra.mrb[0].mxu0 %v2247
        %v2454 = vpop.f32.mrb[0].mxu0
        %v2455 = vadd.f32 0.0, %v2454
        %v2456 = vpop.f32.mrb[0].mxu0
        %2457 = vmatprep.mubr.f32.mxu0 0.0
        %2458 = vmatmul.mubr.f32.gmra.mrb[0].mxu0 %v2248
        %v2459 = vpop.f32.mrb[0].mxu0
        %v2460 = vadd.f32 0.0, %v2459
        %v2461 = vpop.f32.mrb[0].mxu0
        %2462 = vmatprep.mubr.f32.mxu0 0.0
        %2463 = vmatmul.mubr.f32.gmra.mrb[0].mxu0 %v2249
        %v2464 = vpop.f32.mrb[0].mxu0
        %v2465 = vadd.f32 0.0, %v2464
        %v2466 = vpop.f32.mrb[0].mxu0
        %2467 = vmatprep.mubr.f32.mxu0 0.0
        %2468 = vmatmul.mubr.f32.gmra.mrb[0].mxu0 %v2250
        %v2469 = vpop.f32.mrb[0].mxu0
        %v2470 = vadd.f32 0.0, %v2469
        %v2471 = vpop.f32.mrb[0].mxu0
        %2472 = vmatprep.mubr.f32.mxu0 0.0
        %2473 = vmatmul.mubr.f32.gmra.mrb[0].mxu0 %v2251
        %v2474 = vpop.f32.mrb[0].mxu0
        %v2475 = vadd.f32 0.0, %v2474
        %v2476 = vpop.f32.mrb[0].mxu0
        %2477 = vmatprep.mubr.f32.mxu0 0.0
        %2478 = vmatmul.mubr.f32.gmra.mrb[0].mxu0 %v2252
        %v2479 = vpop.f32.mrb[0].mxu0
        %v2480 = vadd.f32 0.0, %v2479
        %v2481 = vpop.f32.mrb[0].mxu0
        %2482 = vmatprep.mubr.f32.mxu0 0.0
        %2483 = vmatmul.mubr.f32.gmra.mrb[0].mxu0 %v2253
        %v2484 = vpop.f32.mrb[0].mxu0
        %v2485 = vadd.f32 0.0, %v2484
        %v2486 = vpop.f32.mrb[0].mxu0
        %2487 = vmatprep.mubr.f32.mxu0 0.0
        %2488 = vmatmul.mubr.f32.gmra.mrb[0].mxu0 %v2254
        %v2489 = vpop.f32.mrb[0].mxu0
        %v2490 = vadd.f32 0.0, %v2489
        %v2491 = vpop.f32.mrb[0].mxu0
        %2492 = vmatprep.mubr.f32.mxu0 0.0
        %2493 = vmatmul.mubr.f32.gmra.mrb[0].mxu0 %v2255
        %v2494 = vpop.f32.mrb[0].mxu0
        %v2495 = vadd.f32 0.0, %v2494
        %v2496 = vpop.f32.mrb[0].mxu0
        %2497 = vmatprep.mubr.f32.mxu0 0.0
        %2498 = vmatmul.mubr.f32.gmra.mrb[0].mxu0 %v2256
        %v2499 = vpop.f32.mrb[0].mxu0
        %v2500 = vadd.f32 0.0, %v2499
        %v2501 = vpop.f32.mrb[0].mxu0
        %2502 = vmatprep.mubr.f32.mxu0 0.0
        %2503 = vmatmul.mubr.f32.gmra.mrb[0].mxu0 %v2257
        %v2504 = vpop.f32.mrb[0].mxu0
        %v2505 = vadd.f32 0.0, %v2504
        %v2506 = vpop.f32.mrb[0].mxu0
        %2507 = vmatprep.mubr.f32.mxu0 0.0
        %2508 = vmatmul.mubr.f32.gmra.mrb[0].mxu0 %v2258
        %v2509 = vpop.f32.mrb[0].mxu0
        %v2510 = vadd.f32 0.0, %v2509
        %v2511 = vpop.f32.mrb[0].mxu0
        %2512 = vmatprep.mubr.f32.mxu0 0.0
        %2513 = vmatmul.mubr.f32.gmra.mrb[0].mxu0 %v2259
        %v2514 = vpop.f32.mrb[0].mxu0
        %v2515 = vadd.f32 0.0, %v2514
        %v2516 = vpop.f32.mrb[0].mxu0
        %2517 = vmatprep.mubr.f32.mxu0 0.0
        %2518 = vmatmul.mubr.f32.gmra.mrb[0].mxu0 %v2260
        %v2519 = vpop.f32.mrb[0].mxu0
        %v2520 = vadd.f32 0.0, %v2519
        %v2521 = vpop.f32.mrb[0].mxu0
        %2522 = vdwg.mxu0
        %v2523 = vadd.f32 %v2189, %v2345
        %v2524 = vadd.f32 %v2190, %v2350
        %v2525 = vadd.f32 %v2191, %v2355
        %v2526 = vadd.f32 %v2192, %v2360
        %v2527 = vadd.f32 %v2193, %v2365
        %v2528 = vadd.f32 %v2194, %v2370
        %v2529 = vadd.f32 %v2195, %v2375
        %v2530 = vadd.f32 %v2196, %v2380
        %v2531 = vadd.f32 %v2197, %v2385
        %v2532 = vadd.f32 %v2198, %v2390
        %v2533 = vadd.f32 %v2199, %v2395
        %v2534 = vadd.f32 %v2200, %v2400
        %v2535 = vadd.f32 %v2201, %v2405
        %v2536 = vadd.f32 %v2202, %v2410
        %v2537 = vadd.f32 %v2203, %v2415
        %v2538 = vadd.f32 %v2204, %v2420
        %v2539 = vadd.f32 %v2205, %v2425
        %v2540 = vadd.f32 %v2206, %v2430
        %v2541 = vadd.f32 %v2207, %v2435
        %v2542 = vadd.f32 %v2208, %v2440
        %v2543 = vadd.f32 %v2209, %v2445
        %v2544 = vadd.f32 %v2210, %v2450
        %v2545 = vadd.f32 %v2211, %v2455
        %v2546 = vadd.f32 %v2212, %v2460
        %v2547 = vadd.f32 %v2213, %v2465
        %v2548 = vadd.f32 %v2214, %v2470
        %v2549 = vadd.f32 %v2215, %v2475
        %v2550 = vadd.f32 %v2216, %v2480
        %v2551 = vadd.f32 %v2217, %v2485
        %v2552 = vadd.f32 %v2218, %v2490
        %v2553 = vadd.f32 %v2219, %v2495
        %v2554 = vadd.f32 %v2220, %v2500
        %v2555 = vadd.f32 %v2221, %v2505
        %v2556 = vadd.f32 %v2222, %v2510
        %v2557 = vadd.f32 %v2223, %v2515
        %v2558 = vadd.f32 %v2224, %v2520
        %v2559 = vld [vmem:[%s220 + $0x25] sm:$0xff]
        %v2560 = vld [vmem:[%s220 + $0x2d] sm:$0xff]
        %v2561 = vld [vmem:[%s220 + $0x35] sm:$0xff]
        %v2562 = vld [vmem:[%s220 + $0x3d] sm:$0xff]
        %v2563 = vld [vmem:[%s220 + $0x45] sm:$0xff]
        %v2564 = vld [vmem:[%s220 + $0x4d] sm:$0xff]
        %v2565 = vld [vmem:[%s220 + $0x55] sm:$0xff]
        %v2566 = vld [vmem:[%s220 + $0x5d] sm:$0xff]
        %v2567 = vld [vmem:[%s220 + $0x65] sm:$0xff]
        %v2568 = vld [vmem:[%s220 + $0x6d] sm:$0xff]
        %v2569 = vld [vmem:[%s220 + $0x75] sm:$0xff]
        %v2570 = vld [vmem:[%s220 + $0x7d] sm:$0xff]
        %v2571 = vld [vmem:[%s220 + $0x85] sm:$0xff]
        %v2572 = vld [vmem:[%s220 + $0x8d] sm:$0xff]
        %v2573 = vld [vmem:[%s220 + $0x95] sm:$0xff]
        %v2574 = vld [vmem:[%s220 + $0x9d] sm:$0xff]
        %v2575 = vld [vmem:[%s220 + $0xa5] sm:$0xff]
        %v2576 = vld [vmem:[%s220 + $0xad] sm:$0xff]
        %v2577 = vld [vmem:[%s220 + $0xb5] sm:$0xff]
        %v2578 = vld [vmem:[%s220 + $0xbd] sm:$0xff]
        %v2579 = vld [vmem:[%s220 + $0xc5] sm:$0xff]
        %v2580 = vld [vmem:[%s220 + $0xcd] sm:$0xff]
        %v2581 = vld [vmem:[%s220 + $0xd5] sm:$0xff]
        %v2582 = vld [vmem:[%s220 + $0xdd] sm:$0xff]
        %v2583 = vld [vmem:[%s220 + $0xe5] sm:$0xff]
        %v2584 = vld [vmem:[%s220 + $0xed] sm:$0xff]
        %v2585 = vld [vmem:[%s220 + $0xf5] sm:$0xff]
        %v2586 = vld [vmem:[%s220 + $0xfd] sm:$0xff]
        %v2587 = vld [vmem:[%s220 + $0x105] sm:$0xff]
        %v2588 = vld [vmem:[%s220 + $0x10d] sm:$0xff]
        %v2589 = vld [vmem:[%s220 + $0x115] sm:$0xff]
        %v2590 = vld [vmem:[%s220 + $0x11d] sm:$0xff]
        %v2591 = vld [vmem:[%s220 + $0x125] sm:$0xff]
        %v2592 = vld [vmem:[%s220 + $0x12d] sm:$0xff]
        %v2593 = vld [vmem:[%s220 + $0x135] sm:$0xff]
        %v2594 = vld [vmem:[%s220 + $0x13d] sm:$0xff]
        %s2595 = scalar_lea.vmem [#allocation6], 896
        %v2596 = vld [vmem:[%s2595] sm:$0xff]
        %v2597 = vld [vmem:[%s2595 + $0x8] sm:$0xff]
        %v2598 = vld [vmem:[%s2595 + $0x10] sm:$0xff]
        %v2599 = vld [vmem:[%s2595 + $0x18] sm:$0xff]
        %v2600 = vld [vmem:[%s2595 + $0x20] sm:$0xff]
        %v2601 = vld [vmem:[%s2595 + $0x28] sm:$0xff]
        %v2602 = vld [vmem:[%s2595 + $0x30] sm:$0xff]
        %v2603 = vld [vmem:[%s2595 + $0x38] sm:$0xff]
        %v2604 = vld [vmem:[%s2595 + $0x40] sm:$0xff]
        %v2605 = vld [vmem:[%s2595 + $0x48] sm:$0xff]
        %v2606 = vld [vmem:[%s2595 + $0x50] sm:$0xff]
        %v2607 = vld [vmem:[%s2595 + $0x58] sm:$0xff]
        %v2608 = vld [vmem:[%s2595 + $0x60] sm:$0xff]
        %v2609 = vld [vmem:[%s2595 + $0x68] sm:$0xff]
        %v2610 = vld [vmem:[%s2595 + $0x70] sm:$0xff]
        %v2611 = vld [vmem:[%s2595 + $0x78] sm:$0xff]
        %2612 = vmatprep.subr.mxu0 0.0
        %2613 = vmatpush1.msra.mxu0 %v2596
        %2614 = vmatprep.subr.mxu0 0.0
        %2615 = vmatpush1.msra.mxu0 %v2597
        %2616 = vmatprep.subr.mxu0 0.0
        %2617 = vmatpush1.msra.mxu0 %v2598
        %2618 = vmatprep.subr.mxu0 0.0
        %2619 = vmatpush1.msra.mxu0 %v2599
        %2620 = vmatprep.subr.mxu0 0.0
        %2621 = vmatpush1.msra.mxu0 %v2600
        %2622 = vmatprep.subr.mxu0 0.0
        %2623 = vmatpush1.msra.mxu0 %v2601
        %2624 = vmatprep.subr.mxu0 0.0
        %2625 = vmatpush1.msra.mxu0 %v2602
        %2626 = vmatprep.subr.mxu0 0.0
        %2627 = vmatpush1.msra.mxu0 %v2603
        %2628 = vmatprep.subr.mxu0 0.0
        %2629 = vmatpush1.msra.mxu0 %v2604
        %2630 = vmatprep.subr.mxu0 0.0
        %2631 = vmatpush1.msra.mxu0 %v2605
        %2632 = vmatprep.subr.mxu0 0.0
        %2633 = vmatpush1.msra.mxu0 %v2606
        %2634 = vmatprep.subr.mxu0 0.0
        %2635 = vmatpush1.msra.mxu0 %v2607
        %2636 = vmatprep.subr.mxu0 0.0
        %2637 = vmatpush1.msra.mxu0 %v2608
        %2638 = vmatprep.subr.mxu0 0.0
        %2639 = vmatpush1.msra.mxu0 %v2609
        %2640 = vmatprep.subr.mxu0 0.0
        %2641 = vmatpush1.msra.mxu0 %v2610
        %2642 = vmatprep.subr.mxu0 0.0
        %2643 = vmatpush1.msra.mxu0 %v2611
        %2644 = vmatprep.subr.mxu0 0.0
        %2645 = vmatpush1.msra.mxu0 0.0
        %2646 = vmatprep.subr.mxu0 0.0
        %2647 = vmatpush1.msra.mxu0 0.0
        %2648 = vmatprep.subr.mxu0 0.0
        %2649 = vmatpush1.msra.mxu0 0.0
        %2650 = vmatprep.subr.mxu0 0.0
        %2651 = vmatpush1.msra.mxu0 0.0
        %2652 = vmatprep.subr.mxu0 0.0
        %2653 = vmatpush1.msra.mxu0 0.0
        %2654 = vmatprep.subr.mxu0 0.0
        %2655 = vmatpush1.msra.mxu0 0.0
        %2656 = vmatprep.subr.mxu0 0.0
        %2657 = vmatpush1.msra.mxu0 0.0
        %2658 = vmatprep.subr.mxu0 0.0
        %2659 = vmatpush1.msra.mxu0 0.0
        %2660 = vmatprep.subr.mxu0 0.0
        %2661 = vmatpush1.msra.mxu0 0.0
        %2662 = vmatprep.subr.mxu0 0.0
        %2663 = vmatpush1.msra.mxu0 0.0
        %2664 = vmatprep.subr.mxu0 0.0
        %2665 = vmatpush1.msra.mxu0 0.0
        %2666 = vmatprep.subr.mxu0 0.0
        %2667 = vmatpush1.msra.mxu0 0.0
        %2668 = vmatprep.subr.mxu0 0.0
        %2669 = vmatpush1.msra.mxu0 0.0
        %2670 = vmatprep.subr.mxu0 0.0
        %2671 = vmatpush1.msra.mxu0 0.0
        %2672 = vmatprep.subr.mxu0 0.0
        %2673 = vmatpush1.msra.mxu0 0.0
        %2674 = vmatprep.subr.mxu0 0.0
        %2675 = vmatpush1.msra.mxu0 0.0
        %2676 = vmatprep.mubr.f32.mxu0 0.0
        %2677 = vmatmul.mubr.f32.gmra.mrb[0].mxu0 %v2559
        %v2678 = vpop.f32.mrb[0].mxu0
        %v2679 = vadd.f32 0.0, %v2678
        %v2680 = vpop.f32.mrb[0].mxu0
        %2681 = vmatprep.mubr.f32.mxu0 0.0
        %2682 = vmatmul.mubr.f32.gmra.mrb[0].mxu0 %v2560
        %v2683 = vpop.f32.mrb[0].mxu0
        %v2684 = vadd.f32 0.0, %v2683
        %v2685 = vpop.f32.mrb[0].mxu0
        %2686 = vmatprep.mubr.f32.mxu0 0.0
        %2687 = vmatmul.mubr.f32.gmra.mrb[0].mxu0 %v2561
        %v2688 = vpop.f32.mrb[0].mxu0
        %v2689 = vadd.f32 0.0, %v2688
        %v2690 = vpop.f32.mrb[0].mxu0
        %2691 = vmatprep.mubr.f32.mxu0 0.0
        %2692 = vmatmul.mubr.f32.gmra.mrb[0].mxu0 %v2562
        %v2693 = vpop.f32.mrb[0].mxu0
        %v2694 = vadd.f32 0.0, %v2693
        %v2695 = vpop.f32.mrb[0].mxu0
        %2696 = vmatprep.mubr.f32.mxu0 0.0
        %2697 = vmatmul.mubr.f32.gmra.mrb[0].mxu0 %v2563
        %v2698 = vpop.f32.mrb[0].mxu0
        %v2699 = vadd.f32 0.0, %v2698
        %v2700 = vpop.f32.mrb[0].mxu0
        %2701 = vmatprep.mubr.f32.mxu0 0.0
        %2702 = vmatmul.mubr.f32.gmra.mrb[0].mxu0 %v2564
        %v2703 = vpop.f32.mrb[0].mxu0
        %v2704 = vadd.f32 0.0, %v2703
        %v2705 = vpop.f32.mrb[0].mxu0
        %2706 = vmatprep.mubr.f32.mxu0 0.0
        %2707 = vmatmul.mubr.f32.gmra.mrb[0].mxu0 %v2565
        %v2708 = vpop.f32.mrb[0].mxu0
        %v2709 = vadd.f32 0.0, %v2708
        %v2710 = vpop.f32.mrb[0].mxu0
        %2711 = vmatprep.mubr.f32.mxu0 0.0
        %2712 = vmatmul.mubr.f32.gmra.mrb[0].mxu0 %v2566
        %v2713 = vpop.f32.mrb[0].mxu0
        %v2714 = vadd.f32 0.0, %v2713
        %v2715 = vpop.f32.mrb[0].mxu0
        %2716 = vmatprep.mubr.f32.mxu0 0.0
        %2717 = vmatmul.mubr.f32.gmra.mrb[0].mxu0 %v2567
        %v2718 = vpop.f32.mrb[0].mxu0
        %v2719 = vadd.f32 0.0, %v2718
        %v2720 = vpop.f32.mrb[0].mxu0
        %2721 = vmatprep.mubr.f32.mxu0 0.0
        %2722 = vmatmul.mubr.f32.gmra.mrb[0].mxu0 %v2568
        %v2723 = vpop.f32.mrb[0].mxu0
        %v2724 = vadd.f32 0.0, %v2723
        %v2725 = vpop.f32.mrb[0].mxu0
        %2726 = vmatprep.mubr.f32.mxu0 0.0
        %2727 = vmatmul.mubr.f32.gmra.mrb[0].mxu0 %v2569
        %v2728 = vpop.f32.mrb[0].mxu0
        %v2729 = vadd.f32 0.0, %v2728
        %v2730 = vpop.f32.mrb[0].mxu0
        %2731 = vmatprep.mubr.f32.mxu0 0.0
        %2732 = vmatmul.mubr.f32.gmra.mrb[0].mxu0 %v2570
        %v2733 = vpop.f32.mrb[0].mxu0
        %v2734 = vadd.f32 0.0, %v2733
        %v2735 = vpop.f32.mrb[0].mxu0
        %2736 = vmatprep.mubr.f32.mxu0 0.0
        %2737 = vmatmul.mubr.f32.gmra.mrb[0].mxu0 %v2571
        %v2738 = vpop.f32.mrb[0].mxu0
        %v2739 = vadd.f32 0.0, %v2738
        %v2740 = vpop.f32.mrb[0].mxu0
        %2741 = vmatprep.mubr.f32.mxu0 0.0
        %2742 = vmatmul.mubr.f32.gmra.mrb[0].mxu0 %v2572
        %v2743 = vpop.f32.mrb[0].mxu0
        %v2744 = vadd.f32 0.0, %v2743
        %v2745 = vpop.f32.mrb[0].mxu0
        %2746 = vmatprep.mubr.f32.mxu0 0.0
        %2747 = vmatmul.mubr.f32.gmra.mrb[0].mxu0 %v2573
        %v2748 = vpop.f32.mrb[0].mxu0
        %v2749 = vadd.f32 0.0, %v2748
        %v2750 = vpop.f32.mrb[0].mxu0
        %2751 = vmatprep.mubr.f32.mxu0 0.0
        %2752 = vmatmul.mubr.f32.gmra.mrb[0].mxu0 %v2574
        %v2753 = vpop.f32.mrb[0].mxu0
        %v2754 = vadd.f32 0.0, %v2753
        %v2755 = vpop.f32.mrb[0].mxu0
        %2756 = vmatprep.mubr.f32.mxu0 0.0
        %2757 = vmatmul.mubr.f32.gmra.mrb[0].mxu0 %v2575
        %v2758 = vpop.f32.mrb[0].mxu0
        %v2759 = vadd.f32 0.0, %v2758
        %v2760 = vpop.f32.mrb[0].mxu0
        %2761 = vmatprep.mubr.f32.mxu0 0.0
        %2762 = vmatmul.mubr.f32.gmra.mrb[0].mxu0 %v2576
        %v2763 = vpop.f32.mrb[0].mxu0
        %v2764 = vadd.f32 0.0, %v2763
        %v2765 = vpop.f32.mrb[0].mxu0
        %2766 = vmatprep.mubr.f32.mxu0 0.0
        %2767 = vmatmul.mubr.f32.gmra.mrb[0].mxu0 %v2577
        %v2768 = vpop.f32.mrb[0].mxu0
        %v2769 = vadd.f32 0.0, %v2768
        %v2770 = vpop.f32.mrb[0].mxu0
        %2771 = vmatprep.mubr.f32.mxu0 0.0
        %2772 = vmatmul.mubr.f32.gmra.mrb[0].mxu0 %v2578
        %v2773 = vpop.f32.mrb[0].mxu0
        %v2774 = vadd.f32 0.0, %v2773
        %v2775 = vpop.f32.mrb[0].mxu0
        %2776 = vmatprep.mubr.f32.mxu0 0.0
        %2777 = vmatmul.mubr.f32.gmra.mrb[0].mxu0 %v2579
        %v2778 = vpop.f32.mrb[0].mxu0
        %v2779 = vadd.f32 0.0, %v2778
        %v2780 = vpop.f32.mrb[0].mxu0
        %2781 = vmatprep.mubr.f32.mxu0 0.0
        %2782 = vmatmul.mubr.f32.gmra.mrb[0].mxu0 %v2580
        %v2783 = vpop.f32.mrb[0].mxu0
        %v2784 = vadd.f32 0.0, %v2783
        %v2785 = vpop.f32.mrb[0].mxu0
        %2786 = vmatprep.mubr.f32.mxu0 0.0
        %2787 = vmatmul.mubr.f32.gmra.mrb[0].mxu0 %v2581
        %v2788 = vpop.f32.mrb[0].mxu0
        %v2789 = vadd.f32 0.0, %v2788
        %v2790 = vpop.f32.mrb[0].mxu0
        %2791 = vmatprep.mubr.f32.mxu0 0.0
        %2792 = vmatmul.mubr.f32.gmra.mrb[0].mxu0 %v2582
        %v2793 = vpop.f32.mrb[0].mxu0
        %v2794 = vadd.f32 0.0, %v2793
        %v2795 = vpop.f32.mrb[0].mxu0
        %2796 = vmatprep.mubr.f32.mxu0 0.0
        %2797 = vmatmul.mubr.f32.gmra.mrb[0].mxu0 %v2583
        %v2798 = vpop.f32.mrb[0].mxu0
        %v2799 = vadd.f32 0.0, %v2798
        %v2800 = vpop.f32.mrb[0].mxu0
        %2801 = vmatprep.mubr.f32.mxu0 0.0
        %2802 = vmatmul.mubr.f32.gmra.mrb[0].mxu0 %v2584
        %v2803 = vpop.f32.mrb[0].mxu0
        %v2804 = vadd.f32 0.0, %v2803
        %v2805 = vpop.f32.mrb[0].mxu0
        %2806 = vmatprep.mubr.f32.mxu0 0.0
        %2807 = vmatmul.mubr.f32.gmra.mrb[0].mxu0 %v2585
        %v2808 = vpop.f32.mrb[0].mxu0
        %v2809 = vadd.f32 0.0, %v2808
        %v2810 = vpop.f32.mrb[0].mxu0
        %2811 = vmatprep.mubr.f32.mxu0 0.0
        %2812 = vmatmul.mubr.f32.gmra.mrb[0].mxu0 %v2586
        %v2813 = vpop.f32.mrb[0].mxu0
        %v2814 = vadd.f32 0.0, %v2813
        %v2815 = vpop.f32.mrb[0].mxu0
        %2816 = vmatprep.mubr.f32.mxu0 0.0
        %2817 = vmatmul.mubr.f32.gmra.mrb[0].mxu0 %v2587
        %v2818 = vpop.f32.mrb[0].mxu0
        %v2819 = vadd.f32 0.0, %v2818
        %v2820 = vpop.f32.mrb[0].mxu0
        %2821 = vmatprep.mubr.f32.mxu0 0.0
        %2822 = vmatmul.mubr.f32.gmra.mrb[0].mxu0 %v2588
        %v2823 = vpop.f32.mrb[0].mxu0
        %v2824 = vadd.f32 0.0, %v2823
        %v2825 = vpop.f32.mrb[0].mxu0
        %2826 = vmatprep.mubr.f32.mxu0 0.0
        %2827 = vmatmul.mubr.f32.gmra.mrb[0].mxu0 %v2589
        %v2828 = vpop.f32.mrb[0].mxu0
        %v2829 = vadd.f32 0.0, %v2828
        %v2830 = vpop.f32.mrb[0].mxu0
        %2831 = vmatprep.mubr.f32.mxu0 0.0
        %2832 = vmatmul.mubr.f32.gmra.mrb[0].mxu0 %v2590
        %v2833 = vpop.f32.mrb[0].mxu0
        %v2834 = vadd.f32 0.0, %v2833
        %v2835 = vpop.f32.mrb[0].mxu0
        %2836 = vmatprep.mubr.f32.mxu0 0.0
        %2837 = vmatmul.mubr.f32.gmra.mrb[0].mxu0 %v2591
        %v2838 = vpop.f32.mrb[0].mxu0
        %v2839 = vadd.f32 0.0, %v2838
        %v2840 = vpop.f32.mrb[0].mxu0
        %2841 = vmatprep.mubr.f32.mxu0 0.0
        %2842 = vmatmul.mubr.f32.gmra.mrb[0].mxu0 %v2592
        %v2843 = vpop.f32.mrb[0].mxu0
        %v2844 = vadd.f32 0.0, %v2843
        %v2845 = vpop.f32.mrb[0].mxu0
        %2846 = vmatprep.mubr.f32.mxu0 0.0
        %2847 = vmatmul.mubr.f32.gmra.mrb[0].mxu0 %v2593
        %v2848 = vpop.f32.mrb[0].mxu0
        %v2849 = vadd.f32 0.0, %v2848
        %v2850 = vpop.f32.mrb[0].mxu0
        %2851 = vmatprep.mubr.f32.mxu0 0.0
        %2852 = vmatmul.mubr.f32.gmra.mrb[0].mxu0 %v2594
        %v2853 = vpop.f32.mrb[0].mxu0
        %v2854 = vadd.f32 0.0, %v2853
        %v2855 = vpop.f32.mrb[0].mxu0
        %2856 = vdwg.mxu0
        %v2857 = vadd.f32 %v2523, %v2679
        %v2858 = vadd.f32 %v2524, %v2684
        %v2859 = vadd.f32 %v2525, %v2689
        %v2860 = vadd.f32 %v2526, %v2694
        %v2861 = vadd.f32 %v2527, %v2699
        %v2862 = vadd.f32 %v2528, %v2704
        %v2863 = vadd.f32 %v2529, %v2709
        %v2864 = vadd.f32 %v2530, %v2714
        %v2865 = vadd.f32 %v2531, %v2719
        %v2866 = vadd.f32 %v2532, %v2724
        %v2867 = vadd.f32 %v2533, %v2729
        %v2868 = vadd.f32 %v2534, %v2734
        %v2869 = vadd.f32 %v2535, %v2739
        %v2870 = vadd.f32 %v2536, %v2744
        %v2871 = vadd.f32 %v2537, %v2749
        %v2872 = vadd.f32 %v2538, %v2754
        %v2873 = vadd.f32 %v2539, %v2759
        %v2874 = vadd.f32 %v2540, %v2764
        %v2875 = vadd.f32 %v2541, %v2769
        %v2876 = vadd.f32 %v2542, %v2774
        %v2877 = vadd.f32 %v2543, %v2779
        %v2878 = vadd.f32 %v2544, %v2784
        %v2879 = vadd.f32 %v2545, %v2789
        %v2880 = vadd.f32 %v2546, %v2794
        %v2881 = vadd.f32 %v2547, %v2799
        %v2882 = vadd.f32 %v2548, %v2804
        %v2883 = vadd.f32 %v2549, %v2809
        %v2884 = vadd.f32 %v2550, %v2814
        %v2885 = vadd.f32 %v2551, %v2819
        %v2886 = vadd.f32 %v2552, %v2824
        %v2887 = vadd.f32 %v2553, %v2829
        %v2888 = vadd.f32 %v2554, %v2834
        %v2889 = vadd.f32 %v2555, %v2839
        %v2890 = vadd.f32 %v2556, %v2844
        %v2891 = vadd.f32 %v2557, %v2849
        %v2892 = vadd.f32 %v2558, %v2854
        %v2893 = vld [vmem:[%s220 + $0x26] sm:$0xff]
        %v2894 = vld [vmem:[%s220 + $0x2e] sm:$0xff]
        %v2895 = vld [vmem:[%s220 + $0x36] sm:$0xff]
        %v2896 = vld [vmem:[%s220 + $0x3e] sm:$0xff]
        %v2897 = vld [vmem:[%s220 + $0x46] sm:$0xff]
        %v2898 = vld [vmem:[%s220 + $0x4e] sm:$0xff]
        %v2899 = vld [vmem:[%s220 + $0x56] sm:$0xff]
        %v2900 = vld [vmem:[%s220 + $0x5e] sm:$0xff]
        %v2901 = vld [vmem:[%s220 + $0x66] sm:$0xff]
        %v2902 = vld [vmem:[%s220 + $0x6e] sm:$0xff]
        %v2903 = vld [vmem:[%s220 + $0x76] sm:$0xff]
        %v2904 = vld [vmem:[%s220 + $0x7e] sm:$0xff]
        %v2905 = vld [vmem:[%s220 + $0x86] sm:$0xff]
        %v2906 = vld [vmem:[%s220 + $0x8e] sm:$0xff]
        %v2907 = vld [vmem:[%s220 + $0x96] sm:$0xff]
        %v2908 = vld [vmem:[%s220 + $0x9e] sm:$0xff]
        %v2909 = vld [vmem:[%s220 + $0xa6] sm:$0xff]
        %v2910 = vld [vmem:[%s220 + $0xae] sm:$0xff]
        %v2911 = vld [vmem:[%s220 + $0xb6] sm:$0xff]
        %v2912 = vld [vmem:[%s220 + $0xbe] sm:$0xff]
        %v2913 = vld [vmem:[%s220 + $0xc6] sm:$0xff]
        %v2914 = vld [vmem:[%s220 + $0xce] sm:$0xff]
        %v2915 = vld [vmem:[%s220 + $0xd6] sm:$0xff]
        %v2916 = vld [vmem:[%s220 + $0xde] sm:$0xff]
        %v2917 = vld [vmem:[%s220 + $0xe6] sm:$0xff]
        %v2918 = vld [vmem:[%s220 + $0xee] sm:$0xff]
        %v2919 = vld [vmem:[%s220 + $0xf6] sm:$0xff]
        %v2920 = vld [vmem:[%s220 + $0xfe] sm:$0xff]
        %v2921 = vld [vmem:[%s220 + $0x106] sm:$0xff]
        %v2922 = vld [vmem:[%s220 + $0x10e] sm:$0xff]
        %v2923 = vld [vmem:[%s220 + $0x116] sm:$0xff]
        %v2924 = vld [vmem:[%s220 + $0x11e] sm:$0xff]
        %v2925 = vld [vmem:[%s220 + $0x126] sm:$0xff]
        %v2926 = vld [vmem:[%s220 + $0x12e] sm:$0xff]
        %v2927 = vld [vmem:[%s220 + $0x136] sm:$0xff]
        %v2928 = vld [vmem:[%s220 + $0x13e] sm:$0xff]
        %s2929 = scalar_lea.vmem [#allocation6], 1024
        %v2930 = vld [vmem:[%s2929] sm:$0xff]
        %v2931 = vld [vmem:[%s2929 + $0x8] sm:$0xff]
        %v2932 = vld [vmem:[%s2929 + $0x10] sm:$0xff]
        %v2933 = vld [vmem:[%s2929 + $0x18] sm:$0xff]
        %v2934 = vld [vmem:[%s2929 + $0x20] sm:$0xff]
        %v2935 = vld [vmem:[%s2929 + $0x28] sm:$0xff]
        %v2936 = vld [vmem:[%s2929 + $0x30] sm:$0xff]
        %v2937 = vld [vmem:[%s2929 + $0x38] sm:$0xff]
        %v2938 = vld [vmem:[%s2929 + $0x40] sm:$0xff]
        %v2939 = vld [vmem:[%s2929 + $0x48] sm:$0xff]
        %v2940 = vld [vmem:[%s2929 + $0x50] sm:$0xff]
        %v2941 = vld [vmem:[%s2929 + $0x58] sm:$0xff]
        %v2942 = vld [vmem:[%s2929 + $0x60] sm:$0xff]
        %v2943 = vld [vmem:[%s2929 + $0x68] sm:$0xff]
        %v2944 = vld [vmem:[%s2929 + $0x70] sm:$0xff]
        %v2945 = vld [vmem:[%s2929 + $0x78] sm:$0xff]
        %2946 = vmatprep.subr.mxu0 0.0
        %2947 = vmatpush1.msra.mxu0 %v2930
        %2948 = vmatprep.subr.mxu0 0.0
        %2949 = vmatpush1.msra.mxu0 %v2931
        %2950 = vmatprep.subr.mxu0 0.0
        %2951 = vmatpush1.msra.mxu0 %v2932
        %2952 = vmatprep.subr.mxu0 0.0
        %2953 = vmatpush1.msra.mxu0 %v2933
        %2954 = vmatprep.subr.mxu0 0.0
        %2955 = vmatpush1.msra.mxu0 %v2934
        %2956 = vmatprep.subr.mxu0 0.0
        %2957 = vmatpush1.msra.mxu0 %v2935
        %2958 = vmatprep.subr.mxu0 0.0
        %2959 = vmatpush1.msra.mxu0 %v2936
        %2960 = vmatprep.subr.mxu0 0.0
        %2961 = vmatpush1.msra.mxu0 %v2937
        %2962 = vmatprep.subr.mxu0 0.0
        %2963 = vmatpush1.msra.mxu0 %v2938
        %2964 = vmatprep.subr.mxu0 0.0
        %2965 = vmatpush1.msra.mxu0 %v2939
        %2966 = vmatprep.subr.mxu0 0.0
        %2967 = vmatpush1.msra.mxu0 %v2940
        %2968 = vmatprep.subr.mxu0 0.0
        %2969 = vmatpush1.msra.mxu0 %v2941
        %2970 = vmatprep.subr.mxu0 0.0
        %2971 = vmatpush1.msra.mxu0 %v2942
        %2972 = vmatprep.subr.mxu0 0.0
        %2973 = vmatpush1.msra.mxu0 %v2943
        %2974 = vmatprep.subr.mxu0 0.0
        %2975 = vmatpush1.msra.mxu0 %v2944
        %2976 = vmatprep.subr.mxu0 0.0
        %2977 = vmatpush1.msra.mxu0 %v2945
        %2978 = vmatprep.subr.mxu0 0.0
        %2979 = vmatpush1.msra.mxu0 0.0
        %2980 = vmatprep.subr.mxu0 0.0
        %2981 = vmatpush1.msra.mxu0 0.0
        %2982 = vmatprep.subr.mxu0 0.0
        %2983 = vmatpush1.msra.mxu0 0.0
        %2984 = vmatprep.subr.mxu0 0.0
        %2985 = vmatpush1.msra.mxu0 0.0
        %2986 = vmatprep.subr.mxu0 0.0
        %2987 = vmatpush1.msra.mxu0 0.0
        %2988 = vmatprep.subr.mxu0 0.0
        %2989 = vmatpush1.msra.mxu0 0.0
        %2990 = vmatprep.subr.mxu0 0.0
        %2991 = vmatpush1.msra.mxu0 0.0
        %2992 = vmatprep.subr.mxu0 0.0
        %2993 = vmatpush1.msra.mxu0 0.0
        %2994 = vmatprep.subr.mxu0 0.0
        %2995 = vmatpush1.msra.mxu0 0.0
        %2996 = vmatprep.subr.mxu0 0.0
        %2997 = vmatpush1.msra.mxu0 0.0
        %2998 = vmatprep.subr.mxu0 0.0
        %2999 = vmatpush1.msra.mxu0 0.0
        %3000 = vmatprep.subr.mxu0 0.0
        %3001 = vmatpush1.msra.mxu0 0.0
        %3002 = vmatprep.subr.mxu0 0.0
        %3003 = vmatpush1.msra.mxu0 0.0
        %3004 = vmatprep.subr.mxu0 0.0
        %3005 = vmatpush1.msra.mxu0 0.0
        %3006 = vmatprep.subr.mxu0 0.0
        %3007 = vmatpush1.msra.mxu0 0.0
        %3008 = vmatprep.subr.mxu0 0.0
        %3009 = vmatpush1.msra.mxu0 0.0
        %3010 = vmatprep.mubr.f32.mxu0 0.0
        %3011 = vmatmul.mubr.f32.gmra.mrb[0].mxu0 %v2893
        %v3012 = vpop.f32.mrb[0].mxu0
        %v3013 = vadd.f32 0.0, %v3012
        %v3014 = vpop.f32.mrb[0].mxu0
        %3015 = vmatprep.mubr.f32.mxu0 0.0
        %3016 = vmatmul.mubr.f32.gmra.mrb[0].mxu0 %v2894
        %v3017 = vpop.f32.mrb[0].mxu0
        %v3018 = vadd.f32 0.0, %v3017
        %v3019 = vpop.f32.mrb[0].mxu0
        %3020 = vmatprep.mubr.f32.mxu0 0.0
        %3021 = vmatmul.mubr.f32.gmra.mrb[0].mxu0 %v2895
        %v3022 = vpop.f32.mrb[0].mxu0
        %v3023 = vadd.f32 0.0, %v3022
        %v3024 = vpop.f32.mrb[0].mxu0
        %3025 = vmatprep.mubr.f32.mxu0 0.0
        %3026 = vmatmul.mubr.f32.gmra.mrb[0].mxu0 %v2896
        %v3027 = vpop.f32.mrb[0].mxu0
        %v3028 = vadd.f32 0.0, %v3027
        %v3029 = vpop.f32.mrb[0].mxu0
        %3030 = vmatprep.mubr.f32.mxu0 0.0
        %3031 = vmatmul.mubr.f32.gmra.mrb[0].mxu0 %v2897
        %v3032 = vpop.f32.mrb[0].mxu0
        %v3033 = vadd.f32 0.0, %v3032
        %v3034 = vpop.f32.mrb[0].mxu0
        %3035 = vmatprep.mubr.f32.mxu0 0.0
        %3036 = vmatmul.mubr.f32.gmra.mrb[0].mxu0 %v2898
        %v3037 = vpop.f32.mrb[0].mxu0
        %v3038 = vadd.f32 0.0, %v3037
        %v3039 = vpop.f32.mrb[0].mxu0
        %3040 = vmatprep.mubr.f32.mxu0 0.0
        %3041 = vmatmul.mubr.f32.gmra.mrb[0].mxu0 %v2899
        %v3042 = vpop.f32.mrb[0].mxu0
        %v3043 = vadd.f32 0.0, %v3042
        %v3044 = vpop.f32.mrb[0].mxu0
        %3045 = vmatprep.mubr.f32.mxu0 0.0
        %3046 = vmatmul.mubr.f32.gmra.mrb[0].mxu0 %v2900
        %v3047 = vpop.f32.mrb[0].mxu0
        %v3048 = vadd.f32 0.0, %v3047
        %v3049 = vpop.f32.mrb[0].mxu0
        %3050 = vmatprep.mubr.f32.mxu0 0.0
        %3051 = vmatmul.mubr.f32.gmra.mrb[0].mxu0 %v2901
        %v3052 = vpop.f32.mrb[0].mxu0
        %v3053 = vadd.f32 0.0, %v3052
        %v3054 = vpop.f32.mrb[0].mxu0
        %3055 = vmatprep.mubr.f32.mxu0 0.0
        %3056 = vmatmul.mubr.f32.gmra.mrb[0].mxu0 %v2902
        %v3057 = vpop.f32.mrb[0].mxu0
        %v3058 = vadd.f32 0.0, %v3057
        %v3059 = vpop.f32.mrb[0].mxu0
        %3060 = vmatprep.mubr.f32.mxu0 0.0
        %3061 = vmatmul.mubr.f32.gmra.mrb[0].mxu0 %v2903
        %v3062 = vpop.f32.mrb[0].mxu0
        %v3063 = vadd.f32 0.0, %v3062
        %v3064 = vpop.f32.mrb[0].mxu0
        %3065 = vmatprep.mubr.f32.mxu0 0.0
        %3066 = vmatmul.mubr.f32.gmra.mrb[0].mxu0 %v2904
        %v3067 = vpop.f32.mrb[0].mxu0
        %v3068 = vadd.f32 0.0, %v3067
        %v3069 = vpop.f32.mrb[0].mxu0
        %3070 = vmatprep.mubr.f32.mxu0 0.0
        %3071 = vmatmul.mubr.f32.gmra.mrb[0].mxu0 %v2905
        %v3072 = vpop.f32.mrb[0].mxu0
        %v3073 = vadd.f32 0.0, %v3072
        %v3074 = vpop.f32.mrb[0].mxu0
        %3075 = vmatprep.mubr.f32.mxu0 0.0
        %3076 = vmatmul.mubr.f32.gmra.mrb[0].mxu0 %v2906
        %v3077 = vpop.f32.mrb[0].mxu0
        %v3078 = vadd.f32 0.0, %v3077
        %v3079 = vpop.f32.mrb[0].mxu0
        %3080 = vmatprep.mubr.f32.mxu0 0.0
        %3081 = vmatmul.mubr.f32.gmra.mrb[0].mxu0 %v2907
        %v3082 = vpop.f32.mrb[0].mxu0
        %v3083 = vadd.f32 0.0, %v3082
        %v3084 = vpop.f32.mrb[0].mxu0
        %3085 = vmatprep.mubr.f32.mxu0 0.0
        %3086 = vmatmul.mubr.f32.gmra.mrb[0].mxu0 %v2908
        %v3087 = vpop.f32.mrb[0].mxu0
        %v3088 = vadd.f32 0.0, %v3087
        %v3089 = vpop.f32.mrb[0].mxu0
        %3090 = vmatprep.mubr.f32.mxu0 0.0
        %3091 = vmatmul.mubr.f32.gmra.mrb[0].mxu0 %v2909
        %v3092 = vpop.f32.mrb[0].mxu0
        %v3093 = vadd.f32 0.0, %v3092
        %v3094 = vpop.f32.mrb[0].mxu0
        %3095 = vmatprep.mubr.f32.mxu0 0.0
        %3096 = vmatmul.mubr.f32.gmra.mrb[0].mxu0 %v2910
        %v3097 = vpop.f32.mrb[0].mxu0
        %v3098 = vadd.f32 0.0, %v3097
        %v3099 = vpop.f32.mrb[0].mxu0
        %3100 = vmatprep.mubr.f32.mxu0 0.0
        %3101 = vmatmul.mubr.f32.gmra.mrb[0].mxu0 %v2911
        %v3102 = vpop.f32.mrb[0].mxu0
        %v3103 = vadd.f32 0.0, %v3102
        %v3104 = vpop.f32.mrb[0].mxu0
        %3105 = vmatprep.mubr.f32.mxu0 0.0
        %3106 = vmatmul.mubr.f32.gmra.mrb[0].mxu0 %v2912
        %v3107 = vpop.f32.mrb[0].mxu0
        %v3108 = vadd.f32 0.0, %v3107
        %v3109 = vpop.f32.mrb[0].mxu0
        %3110 = vmatprep.mubr.f32.mxu0 0.0
        %3111 = vmatmul.mubr.f32.gmra.mrb[0].mxu0 %v2913
        %v3112 = vpop.f32.mrb[0].mxu0
        %v3113 = vadd.f32 0.0, %v3112
        %v3114 = vpop.f32.mrb[0].mxu0
        %3115 = vmatprep.mubr.f32.mxu0 0.0
        %3116 = vmatmul.mubr.f32.gmra.mrb[0].mxu0 %v2914
        %v3117 = vpop.f32.mrb[0].mxu0
        %v3118 = vadd.f32 0.0, %v3117
        %v3119 = vpop.f32.mrb[0].mxu0
        %3120 = vmatprep.mubr.f32.mxu0 0.0
        %3121 = vmatmul.mubr.f32.gmra.mrb[0].mxu0 %v2915
        %v3122 = vpop.f32.mrb[0].mxu0
        %v3123 = vadd.f32 0.0, %v3122
        %v3124 = vpop.f32.mrb[0].mxu0
        %3125 = vmatprep.mubr.f32.mxu0 0.0
        %3126 = vmatmul.mubr.f32.gmra.mrb[0].mxu0 %v2916
        %v3127 = vpop.f32.mrb[0].mxu0
        %v3128 = vadd.f32 0.0, %v3127
        %v3129 = vpop.f32.mrb[0].mxu0
        %3130 = vmatprep.mubr.f32.mxu0 0.0
        %3131 = vmatmul.mubr.f32.gmra.mrb[0].mxu0 %v2917
        %v3132 = vpop.f32.mrb[0].mxu0
        %v3133 = vadd.f32 0.0, %v3132
        %v3134 = vpop.f32.mrb[0].mxu0
        %3135 = vmatprep.mubr.f32.mxu0 0.0
        %3136 = vmatmul.mubr.f32.gmra.mrb[0].mxu0 %v2918
        %v3137 = vpop.f32.mrb[0].mxu0
        %v3138 = vadd.f32 0.0, %v3137
        %v3139 = vpop.f32.mrb[0].mxu0
        %3140 = vmatprep.mubr.f32.mxu0 0.0
        %3141 = vmatmul.mubr.f32.gmra.mrb[0].mxu0 %v2919
        %v3142 = vpop.f32.mrb[0].mxu0
        %v3143 = vadd.f32 0.0, %v3142
        %v3144 = vpop.f32.mrb[0].mxu0
        %3145 = vmatprep.mubr.f32.mxu0 0.0
        %3146 = vmatmul.mubr.f32.gmra.mrb[0].mxu0 %v2920
        %v3147 = vpop.f32.mrb[0].mxu0
        %v3148 = vadd.f32 0.0, %v3147
        %v3149 = vpop.f32.mrb[0].mxu0
        %3150 = vmatprep.mubr.f32.mxu0 0.0
        %3151 = vmatmul.mubr.f32.gmra.mrb[0].mxu0 %v2921
        %v3152 = vpop.f32.mrb[0].mxu0
        %v3153 = vadd.f32 0.0, %v3152
        %v3154 = vpop.f32.mrb[0].mxu0
        %3155 = vmatprep.mubr.f32.mxu0 0.0
        %3156 = vmatmul.mubr.f32.gmra.mrb[0].mxu0 %v2922
        %v3157 = vpop.f32.mrb[0].mxu0
        %v3158 = vadd.f32 0.0, %v3157
        %v3159 = vpop.f32.mrb[0].mxu0
        %3160 = vmatprep.mubr.f32.mxu0 0.0
        %3161 = vmatmul.mubr.f32.gmra.mrb[0].mxu0 %v2923
        %v3162 = vpop.f32.mrb[0].mxu0
        %v3163 = vadd.f32 0.0, %v3162
        %v3164 = vpop.f32.mrb[0].mxu0
        %3165 = vmatprep.mubr.f32.mxu0 0.0
        %3166 = vmatmul.mubr.f32.gmra.mrb[0].mxu0 %v2924
        %v3167 = vpop.f32.mrb[0].mxu0
        %v3168 = vadd.f32 0.0, %v3167
        %v3169 = vpop.f32.mrb[0].mxu0
        %3170 = vmatprep.mubr.f32.mxu0 0.0
        %3171 = vmatmul.mubr.f32.gmra.mrb[0].mxu0 %v2925
        %v3172 = vpop.f32.mrb[0].mxu0
        %v3173 = vadd.f32 0.0, %v3172
        %v3174 = vpop.f32.mrb[0].mxu0
        %3175 = vmatprep.mubr.f32.mxu0 0.0
        %3176 = vmatmul.mubr.f32.gmra.mrb[0].mxu0 %v2926
        %v3177 = vpop.f32.mrb[0].mxu0
        %v3178 = vadd.f32 0.0, %v3177
        %v3179 = vpop.f32.mrb[0].mxu0
        %3180 = vmatprep.mubr.f32.mxu0 0.0
        %3181 = vmatmul.mubr.f32.gmra.mrb[0].mxu0 %v2927
        %v3182 = vpop.f32.mrb[0].mxu0
        %v3183 = vadd.f32 0.0, %v3182
        %v3184 = vpop.f32.mrb[0].mxu0
        %3185 = vmatprep.mubr.f32.mxu0 0.0
        %3186 = vmatmul.mubr.f32.gmra.mrb[0].mxu0 %v2928
        %v3187 = vpop.f32.mrb[0].mxu0
        %v3188 = vadd.f32 0.0, %v3187
        %v3189 = vpop.f32.mrb[0].mxu0
        %3190 = vdwg.mxu0
        %v3191 = vadd.f32 %v2857, %v3013
        %v3192 = vadd.f32 %v2858, %v3018
        %v3193 = vadd.f32 %v2859, %v3023
        %v3194 = vadd.f32 %v2860, %v3028
        %v3195 = vadd.f32 %v2861, %v3033
        %v3196 = vadd.f32 %v2862, %v3038
        %v3197 = vadd.f32 %v2863, %v3043
        %v3198 = vadd.f32 %v2864, %v3048
        %v3199 = vadd.f32 %v2865, %v3053
        %v3200 = vadd.f32 %v2866, %v3058
        %v3201 = vadd.f32 %v2867, %v3063
        %v3202 = vadd.f32 %v2868, %v3068
        %v3203 = vadd.f32 %v2869, %v3073
        %v3204 = vadd.f32 %v2870, %v3078
        %v3205 = vadd.f32 %v2871, %v3083
        %v3206 = vadd.f32 %v2872, %v3088
        %v3207 = vadd.f32 %v2873, %v3093
        %v3208 = vadd.f32 %v2874, %v3098
        %v3209 = vadd.f32 %v2875, %v3103
        %v3210 = vadd.f32 %v2876, %v3108
        %v3211 = vadd.f32 %v2877, %v3113
        %v3212 = vadd.f32 %v2878, %v3118
        %v3213 = vadd.f32 %v2879, %v3123
        %v3214 = vadd.f32 %v2880, %v3128
        %v3215 = vadd.f32 %v2881, %v3133
        %v3216 = vadd.f32 %v2882, %v3138
        %v3217 = vadd.f32 %v2883, %v3143
        %v3218 = vadd.f32 %v2884, %v3148
        %v3219 = vadd.f32 %v2885, %v3153
        %v3220 = vadd.f32 %v2886, %v3158
        %v3221 = vadd.f32 %v2887, %v3163
        %v3222 = vadd.f32 %v2888, %v3168
        %v3223 = vadd.f32 %v2889, %v3173
        %v3224 = vadd.f32 %v2890, %v3178
        %v3225 = vadd.f32 %v2891, %v3183
        %v3226 = vadd.f32 %v2892, %v3188
        %v3227 = vld [vmem:[#allocation2] sm:$0xff]
        %v3228 = vld [vmem:[#allocation2 + $0x8] sm:$0xff]
        %v3229 = vld [vmem:[#allocation2 + $0x10] sm:$0xff]
        %v3230 = vld [vmem:[#allocation2 + $0x18] sm:$0xff]
        %v3231 = vld [vmem:[#allocation2 + $0x20] sm:$0xff]
        %v3232 = vld [vmem:[#allocation2 + $0x28] sm:$0xff]
        %v3233 = vld [vmem:[#allocation2 + $0x30] sm:$0xff]
        %v3234 = vld [vmem:[#allocation2 + $0x38] sm:$0xff]
        %v3235 = vld [vmem:[#allocation2 + $0x40] sm:$0xff]
        %v3236 = vld [vmem:[#allocation2 + $0x48] sm:$0xff]
        %v3237 = vld [vmem:[#allocation2 + $0x50] sm:$0xff]
        %v3238 = vld [vmem:[#allocation2 + $0x58] sm:$0xff]
        %v3239 = vld [vmem:[#allocation2 + $0x60] sm:$0xff]
        %v3240 = vld [vmem:[#allocation2 + $0x68] sm:$0xff]
        %v3241 = vld [vmem:[#allocation2 + $0x70] sm:$0xff]
        %v3242 = vld [vmem:[#allocation2 + $0x78] sm:$0xff]
        %v3243 = vld [vmem:[#allocation2 + $0x80] sm:$0xff]
        %v3244 = vld [vmem:[#allocation2 + $0x88] sm:$0xff]
        %v3245 = vld [vmem:[#allocation2 + $0x90] sm:$0xff]
        %v3246 = vld [vmem:[#allocation2 + $0x98] sm:$0xff]
        %v3247 = vld [vmem:[#allocation2 + $0xa0] sm:$0xff]
        %v3248 = vld [vmem:[#allocation2 + $0xa8] sm:$0xff]
        %v3249 = vld [vmem:[#allocation2 + $0xb0] sm:$0xff]
        %v3250 = vld [vmem:[#allocation2 + $0xb8] sm:$0xff]
        %v3251 = vld [vmem:[#allocation2 + $0xc0] sm:$0xff]
        %v3252 = vld [vmem:[#allocation2 + $0xc8] sm:$0xff]
        %v3253 = vld [vmem:[#allocation2 + $0xd0] sm:$0xff]
        %v3254 = vld [vmem:[#allocation2 + $0xd8] sm:$0xff]
        %v3255 = vld [vmem:[#allocation2 + $0xe0] sm:$0xff]
        %v3256 = vld [vmem:[#allocation2 + $0xe8] sm:$0xff]
        %v3257 = vld [vmem:[#allocation2 + $0xf0] sm:$0xff]
        %v3258 = vld [vmem:[#allocation2 + $0xf8] sm:$0xff]
        %v3259 = vld [vmem:[#allocation2 + $0x100] sm:$0xff]
        %v3260 = vld [vmem:[#allocation2 + $0x108] sm:$0xff]
        %v3261 = vld [vmem:[#allocation2 + $0x110] sm:$0xff]
        %v3262 = vld [vmem:[#allocation2 + $0x118] sm:$0xff]
        %v3263 = vadd.f32 %v3227, %v3191
        %v3264 = vadd.f32 %v3228, %v3192
        %v3265 = vadd.f32 %v3229, %v3193
        %v3266 = vadd.f32 %v3230, %v3194
        %v3267 = vadd.f32 %v3231, %v3195
        %v3268 = vadd.f32 %v3232, %v3196
        %v3269 = vadd.f32 %v3233, %v3197
        %v3270 = vadd.f32 %v3234, %v3198
        %v3271 = vadd.f32 %v3235, %v3199
        %v3272 = vadd.f32 %v3236, %v3200
        %v3273 = vadd.f32 %v3237, %v3201
        %v3274 = vadd.f32 %v3238, %v3202
        %v3275 = vadd.f32 %v3239, %v3203
        %v3276 = vadd.f32 %v3240, %v3204
        %v3277 = vadd.f32 %v3241, %v3205
        %v3278 = vadd.f32 %v3242, %v3206
        %v3279 = vadd.f32 %v3243, %v3207
        %v3280 = vadd.f32 %v3244, %v3208
        %v3281 = vadd.f32 %v3245, %v3209
        %v3282 = vadd.f32 %v3246, %v3210
        %v3283 = vadd.f32 %v3247, %v3211
        %v3284 = vadd.f32 %v3248, %v3212
        %v3285 = vadd.f32 %v3249, %v3213
        %v3286 = vadd.f32 %v3250, %v3214
        %v3287 = vadd.f32 %v3251, %v3215
        %v3288 = vadd.f32 %v3252, %v3216
        %v3289 = vadd.f32 %v3253, %v3217
        %v3290 = vadd.f32 %v3254, %v3218
        %v3291 = vadd.f32 %v3255, %v3219
        %v3292 = vadd.f32 %v3256, %v3220
        %v3293 = vadd.f32 %v3257, %v3221
        %v3294 = vadd.f32 %v3258, %v3222
        %v3295 = vadd.f32 %v3259, %v3223
        %v3296 = vadd.f32 %v3260, %v3224
        %v3297 = vadd.f32 %v3261, %v3225
        %v3298 = vadd.f32 %v3262, %v3226
        %3299 = vst [vmem:[#allocation2] sm:$0xff] %v3263
        %3300 = vst [vmem:[#allocation2 + $0x8] sm:$0xff] %v3264
        %3301 = vst [vmem:[#allocation2 + $0x10] sm:$0xff] %v3265
        %3302 = vst [vmem:[#allocation2 + $0x18] sm:$0xff] %v3266
        %3303 = vst [vmem:[#allocation2 + $0x20] sm:$0xff] %v3267
        %3304 = vst [vmem:[#allocation2 + $0x28] sm:$0xff] %v3268
        %3305 = vst [vmem:[#allocation2 + $0x30] sm:$0xff] %v3269
        %3306 = vst [vmem:[#allocation2 + $0x38] sm:$0xff] %v3270
        %3307 = vst [vmem:[#allocation2 + $0x40] sm:$0xff] %v3271
        %3308 = vst [vmem:[#allocation2 + $0x48] sm:$0xff] %v3272
        %3309 = vst [vmem:[#allocation2 + $0x50] sm:$0xff] %v3273
        %3310 = vst [vmem:[#allocation2 + $0x58] sm:$0xff] %v3274
        %3311 = vst [vmem:[#allocation2 + $0x60] sm:$0xff] %v3275
        %3312 = vst [vmem:[#allocation2 + $0x68] sm:$0xff] %v3276
        %3313 = vst [vmem:[#allocation2 + $0x70] sm:$0xff] %v3277
        %3314 = vst [vmem:[#allocation2 + $0x78] sm:$0xff] %v3278
        %3315 = vst [vmem:[#allocation2 + $0x80] sm:$0xff] %v3279
        %3316 = vst [vmem:[#allocation2 + $0x88] sm:$0xff] %v3280
        %3317 = vst [vmem:[#allocation2 + $0x90] sm:$0xff] %v3281
        %3318 = vst [vmem:[#allocation2 + $0x98] sm:$0xff] %v3282
        %3319 = vst [vmem:[#allocation2 + $0xa0] sm:$0xff] %v3283
        %3320 = vst [vmem:[#allocation2 + $0xa8] sm:$0xff] %v3284
        %3321 = vst [vmem:[#allocation2 + $0xb0] sm:$0xff] %v3285
        %3322 = vst [vmem:[#allocation2 + $0xb8] sm:$0xff] %v3286
        %3323 = vst [vmem:[#allocation2 + $0xc0] sm:$0xff] %v3287
        %3324 = vst [vmem:[#allocation2 + $0xc8] sm:$0xff] %v3288
        %3325 = vst [vmem:[#allocation2 + $0xd0] sm:$0xff] %v3289
        %3326 = vst [vmem:[#allocation2 + $0xd8] sm:$0xff] %v3290
        %3327 = vst [vmem:[#allocation2 + $0xe0] sm:$0xff] %v3291
        %3328 = vst [vmem:[#allocation2 + $0xe8] sm:$0xff] %v3292
        %3329 = vst [vmem:[#allocation2 + $0xf0] sm:$0xff] %v3293
        %3330 = vst [vmem:[#allocation2 + $0xf8] sm:$0xff] %v3294
        %3331 = vst [vmem:[#allocation2 + $0x100] sm:$0xff] %v3295
        %3332 = vst [vmem:[#allocation2 + $0x108] sm:$0xff] %v3296
        %3333 = vst [vmem:[#allocation2 + $0x110] sm:$0xff] %v3297
        %3334 = vst [vmem:[#allocation2 + $0x118] sm:$0xff] %v3298
        // Predicated region
        $region45: #{tpu_custom_call.1} parent=31 // pred_check
          %p3335 = pneg %p254
        $region46: #{tpu_custom_call.1} parent=31 // pred_check_branch
          %3337 = sbr.rel (%p3335) target = $region48
        $region47: #{tpu_custom_call.1} parent=31 // pred_region
          %v3338 = vld [vmem:[#allocation2] sm:$0xff]
          %v3339 = vld [vmem:[#allocation2 + $0x8] sm:$0xff]
          %v3340 = vld [vmem:[#allocation2 + $0x10] sm:$0xff]
          %v3341 = vld [vmem:[#allocation2 + $0x18] sm:$0xff]
          %v3342 = vld [vmem:[#allocation2 + $0x20] sm:$0xff]
          %v3343 = vld [vmem:[#allocation2 + $0x28] sm:$0xff]
          %v3344 = vld [vmem:[#allocation2 + $0x30] sm:$0xff]
          %v3345 = vld [vmem:[#allocation2 + $0x38] sm:$0xff]
          %v3346 = vld [vmem:[#allocation2 + $0x40] sm:$0xff]
          %v3347 = vld [vmem:[#allocation2 + $0x48] sm:$0xff]
          %v3348 = vld [vmem:[#allocation2 + $0x50] sm:$0xff]
          %v3349 = vld [vmem:[#allocation2 + $0x58] sm:$0xff]
          %v3350 = vld [vmem:[#allocation2 + $0x60] sm:$0xff]
          %v3351 = vld [vmem:[#allocation2 + $0x68] sm:$0xff]
          %v3352 = vld [vmem:[#allocation2 + $0x70] sm:$0xff]
          %v3353 = vld [vmem:[#allocation2 + $0x78] sm:$0xff]
          %v3354 = vld [vmem:[#allocation2 + $0x80] sm:$0xff]
          %v3355 = vld [vmem:[#allocation2 + $0x88] sm:$0xff]
          %v3356 = vld [vmem:[#allocation2 + $0x90] sm:$0xff]
          %v3357 = vld [vmem:[#allocation2 + $0x98] sm:$0xff]
          %v3358 = vld [vmem:[#allocation2 + $0xa0] sm:$0xff]
          %v3359 = vld [vmem:[#allocation2 + $0xa8] sm:$0xff]
          %v3360 = vld [vmem:[#allocation2 + $0xb0] sm:$0xff]
          %v3361 = vld [vmem:[#allocation2 + $0xb8] sm:$0xff]
          %v3362 = vld [vmem:[#allocation2 + $0xc0] sm:$0xff]
          %v3363 = vld [vmem:[#allocation2 + $0xc8] sm:$0xff]
          %v3364 = vld [vmem:[#allocation2 + $0xd0] sm:$0xff]
          %v3365 = vld [vmem:[#allocation2 + $0xd8] sm:$0xff]
          %v3366 = vld [vmem:[#allocation2 + $0xe0] sm:$0xff]
          %v3367 = vld [vmem:[#allocation2 + $0xe8] sm:$0xff]
          %v3368 = vld [vmem:[#allocation2 + $0xf0] sm:$0xff]
          %v3369 = vld [vmem:[#allocation2 + $0xf8] sm:$0xff]
          %v3370 = vld [vmem:[#allocation2 + $0x100] sm:$0xff]
          %v3371 = vld [vmem:[#allocation2 + $0x108] sm:$0xff]
          %v3372 = vld [vmem:[#allocation2 + $0x110] sm:$0xff]
          %v3373 = vld [vmem:[#allocation2 + $0x118] sm:$0xff]
          %v3374 = vld [vmem:[%s253] sm:$0x1]
          %v3376 = vlaneseq
          %v3377 = vshrl.u32 %v3376, 7
          %v3378 = vsub.s32 0, %v3377
          %v3379 = vrot.slane %v3374, %v3378
          %v3381 = vadd.f32 %v3338, %v3379
          %v3382 = vadd.f32 %v3339, %v3379
          %v3383 = vadd.f32 %v3340, %v3379
          %v3384 = vadd.f32 %v3341, %v3379
          %v3385 = vadd.f32 %v3342, %v3379
          %v3386 = vadd.f32 %v3343, %v3379
          %v3387 = vadd.f32 %v3344, %v3379
          %v3388 = vadd.f32 %v3345, %v3379
          %v3389 = vadd.f32 %v3346, %v3379
          %v3390 = vadd.f32 %v3347, %v3379
          %v3391 = vadd.f32 %v3348, %v3379
          %v3392 = vadd.f32 %v3349, %v3379
          %v3393 = vadd.f32 %v3350, %v3379
          %v3394 = vadd.f32 %v3351, %v3379
          %v3395 = vadd.f32 %v3352, %v3379
          %v3396 = vadd.f32 %v3353, %v3379
          %v3397 = vadd.f32 %v3354, %v3379
          %v3398 = vadd.f32 %v3355, %v3379
          %v3399 = vadd.f32 %v3356, %v3379
          %v3400 = vadd.f32 %v3357, %v3379
          %v3401 = vadd.f32 %v3358, %v3379
          %v3402 = vadd.f32 %v3359, %v3379
          %v3403 = vadd.f32 %v3360, %v3379
          %v3404 = vadd.f32 %v3361, %v3379
          %v3405 = vadd.f32 %v3362, %v3379
          %v3406 = vadd.f32 %v3363, %v3379
          %v3407 = vadd.f32 %v3364, %v3379
          %v3408 = vadd.f32 %v3365, %v3379
          %v3409 = vadd.f32 %v3366, %v3379
          %v3410 = vadd.f32 %v3367, %v3379
          %v3411 = vadd.f32 %v3368, %v3379
          %v3412 = vadd.f32 %v3369, %v3379
          %v3413 = vadd.f32 %v3370, %v3379
          %v3414 = vadd.f32 %v3371, %v3379
          %v3415 = vadd.f32 %v3372, %v3379
          %v3416 = vadd.f32 %v3373, %v3379
          %v3417 = vmax.f32 %v3381, 0.0
          %v3418 = vmax.f32 %v3382, 0.0
          %v3419 = vmax.f32 %v3383, 0.0
          %v3420 = vmax.f32 %v3384, 0.0
          %v3421 = vmax.f32 %v3385, 0.0
          %v3422 = vmax.f32 %v3386, 0.0
          %v3423 = vmax.f32 %v3387, 0.0
          %v3424 = vmax.f32 %v3388, 0.0
          %v3425 = vmax.f32 %v3389, 0.0
          %v3426 = vmax.f32 %v3390, 0.0
          %v3427 = vmax.f32 %v3391, 0.0
          %v3428 = vmax.f32 %v3392, 0.0
          %v3429 = vmax.f32 %v3393, 0.0
          %v3430 = vmax.f32 %v3394, 0.0
          %v3431 = vmax.f32 %v3395, 0.0
          %v3432 = vmax.f32 %v3396, 0.0
          %v3433 = vmax.f32 %v3397, 0.0
          %v3434 = vmax.f32 %v3398, 0.0
          %v3435 = vmax.f32 %v3399, 0.0
          %v3436 = vmax.f32 %v3400, 0.0
          %v3437 = vmax.f32 %v3401, 0.0
          %v3438 = vmax.f32 %v3402, 0.0
          %v3439 = vmax.f32 %v3403, 0.0
          %v3440 = vmax.f32 %v3404, 0.0
          %v3441 = vmax.f32 %v3405, 0.0
          %v3442 = vmax.f32 %v3406, 0.0
          %v3443 = vmax.f32 %v3407, 0.0
          %v3444 = vmax.f32 %v3408, 0.0
          %v3445 = vmax.f32 %v3409, 0.0
          %v3446 = vmax.f32 %v3410, 0.0
          %v3447 = vmax.f32 %v3411, 0.0
          %v3448 = vmax.f32 %v3412, 0.0
          %v3449 = vmax.f32 %v3413, 0.0
          %v3450 = vmax.f32 %v3414, 0.0
          %v3451 = vmax.f32 %v3415, 0.0
          %v3452 = vmax.f32 %v3416, 0.0
          %3453 = vst [vmem:[%s249] sm:$0xff] %v3417
          %3454 = vst [vmem:[%s249 + $0x8] sm:$0xff] %v3418
          %3455 = vst [vmem:[%s249 + $0x10] sm:$0xff] %v3419
          %3456 = vst [vmem:[%s249 + $0x18] sm:$0xff] %v3420
          %3457 = vst [vmem:[%s249 + $0x20] sm:$0xff] %v3421
          %3458 = vst [vmem:[%s249 + $0x28] sm:$0xff] %v3422
          %3459 = vst [vmem:[%s249 + $0x30] sm:$0xff] %v3423
          %3460 = vst [vmem:[%s249 + $0x38] sm:$0xff] %v3424
          %3461 = vst [vmem:[%s249 + $0x40] sm:$0xff] %v3425
          %3462 = vst [vmem:[%s249 + $0x48] sm:$0xff] %v3426
          %3463 = vst [vmem:[%s249 + $0x50] sm:$0xff] %v3427
          %3464 = vst [vmem:[%s249 + $0x58] sm:$0xff] %v3428
          %3465 = vst [vmem:[%s249 + $0x60] sm:$0xff] %v3429
          %3466 = vst [vmem:[%s249 + $0x68] sm:$0xff] %v3430
          %3467 = vst [vmem:[%s249 + $0x70] sm:$0xff] %v3431
          %3468 = vst [vmem:[%s249 + $0x78] sm:$0xff] %v3432
          %3469 = vst [vmem:[%s249 + $0x80] sm:$0xff] %v3433
          %3470 = vst [vmem:[%s249 + $0x88] sm:$0xff] %v3434
          %3471 = vst [vmem:[%s249 + $0x90] sm:$0xff] %v3435
          %3472 = vst [vmem:[%s249 + $0x98] sm:$0xff] %v3436
          %3473 = vst [vmem:[%s249 + $0xa0] sm:$0xff] %v3437
          %3474 = vst [vmem:[%s249 + $0xa8] sm:$0xff] %v3438
          %3475 = vst [vmem:[%s249 + $0xb0] sm:$0xff] %v3439
          %3476 = vst [vmem:[%s249 + $0xb8] sm:$0xff] %v3440
          %3477 = vst [vmem:[%s249 + $0xc0] sm:$0xff] %v3441
          %3478 = vst [vmem:[%s249 + $0xc8] sm:$0xff] %v3442
          %3479 = vst [vmem:[%s249 + $0xd0] sm:$0xff] %v3443
          %3480 = vst [vmem:[%s249 + $0xd8] sm:$0xff] %v3444
          %3481 = vst [vmem:[%s249 + $0xe0] sm:$0xff] %v3445
          %3482 = vst [vmem:[%s249 + $0xe8] sm:$0xff] %v3446
          %3483 = vst [vmem:[%s249 + $0xf0] sm:$0xff] %v3447
          %3484 = vst [vmem:[%s249 + $0xf8] sm:$0xff] %v3448
          %3485 = vst [vmem:[%s249 + $0x100] sm:$0xff] %v3449
          %3486 = vst [vmem:[%s249 + $0x108] sm:$0xff] %v3450
          %3487 = vst [vmem:[%s249 + $0x110] sm:$0xff] %v3451
          %3488 = vst [vmem:[%s249 + $0x118] sm:$0xff] %v3452
        $region48: #{tpu_custom_call.1} parent=31 // pred_fallthru
          _
        %s3489 = sand.u32 %s132, 1
        %s3490 = scalar_lea.sflag [#allocation5], %s3489
        %s3491 = sand.u32 %s132, 1
        %s3492 = smul.addr %s3491, 288
        %s3493 = scalar_lea.vmem [#allocation8], %s3492
        // Predicated region
        $region49: #{tpu_custom_call.1} parent=31 // pred_check
          %p3494 = pneg %p142
        $region50: #{tpu_custom_call.1} parent=31 // pred_check_branch
          %3496 = sbr.rel (%p3494) target = $region52
        $region51: #{tpu_custom_call.1} parent=31 // pred_region
          %s3498 = ssub.s32 4608, 4608
          %3499 = vsyncadd %s3490, %s3498
          %s3500 = smul.addr %s26, 36
          %s3501 = sadd.s32 %s27, %s3500
          %s3502 = smul.addr %s3501, 128
          %s3503 = scalar_lea.hbm %s3, %s3502
          %s3504 = sshll.u32 %s3493, 4
          %s3505 = int_to_ptr.vmem [resolvable:$true] %s3504
          %3510 = dma.vmem_to_hbm [thread:$0]  %s3505, 4608, %s3503, %s3490, 128, 128, 8
        $region52: #{tpu_custom_call.1} parent=31 // pred_fallthru
          _
      $region32: #{tpu_custom_call.1} parent=5 // pred_fallthru
        _
      %p3511 = scmp.le.s32.totalorder 2, %s16
      // Predicated region
      $region53: #{tpu_custom_call.1} parent=5 // pred_check
        %p3512 = pneg %p3511
      $region54: #{tpu_custom_call.1} parent=5 // pred_check_branch
        %3514 = sbr.rel (%p3512) target = $region56
      $region55: #{tpu_custom_call.1} parent=5 // pred_region
        %s3515 = ssub.s32 %s16, 2
        // Predicated region
        $region57: #{tpu_custom_call.1} parent=55 // pred_check
          %p3516 = pneg %p148
        $region58: #{tpu_custom_call.1} parent=55 // pred_check_branch
          %3518 = sbr.rel (%p3516) target = $region60
        $region59: #{tpu_custom_call.1} parent=55 // pred_region
          %s3519 = sand.u32 %s133, 1
          %s3520 = scalar_lea.sflag [#allocation5], %s3519
          %s3521 = sand.u32 %s133, 1
          %s3522 = smul.addr %s3521, 288
          %s3523 = scalar_lea.vmem [#allocation8], %s3522
          %3524 = dma.done %s3520, 4608
        $region60: #{tpu_custom_call.1} parent=55 // pred_fallthru
          _
      $region56: #{tpu_custom_call.1} parent=5 // pred_fallthru
        _
    $region6: #{tpu_custom_call.1} parent=1 // loop_footer
      %s20 = sadd.s32 1, %s16
    $region7: #{tpu_custom_call.1} parent=1 // loop_footer_branch
      %15 = sbr.rel target = $region3
    $region8: #{tpu_custom_call.1} parent=1 // loop_exit
      _
    %3525 = vsyncpa [#allocation4], 1
    %s3526 = scalar_lea.sflag [#allocation4], 1
    %3527 = vsyncpa %s3526, 1
    %3528 = vsyncpa [#allocation7], 1
    %3529 = vsyncpa [#allocation5], 1
    %s3530 = scalar_lea.sflag [#allocation5], 1
    %3531 = vsyncpa %s3530, 1

</llo_original>
